<compile_context>
chip_gen: v7x
topology: tpu7x:2x2x1
jax: 0.10.0
libtpu: 0.0.40
codegen_flags: <defaults>
</compile_context>

<pallas_src>
import functools

import jax
import jax.numpy as jnp
from jax import lax
from jax.experimental import pallas as pl
from jax.experimental.pallas import tpu as pltpu


def _round_up(x, m):
    return (x + m - 1) // m * m


def _classifier_kernel(xc_ref, xh_ref, w_ref, b_ref, wh_ref, bh_ref, out_ref,
                       pooled_ref, patches_ref, *,
                       Bt, rc, H, W, Cin, Cfeat, mask_rows):
    # xc_ref:  (Bt, rc, W+2, Cin)      rc-row chunk of zero-padded NHWC x (matmul dtype)
    # xh_ref:  (Bt, 2,  W+2, Cin)      2-row bottom halo (= first rows of next chunk)
    # w_ref:   (9*Cin, Cfeat)          conv weights, HWIO flattened over (ky, kx, cin)
    # b_ref:   (1, Cfeat)              conv bias (f32)
    # wh_ref:  (Cfeat, Ncls_pad)       head weights (f32, classes zero-padded to 128*k)
    # bh_ref:  (1, Ncls_pad)           head bias (f32)
    # out_ref: (Bt, Ncls_pad)          logits block (f32, lane-dense)
    # pooled_ref:  (Bt, Cfeat) f32     running global-avg-pool SUM accumulator
    # patches_ref: (M, 9*Cin)          preallocated im2col scratch, M = Bt*rc*W
    r = pl.program_id(1)

    @pl.when(r == 0)
    def _init():
        pooled_ref[...] = jnp.zeros_like(pooled_ref)

    # ---- im2col: write the 9 (ky, kx) taps directly into the preallocated
    #      (M, 9*Cin) VMEM scratch at static lane offsets.  The rc+2-row window
    #      for this chunk is (chunk rows 0..rc-1) ++ (2 halo rows), so tap rows
    #      [ky, ky+rc) split into a chunk part and (for ky > 0) a halo part.
    # TODO(synk): with Cin=1..4 the minor dim is lane-sparse; a flattened
    # (W+2)*Cin minor layout + pltpu.roll kx-shifts would make this build
    # lane-dense/XLU-offloaded.
    M = Bt * rc * W
    for ky in range(3):
        for kx in range(3):
            tap_idx = ky * 3 + kx
            main = xc_ref[:, ky:rc, kx:kx + W, :]             # (Bt, rc-ky, W, Cin)
            if ky == 0:
                tap = main
            else:
                edge = xh_ref[:, 0:ky, kx:kx + W, :]          # (Bt, ky, W, Cin)
                tap = jnp.concatenate([main, edge], axis=1)   # (Bt, rc, W, Cin)
            patches_ref[:, tap_idx * Cin:(tap_idx + 1) * Cin] = tap.reshape(M, Cin)

    # ---- conv as one (M, 9*Cin) @ (9*Cin, Cfeat) MXU matmul, f32 accumulation.
    feat = jnp.dot(patches_ref[...], w_ref[...],
                   preferred_element_type=jnp.float32)        # (M, Cfeat)
    bias = b_ref[...]                                         # read once per step
    feat = jnp.maximum(feat + bias, 0.0)                      # bias + ReLU (VPU)

    if mask_rows:
        # Rows past the true H (bottom zero-padding so H_pad % rc == 0) would
        # contribute ReLU(bias) != 0 to the pool sum -- mask them out.
        midx = lax.broadcasted_iota(jnp.int32, (M, 1), 0)
        row_in_chunk = (midx // W) % rc
        feat = jnp.where(r * rc + row_in_chunk < H, feat, 0.0)

    # Accumulate this chunk's contribution to the global-average-pool sum.
    pooled_ref[...] += jnp.sum(feat.reshape(Bt, rc * W, Cfeat), axis=1)

    @pl.when(r == pl.num_programs(1) - 1)
    def _finalize():
        pooled = pooled_ref[...] * (1.0 / float(H * W))       # global average pool
        # flatten(1) of (B, Cfeat, 1, 1) is the identity; head = one batched Linear.
        logits = jnp.dot(pooled, wh_ref[...],
                         preferred_element_type=jnp.float32) + bh_ref[...]
        out_ref[...] = logits.astype(out_ref.dtype)           # lane-dense store


def classifier_forward(x_nchw, conv_w, conv_b, head_w, head_b,
                       matmul_dtype=jnp.bfloat16,
                       row_chunk=None,
                       vmem_budget_bytes=12 * 1024 * 1024):
    """x_nchw: (B, Cin, H, W). conv_w: (3, 3, Cin, Cfeat) HWIO. Returns (B, Ncls) f32."""
    B, Cin, H, W = x_nchw.shape
    Cfeat = conv_w.shape[3]
    Ncls = head_w.shape[1]
    itemsize = jnp.dtype(matmul_dtype).itemsize

    # ---- tiling -------------------------------------------------------------
    if B <= 8:
        Bt, B_pad = B, B          # single block = full batch dim (legal block shape)
        # TODO(synk): on v7x the second TensorCore idles for B<=8; needs B>=16 to
        # get >=2 legal (multiple-of-8) blocks on the parallel axis.
    else:
        Bt, B_pad = 8, _round_up(B, 8)   # >=2 parallel blocks, no whole-batch block

    if row_chunk is None:
        # Byte budget per row of a chunk: double-buffered x chunk + im2col patches
        # scratch + transient f32 feature slab.  Weights / head / pooled are tiny.
        per_row = (2 * Bt * (W + 2) * Cin * itemsize
                   + Bt * W * 9 * Cin * itemsize
                   + Bt * W * Cfeat * 4)
        rc = vmem_budget_bytes // max(per_row, 1)
        rc = max(8, (rc // 8) * 8)
        rc = min(rc, _round_up(H, 8))
    else:
        rc = max(8, _round_up(row_chunk, 8))
    H_pad = _round_up(H, rc)
    n_chunks = H_pad // rc
    mask_rows = (H_pad != H)

    # ---- wrapper-side glue (layout only) -------------------------------------
    # NCHW -> NHWC, zero pad: 1-px SAME halo + extra bottom rows so H_pad % rc == 0
    # + batch padding to B_pad.  Padded row count = n_chunks*rc + 2.
    # TODO(synk): fold this transpose/pad/cast into the kernel (zero-masked edge
    # taps) to avoid rewriting the dominant x stream in HBM before the kernel runs.
    x_nhwc = jnp.transpose(x_nchw, (0, 2, 3, 1))
    x_pad = jnp.pad(
        x_nhwc,
        ((0, B_pad - B), (1, 1 + (H_pad - H)), (1, 1), (0, 0)),
    ).astype(matmul_dtype)

    # Conv weights flattened over (ky, kx, cin) -> one K = 9*Cin matmul.
    w_flat = conv_w.reshape(9 * Cin, Cfeat).astype(matmul_dtype)
    conv_b2 = conv_b.reshape(1, Cfeat).astype(jnp.float32)

    # Lane-dense head / output: pad classes to a multiple of 128 (sliced off below).
    Ncls_pad = _round_up(Ncls, 128)
    wh = jnp.zeros((Cfeat, Ncls_pad), jnp.float32).at[:, :Ncls].set(
        head_w.astype(jnp.float32))
    bh = jnp.zeros((1, Ncls_pad), jnp.float32).at[:, :Ncls].set(
        head_b.reshape(1, Ncls).astype(jnp.float32))

    kernel = functools.partial(
        _classifier_kernel, Bt=Bt, rc=rc, H=H, W=W, Cin=Cin, Cfeat=Cfeat,
        mask_rows=mask_rows)

    grid = (B_pad // Bt, n_chunks)
    M = Bt * rc * W

    out = pl.pallas_call(
        kernel,
        out_shape=jax.ShapeDtypeStruct((B_pad, Ncls_pad), jnp.float32),
        grid_spec=pltpu.PrefetchScalarGridSpec(
            num_scalar_prefetch=0,
            grid=grid,
            in_specs=[
                # rc-row chunk of padded x: streamed / double-buffered by Pallas.
                pl.BlockSpec((Bt, rc, W + 2, Cin), lambda i, r: (i, r, 0, 0)),
                # 2-row bottom halo = first 2 rows of the next chunk (same array).
                pl.BlockSpec((Bt, 2, W + 2, Cin),
                             lambda i, r: (i, (r + 1) * (rc // 2), 0, 0)),
                pl.BlockSpec((9 * Cin, Cfeat), lambda i, r: (0, 0)),
                pl.BlockSpec((1, Cfeat), lambda i, r: (0, 0)),
                pl.BlockSpec((Cfeat, Ncls_pad), lambda i, r: (0, 0)),
                pl.BlockSpec((1, Ncls_pad), lambda i, r: (0, 0)),
            ],
            out_specs=pl.BlockSpec((Bt, Ncls_pad), lambda i, r: (i, 0)),
            scratch_shapes=[
                pltpu.VMEM((Bt, Cfeat), jnp.float32),     # pooled-sum accumulator
                pltpu.VMEM((M, 9 * Cin), matmul_dtype),   # im2col patches
            ],
        ),
        compiler_params=pltpu.CompilerParams(
            dimension_semantics=("parallel", "arbitrary"),
            vmem_limit_bytes=48 * 1024 * 1024),
    )(x_pad, x_pad, w_flat, conv_b2, wh, bh)

    return out[:B, :Ncls]


def classifier_reference(x_nchw, conv_w, conv_b, head_w, head_b):
    """Pure-JAX reference (semantics of the PyTorch module)."""
    x_nhwc = jnp.transpose(x_nchw, (0, 2, 3, 1))
    feat = lax.conv_general_dilated(
        x_nhwc, conv_w, window_strides=(1, 1), padding="SAME",
        dimension_numbers=("NHWC", "HWIO", "NHWC"))
    feat = jnp.maximum(feat + conv_b[0], 0.0)
    pooled = jnp.mean(feat, axis=(1, 2))          # (B, Cfeat) == flatten after (1,1) pool
    return pooled @ head_w + head_b[0]


def _make_params(key, Cin, Cfeat, Ncls):
    k_w, k_b, k_wh, k_bh = jax.random.split(key, 4)
    conv_w = jax.random.normal(k_w, (3, 3, Cin, Cfeat), dtype=jnp.float32) * 0.1
    conv_b = jax.random.normal(k_b, (1, Cfeat), dtype=jnp.float32) * 0.1
    head_w = jax.random.normal(k_wh, (Cfeat, Ncls), dtype=jnp.float32) * 0.1
    head_b = jax.random.normal(k_bh, (1, Ncls), dtype=jnp.float32) * 0.1
    return conv_w, conv_b, head_w, head_b


if __name__ == "__main__":
    key = jax.random.PRNGKey(0)
    k_x1, k_x2, k_p1, k_p2 = jax.random.split(key, 4)

    # ---- test 1: small canonical shapes --------------------------------------
    B, Cin, H, W, Cfeat, Ncls = 2, 4, 16, 16, 32, 8
    x = jax.random.normal(k_x1, (B, Cin, H, W), dtype=jnp.float32)
    conv_w, conv_b, head_w, head_b = _make_params(k_p1, Cin, Cfeat, Ncls)
    ref = classifier_reference(x, conv_w, conv_b, head_w, head_b)

    # f32 matmul path, single row chunk (strict correctness check).
    logits = classifier_forward(x, conv_w, conv_b, head_w, head_b,
                                matmul_dtype=jnp.float32)
    jax.block_until_ready(logits)
    assert logits.shape == (B, Ncls)
    assert jnp.allclose(logits, ref, atol=1e-4, rtol=1e-4), "f32 mismatch"

    # f32, forced multi-chunk row streaming (exercises halo + pooled accumulator).
    logits_rc = classifier_forward(x, conv_w, conv_b, head_w, head_b,
                                   matmul_dtype=jnp.float32, row_chunk=8)
    jax.block_until_ready(logits_rc)
    assert jnp.allclose(logits_rc, ref, atol=1e-4, rtol=1e-4), "multi-chunk mismatch"

    # default bf16 matmul-input path (f32 accumulation / epilogue).
    logits_bf16 = classifier_forward(x, conv_w, conv_b, head_w, head_b)
    jax.block_until_ready(logits_bf16)
    assert jnp.allclose(logits_bf16, ref, atol=3e-2, rtol=3e-2), "bf16 mismatch"

    # ---- test 2: B > 8 (batch padding, 2 parallel blocks) + H not a multiple of
    #      the row chunk (bottom-row masking) + multi-chunk halo path.
    B2, Cin2, H2, W2 = 10, 3, 12, 16
    x2 = jax.random.normal(k_x2, (B2, Cin2, H2, W2), dtype=jnp.float32)
    conv_w2, conv_b2, head_w2, head_b2 = _make_params(k_p2, Cin2, Cfeat, Ncls)
    ref2 = classifier_reference(x2, conv_w2, conv_b2, head_w2, head_b2)
    logits2 = classifier_forward(x2, conv_w2, conv_b2, head_w2, head_b2,
                                 matmul_dtype=jnp.float32, row_chunk=8)
    jax.block_until_ready(logits2)
    assert logits2.shape == (B2, Ncls)
    assert jnp.allclose(logits2, ref2, atol=1e-4, rtol=1e-4), "padded-batch mismatch"

    print("KERNEL_OK")
</pallas_src>

<mosaic_0001>
module attributes {stable_mosaic.version = 11 : i64} {
  func.func @_classifier_kernel(%arg0: i32, %arg1: i32, %arg2: memref<2x16x18x4xf32, #tpu.memory_space<vmem>>, %arg3: memref<2x2x18x4xf32, #tpu.memory_space<vmem>>, %arg4: memref<36x32xf32, #tpu.memory_space<vmem>>, %arg5: memref<1x32xf32, #tpu.memory_space<vmem>>, %arg6: memref<32x128xf32, #tpu.memory_space<vmem>>, %arg7: memref<1x128xf32, #tpu.memory_space<vmem>>, %arg8: memref<2x128xf32, #tpu.memory_space<vmem>>, %arg9: memref<2x32xf32, #tpu.memory_space<vmem>>, %arg10: memref<512x36xf32, #tpu.memory_space<vmem>>) attributes {dimension_semantics = [#tpu.dimension_semantics<parallel>, #tpu.dimension_semantics<arbitrary>], iteration_bounds = array<i64: 1, 1>, scalar_prefetch = 0 : i64, scratch_operands = 2 : i64, tpu.core_type = #tpu.core_type<tc>, window_params = [{transform_indices = @transform_0, window_bounds = array<i64: 2, 16, 18, 4>}, {transform_indices = @transform_1, window_bounds = array<i64: 2, 2, 18, 4>}, {pipeline_mode = #tpu.pipeline_mode<synchronous>, transform_indices = @transform_2, window_bounds = array<i64: 36, 32>}, {pipeline_mode = #tpu.pipeline_mode<synchronous>, transform_indices = @transform_3, window_bounds = array<i64: 1, 32>}, {pipeline_mode = #tpu.pipeline_mode<synchronous>, transform_indices = @transform_4, window_bounds = array<i64: 32, 128>}, {pipeline_mode = #tpu.pipeline_mode<synchronous>, transform_indices = @transform_5, window_bounds = array<i64: 1, 128>}, {transform_indices = @transform_6, window_bounds = array<i64: 2, 128>}]} {
    %c0_i32 = arith.constant 0 : i32
    %0 = arith.cmpi eq, %arg1, %c0_i32 : i32
    %1 = arith.extui %0 : i1 to i32
    %c0_i32_0 = arith.constant 0 : i32
    %2 = arith.cmpi ne, %1, %c0_i32_0 : i32
    scf.if %2 {
      %cst_82 = arith.constant 0.000000e+00 : f32
      %58 = vector.broadcast %cst_82 : f32 to vector<2x32xf32>
      %c0_83 = arith.constant 0 : index
      %c0_84 = arith.constant 0 : index
      %59 = vector.load %arg9[%c0_83, %c0_84] : memref<2x32xf32, #tpu.memory_space<vmem>>, vector<2x32xf32>
      tpu.vector_store %arg9[%c0_83, %c0_84], %58 {strides = array<i32>} : memref<2x32xf32, #tpu.memory_space<vmem>>, vector<2x32xf32>,
    } else {
    }
    %c0 = arith.constant 0 : index
    %c0_1 = arith.constant 0 : index
    %c0_2 = arith.constant 0 : index
    %c0_3 = arith.constant 0 : index
    %3 = vector.load %arg2[%c0, %c0_1, %c0_2, %c0_3] : memref<2x16x18x4xf32, #tpu.memory_space<vmem>>, vector<2x16x16x4xf32>
    %4 = vector.shape_cast %3 : vector<2x16x16x4xf32> to vector<512x4xf32>
    %c0_4 = arith.constant 0 : index
    %c0_5 = arith.constant 0 : index
    %5 = vector.load %arg10[%c0_4, %c0_5] : memref<512x36xf32, #tpu.memory_space<vmem>>, vector<512x4xf32>
    tpu.vector_store %arg10[%c0_4, %c0_5], %4 {strides = array<i32>} : memref<512x36xf32, #tpu.memory_space<vmem>>, vector<512x4xf32>,
    %c0_6 = arith.constant 0 : index
    %c0_7 = arith.constant 0 : index
    %c1 = arith.constant 1 : index
    %c0_8 = arith.constant 0 : index
    %6 = vector.load %arg2[%c0_6, %c0_7, %c1, %c0_8] : memref<2x16x18x4xf32, #tpu.memory_space<vmem>>, vector<2x16x16x4xf32>
    %7 = vector.shape_cast %6 : vector<2x16x16x4xf32> to vector<512x4xf32>
    %c0_9 = arith.constant 0 : index
    %c4 = arith.constant 4 : index
    %8 = vector.load %arg10[%c0_9, %c4] : memref<512x36xf32, #tpu.memory_space<vmem>>, vector<512x4xf32>
    tpu.vector_store %arg10[%c0_9, %c4], %7 {strides = array<i32>} : memref<512x36xf32, #tpu.memory_space<vmem>>, vector<512x4xf32>,
    %c0_10 = arith.constant 0 : index
    %c0_11 = arith.constant 0 : index
    %c2 = arith.constant 2 : index
    %c0_12 = arith.constant 0 : index
    %9 = vector.load %arg2[%c0_10, %c0_11, %c2, %c0_12] : memref<2x16x18x4xf32, #tpu.memory_space<vmem>>, vector<2x16x16x4xf32>
    %10 = vector.shape_cast %9 : vector<2x16x16x4xf32> to vector<512x4xf32>
    %c0_13 = arith.constant 0 : index
    %c8 = arith.constant 8 : index
    %11 = vector.load %arg10[%c0_13, %c8] : memref<512x36xf32, #tpu.memory_space<vmem>>, vector<512x4xf32>
    tpu.vector_store %arg10[%c0_13, %c8], %10 {strides = array<i32>} : memref<512x36xf32, #tpu.memory_space<vmem>>, vector<512x4xf32>,
    %c0_14 = arith.constant 0 : index
    %c1_15 = arith.constant 1 : index
    %c0_16 = arith.constant 0 : index
    %c0_17 = arith.constant 0 : index
    %12 = vector.load %arg2[%c0_14, %c1_15, %c0_16, %c0_17] : memref<2x16x18x4xf32, #tpu.memory_space<vmem>>, vector<2x15x16x4xf32>
    %c0_18 = arith.constant 0 : index
    %c0_19 = arith.constant 0 : index
    %c0_20 = arith.constant 0 : index
    %c0_21 = arith.constant 0 : index
    %13 = vector.load %arg3[%c0_18, %c0_19, %c0_20, %c0_21] : memref<2x2x18x4xf32, #tpu.memory_space<vmem>>, vector<2x1x16x4xf32>
    %14 = tpu.concatenate %12, %13 in 1 : vector<2x15x16x4xf32>, vector<2x1x16x4xf32> -> vector<2x16x16x4xf32>
    %15 = vector.shape_cast %14 : vector<2x16x16x4xf32> to vector<512x4xf32>
    %c0_22 = arith.constant 0 : index
    %c12 = arith.constant 12 : index
    %16 = vector.load %arg10[%c0_22, %c12] : memref<512x36xf32, #tpu.memory_space<vmem>>, vector<512x4xf32>
    tpu.vector_store %arg10[%c0_22, %c12], %15 {strides = array<i32>} : memref<512x36xf32, #tpu.memory_space<vmem>>, vector<512x4xf32>,
    %c0_23 = arith.constant 0 : index
    %c1_24 = arith.constant 1 : index
    %c1_25 = arith.constant 1 : index
    %c0_26 = arith.constant 0 : index
    %17 = vector.load %arg2[%c0_23, %c1_24, %c1_25, %c0_26] : memref<2x16x18x4xf32, #tpu.memory_space<vmem>>, vector<2x15x16x4xf32>
    %c0_27 = arith.constant 0 : index
    %c0_28 = arith.constant 0 : index
    %c1_29 = arith.constant 1 : index
    %c0_30 = arith.constant 0 : index
    %18 = vector.load %arg3[%c0_27, %c0_28, %c1_29, %c0_30] : memref<2x2x18x4xf32, #tpu.memory_space<vmem>>, vector<2x1x16x4xf32>
    %19 = tpu.concatenate %17, %18 in 1 : vector<2x15x16x4xf32>, vector<2x1x16x4xf32> -> vector<2x16x16x4xf32>
    %20 = vector.shape_cast %19 : vector<2x16x16x4xf32> to vector<512x4xf32>
    %c0_31 = arith.constant 0 : index
    %c16 = arith.constant 16 : index
    %21 = vector.load %arg10[%c0_31, %c16] : memref<512x36xf32, #tpu.memory_space<vmem>>, vector<512x4xf32>
    tpu.vector_store %arg10[%c0_31, %c16], %20 {strides = array<i32>} : memref<512x36xf32, #tpu.memory_space<vmem>>, vector<512x4xf32>,
    %c0_32 = arith.constant 0 : index
    %c1_33 = arith.constant 1 : index
    %c2_34 = arith.constant 2 : index
    %c0_35 = arith.constant 0 : index
    %22 = vector.load %arg2[%c0_32, %c1_33, %c2_34, %c0_35] : memref<2x16x18x4xf32, #tpu.memory_space<vmem>>, vector<2x15x16x4xf32>
    %c0_36 = arith.constant 0 : index
    %c0_37 = arith.constant 0 : index
    %c2_38 = arith.constant 2 : index
    %c0_39 = arith.constant 0 : index
    %23 = vector.load %arg3[%c0_36, %c0_37, %c2_38, %c0_39] : memref<2x2x18x4xf32, #tpu.memory_space<vmem>>, vector<2x1x16x4xf32>
    %24 = tpu.concatenate %22, %23 in 1 : vector<2x15x16x4xf32>, vector<2x1x16x4xf32> -> vector<2x16x16x4xf32>
    %25 = vector.shape_cast %24 : vector<2x16x16x4xf32> to vector<512x4xf32>
    %c0_40 = arith.constant 0 : index
    %c20 = arith.constant 20 : index
    %26 = vector.load %arg10[%c0_40, %c20] : memref<512x36xf32, #tpu.memory_space<vmem>>, vector<512x4xf32>
    tpu.vector_store %arg10[%c0_40, %c20], %25 {strides = array<i32>} : memref<512x36xf32, #tpu.memory_space<vmem>>, vector<512x4xf32>,
    %c0_41 = arith.constant 0 : index
    %c2_42 = arith.constant 2 : index
    %c0_43 = arith.constant 0 : index
    %c0_44 = arith.constant 0 : index
    %27 = vector.load %arg2[%c0_41, %c2_42, %c0_43, %c0_44] : memref<2x16x18x4xf32, #tpu.memory_space<vmem>>, vector<2x14x16x4xf32>
    %c0_45 = arith.constant 0 : index
    %c0_46 = arith.constant 0 : index
    %c0_47 = arith.constant 0 : index
    %c0_48 = arith.constant 0 : index
    %28 = vector.load %arg3[%c0_45, %c0_46, %c0_47, %c0_48] : memref<2x2x18x4xf32, #tpu.memory_space<vmem>>, vector<2x2x16x4xf32>
    %29 = tpu.concatenate %27, %28 in 1 : vector<2x14x16x4xf32>, vector<2x2x16x4xf32> -> vector<2x16x16x4xf32>
    %30 = vector.shape_cast %29 : vector<2x16x16x4xf32> to vector<512x4xf32>
    %c0_49 = arith.constant 0 : index
    %c24 = arith.constant 24 : index
    %31 = vector.load %arg10[%c0_49, %c24] : memref<512x36xf32, #tpu.memory_space<vmem>>, vector<512x4xf32>
    tpu.vector_store %arg10[%c0_49, %c24], %30 {strides = array<i32>} : memref<512x36xf32, #tpu.memory_space<vmem>>, vector<512x4xf32>,
    %c0_50 = arith.constant 0 : index
    %c2_51 = arith.constant 2 : index
    %c1_52 = arith.constant 1 : index
    %c0_53 = arith.constant 0 : index
    %32 = vector.load %arg2[%c0_50, %c2_51, %c1_52, %c0_53] : memref<2x16x18x4xf32, #tpu.memory_space<vmem>>, vector<2x14x16x4xf32>
    %c0_54 = arith.constant 0 : index
    %c0_55 = arith.constant 0 : index
    %c1_56 = arith.constant 1 : index
    %c0_57 = arith.constant 0 : index
    %33 = vector.load %arg3[%c0_54, %c0_55, %c1_56, %c0_57] : memref<2x2x18x4xf32, #tpu.memory_space<vmem>>, vector<2x2x16x4xf32>
    %34 = tpu.concatenate %32, %33 in 1 : vector<2x14x16x4xf32>, vector<2x2x16x4xf32> -> vector<2x16x16x4xf32>
    %35 = vector.shape_cast %34 : vector<2x16x16x4xf32> to vector<512x4xf32>
    %c0_58 = arith.constant 0 : index
    %c28 = arith.constant 28 : index
    %36 = vector.load %arg10[%c0_58, %c28] : memref<512x36xf32, #tpu.memory_space<vmem>>, vector<512x4xf32>
    tpu.vector_store %arg10[%c0_58, %c28], %35 {strides = array<i32>} : memref<512x36xf32, #tpu.memory_space<vmem>>, vector<512x4xf32>,
    %c0_59 = arith.constant 0 : index
    %c2_60 = arith.constant 2 : index
    %c2_61 = arith.constant 2 : index
    %c0_62 = arith.constant 0 : index
    %37 = vector.load %arg2[%c0_59, %c2_60, %c2_61, %c0_62] : memref<2x16x18x4xf32, #tpu.memory_space<vmem>>, vector<2x14x16x4xf32>
    %c0_63 = arith.constant 0 : index
    %c0_64 = arith.constant 0 : index
    %c2_65 = arith.constant 2 : index
    %c0_66 = arith.constant 0 : index
    %38 = vector.load %arg3[%c0_63, %c0_64, %c2_65, %c0_66] : memref<2x2x18x4xf32, #tpu.memory_space<vmem>>, vector<2x2x16x4xf32>
    %39 = tpu.concatenate %37, %38 in 1 : vector<2x14x16x4xf32>, vector<2x2x16x4xf32> -> vector<2x16x16x4xf32>
    %40 = vector.shape_cast %39 : vector<2x16x16x4xf32> to vector<512x4xf32>
    %c0_67 = arith.constant 0 : index
    %c32 = arith.constant 32 : index
    %41 = vector.load %arg10[%c0_67, %c32] : memref<512x36xf32, #tpu.memory_space<vmem>>, vector<512x4xf32>
    tpu.vector_store %arg10[%c0_67, %c32], %40 {strides = array<i32>} : memref<512x36xf32, #tpu.memory_space<vmem>>, vector<512x4xf32>,
    %c0_68 = arith.constant 0 : index
    %c0_69 = arith.constant 0 : index
    %42 = vector.load %arg10[%c0_68, %c0_69] : memref<512x36xf32, #tpu.memory_space<vmem>>, vector<512x36xf32>
    %c0_70 = arith.constant 0 : index
    %c0_71 = arith.constant 0 : index
    %43 = vector.load %arg4[%c0_70, %c0_71] : memref<36x32xf32, #tpu.memory_space<vmem>>, vector<36x32xf32>
    %cst = arith.constant dense<0.000000e+00> : vector<512x32xf32>
    %44 = tpu.matmul %42, %43, %cst {dimension_numbers = #tpu.dot_dimension_numbers<[1], [0], [0], [1], [0, 0, 1, 1], [], []>} : vector<512x36xf32>, vector<36x32xf32>, vector<512x32xf32> -> vector<512x32xf32>
    %c0_72 = arith.constant 0 : index
    %c0_73 = arith.constant 0 : index
    %45 = vector.load %arg5[%c0_72, %c0_73] : memref<1x32xf32, #tpu.memory_space<vmem>>, vector<1x32xf32>
    %46 = vector.broadcast %45 : vector<1x32xf32> to vector<512x32xf32>
    %47 = arith.addf %44, %46 : vector<512x32xf32>
    %cst_74 = arith.constant 0.000000e+00 : f32
    %48 = vector.broadcast %cst_74 : f32 to vector<512x32xf32>
    %49 = arith.maximumf %47, %48 : vector<512x32xf32>
    %c0_75 = arith.constant 0 : index
    %c0_76 = arith.constant 0 : index
    %50 = vector.load %arg9[%c0_75, %c0_76] : memref<2x32xf32, #tpu.memory_space<vmem>>, vector<2x32xf32>
    %51 = vector.shape_cast %49 : vector<512x32xf32> to vector<2x256x32xf32>
    %cst_77 = arith.constant dense<0.000000e+00> : vector<2x32xf32>
    %52 = vector.multi_reduction <add>, %51, %cst_77 [1] : vector<2x256x32xf32> to vector<2x32xf32>
    %53 = arith.addf %50, %52 : vector<2x32xf32>
    %c0_78 = arith.constant 0 : index
    %c0_79 = arith.constant 0 : index
    %54 = vector.load %arg9[%c0_78, %c0_79] : memref<2x32xf32, #tpu.memory_space<vmem>>, vector<2x32xf32>
    tpu.vector_store %arg9[%c0_78, %c0_79], %53 {strides = array<i32>} : memref<2x32xf32, #tpu.memory_space<vmem>>, vector<2x32xf32>,
    %c0_i32_80 = arith.constant 0 : i32
    %55 = arith.cmpi eq, %arg1, %c0_i32_80 : i32
    %56 = arith.extui %55 : i1 to i32
    %c0_i32_81 = arith.constant 0 : i32
    %57 = arith.cmpi ne, %56, %c0_i32_81 : i32
    scf.if %57 {
      %c0_82 = arith.constant 0 : index
      %c0_83 = arith.constant 0 : index
      %58 = vector.load %arg9[%c0_82, %c0_83] : memref<2x32xf32, #tpu.memory_space<vmem>>, vector<2x32xf32>
      %cst_84 = arith.constant 3.906250e-03 : f32
      %59 = vector.broadcast %cst_84 : f32 to vector<2x32xf32>
      %60 = arith.mulf %58, %59 : vector<2x32xf32>
      %c0_85 = arith.constant 0 : index
      %c0_86 = arith.constant 0 : index
      %61 = vector.load %arg6[%c0_85, %c0_86] : memref<32x128xf32, #tpu.memory_space<vmem>>, vector<32x128xf32>
      %cst_87 = arith.constant dense<0.000000e+00> : vector<2x128xf32>
      %62 = tpu.matmul %60, %61, %cst_87 {dimension_numbers = #tpu.dot_dimension_numbers<[1], [0], [0], [1], [0, 0, 1, 1], [], []>} : vector<2x32xf32>, vector<32x128xf32>, vector<2x128xf32> -> vector<2x128xf32>
      %c0_88 = arith.constant 0 : index
      %c0_89 = arith.constant 0 : index
      %63 = vector.load %arg7[%c0_88, %c0_89] : memref<1x128xf32, #tpu.memory_space<vmem>>, vector<1x128xf32>
      %64 = vector.broadcast %63 : vector<1x128xf32> to vector<2x128xf32>
      %65 = arith.addf %62, %64 : vector<2x128xf32>
      %c0_90 = arith.constant 0 : index
      %c0_91 = arith.constant 0 : index
      %66 = vector.load %arg8[%c0_90, %c0_91] : memref<2x128xf32, #tpu.memory_space<vmem>>, vector<2x128xf32>
      tpu.vector_store %arg8[%c0_90, %c0_91], %65 {strides = array<i32>} : memref<2x128xf32, #tpu.memory_space<vmem>>, vector<2x128xf32>,
    } else {
    }
    return
  }
  func.func @transform_0(%arg0: i32, %arg1: i32) -> (i32, i32, i32, i32) {
    %c0_i32 = arith.constant 0 : i32
    %c0_i32_0 = arith.constant 0 : i32
    %c0_i32_1 = arith.constant 0 : i32
    return %arg0, %arg1, %c0_i32, %c0_i32_0 : i32, i32, i32, i32
  }
  func.func @transform_1(%arg0: i32, %arg1: i32) -> (i32, i32, i32, i32) {
    %c1_i32 = arith.constant 1 : i32
    %0 = arith.addi %arg1, %c1_i32 : i32
    %c8_i32 = arith.constant 8 : i32
    %1 = arith.muli %0, %c8_i32 : i32
    %c0_i32 = arith.constant 0 : i32
    %c0_i32_0 = arith.constant 0 : i32
    %c0_i32_1 = arith.constant 0 : i32
    return %arg0, %1, %c0_i32, %c0_i32_0 : i32, i32, i32, i32
  }
  func.func @transform_2(%arg0: i32, %arg1: i32) -> (i32, i32) {
    %c0_i32 = arith.constant 0 : i32
    %c0_i32_0 = arith.constant 0 : i32
    %c0_i32_1 = arith.constant 0 : i32
    return %c0_i32, %c0_i32_0 : i32, i32
  }
  func.func @transform_3(%arg0: i32, %arg1: i32) -> (i32, i32) {
    %c0_i32 = arith.constant 0 : i32
    %c0_i32_0 = arith.constant 0 : i32
    %c0_i32_1 = arith.constant 0 : i32
    return %c0_i32, %c0_i32_0 : i32, i32
  }
  func.func @transform_4(%arg0: i32, %arg1: i32) -> (i32, i32) {
    %c0_i32 = arith.constant 0 : i32
    %c0_i32_0 = arith.constant 0 : i32
    %c0_i32_1 = arith.constant 0 : i32
    return %c0_i32, %c0_i32_0 : i32, i32
  }
  func.func @transform_5(%arg0: i32, %arg1: i32) -> (i32, i32) {
    %c0_i32 = arith.constant 0 : i32
    %c0_i32_0 = arith.constant 0 : i32
    %c0_i32_1 = arith.constant 0 : i32
    return %c0_i32, %c0_i32_0 : i32, i32
  }
  func.func @transform_6(%arg0: i32, %arg1: i32) -> (i32, i32) {
    %c0_i32 = arith.constant 0 : i32
    %c0_i32_0 = arith.constant 0 : i32
    return %arg0, %c0_i32 : i32, i32
  }
}

</mosaic_0001>

<llo_original>
// kernel: tpu_custom_call.1
$region0: #{tpu_custom_call.1}
  #allocation0 [shape = 'u32[]', space=smem, size = 0x4, offset = 0x4, fixed_abs, tag = 'smem constant byte address 0x4 - core index']
  #allocation1 [shape = 'u32[144,128]{1,0:T(1,128)}', space=vmem, size = 0x12000, scoped, tag = 'internal scratch']
  #allocation2 [shape = 'f32[2,32]{1,0:T(2,128)}', space=vmem, size = 0x400, scoped, tag = 'scratch operand']
  #allocation3 [shape = 'f32[512,36]{1,0:T(8,128)}', space=vmem, size = 0x40000, scoped, tag = 'scratch operand']
  %s0 = inlined_call_operand.vmem [shape: f32[2,18,18,4], index: 0, kind: input, shape index: {}]
  %s1 = inlined_call_operand.vmem [shape: f32[2,18,18,4], index: 1, kind: input, shape index: {}]
  %s2 = inlined_call_operand.vmem [shape: f32[36,32], index: 2, kind: input, shape index: {}]
  %s3 = inlined_call_operand.vmem [shape: f32[1,32], index: 3, kind: input, shape index: {}]
  %s4 = inlined_call_operand.vmem [shape: f32[32,128], index: 4, kind: input, shape index: {}]
  %s5 = inlined_call_operand.vmem [shape: f32[1,128], index: 5, kind: input, shape index: {}]
  %s6 = inlined_call_operand.hbm [shape: f32[2,128], index: 6, kind: output, shape index: {}]
  %s7 = sld [smem:[#allocation0]]
  $region118: #{tpu_custom_call.1} parent=0
    _
  %s9 = ssub.s32 1, %s7
  %s10 = scalar_select 0, %s9, %s7
  $region1: #{tpu_custom_call.1} parent=0
    #allocation4 [shape = 'u8[393216]{0}', space=vmem, size = 0x60000, scoped, tag = 'input window, operand 0, single buffered']
    #allocation5 [shape = 'u8[49152]{0}', space=vmem, size = 0xc000, scoped, tag = 'input window, operand 1, single buffered']
    #allocation6 [shape = 'u8[1024]{0}', space=vmem, size = 0x400, scoped, tag = 'output window, operand 0, single buffered']
    #allocation7 [shape = 's32[1]{0}', space=sflag, size = 0x4, scoped, tag = 'scoped memory for tpu_custom_call.1']
    %11 = vsyncpa [#allocation7], 0
    // Predicated region
    $region2: #{tpu_custom_call.1} parent=1 // pred_check
      _
    $region3: #{tpu_custom_call.1} parent=1 // pred_check_branch
      %13 = sbr.rel (0) target = $region5
    $region4: #{tpu_custom_call.1} parent=1 // pred_region
      // Predicated region
      $region6: #{tpu_custom_call.1} parent=4 // pred_check
        _
      $region7: #{tpu_custom_call.1} parent=4 // pred_check_branch
        %15 = sbr.rel (0) target = $region9
      $region8: #{tpu_custom_call.1} parent=4 // pred_region
        // Predicated region
        $region10: #{tpu_custom_call.1} parent=8 // pred_check
          _
        $region11: #{tpu_custom_call.1} parent=8 // pred_check_branch
          %17 = sbr.rel (0) target = $region13
        $region12: #{tpu_custom_call.1} parent=8 // pred_region
          // Predicated region
          $region25: #{tpu_custom_call.1} parent=12 // pred_check
            _
          $region26: #{tpu_custom_call.1} parent=12 // pred_check_branch
            %222 = sbr.rel (0) target = $region28
          $region27: #{tpu_custom_call.1} parent=12 // pred_region
            loop: start=0, step=1, limit=1
            $region29: #{tpu_custom_call.1} parent=27 // loop_pre_header
              _
            $region30: #{tpu_custom_call.1} parent=27 // loop_header
              %s224 = sphi 0, %s228
              %p225 = scmp.ge.s32.totalorder %s224, 1
              %s229 = sphi %s0, %s0
              %s230 = sphi [#allocation4], [#allocation4]
            $region31: #{tpu_custom_call.1} parent=27 // loop_header_branch
              %227 = sbr.rel (%p225) target = $region35
            $region32: #{tpu_custom_call.1} parent=27 // loop_body
              %v231 = vld [vmem:[%s229] sm:$0xff]
              %232 = vst [vmem:[%s230] sm:$0xff] %v231
              %v233 = vld [vmem:[%s229 + $0x8] sm:$0xff]
              %234 = vst [vmem:[%s230 + $0x8] sm:$0xff] %v233
              %v235 = vld [vmem:[%s229 + $0x10] sm:$0xff]
              %236 = vst [vmem:[%s230 + $0x10] sm:$0xff] %v235
              %v237 = vld [vmem:[%s229 + $0x18] sm:$0xff]
              %238 = vst [vmem:[%s230 + $0x18] sm:$0xff] %v237
              %v239 = vld [vmem:[%s229 + $0x20] sm:$0xff]
              %240 = vst [vmem:[%s230 + $0x20] sm:$0xff] %v239
              %v241 = vld [vmem:[%s229 + $0x28] sm:$0xff]
              %242 = vst [vmem:[%s230 + $0x28] sm:$0xff] %v241
              %v243 = vld [vmem:[%s229 + $0x30] sm:$0xff]
              %244 = vst [vmem:[%s230 + $0x30] sm:$0xff] %v243
              %v245 = vld [vmem:[%s229 + $0x38] sm:$0xff]
              %246 = vst [vmem:[%s230 + $0x38] sm:$0xff] %v245
              %v247 = vld [vmem:[%s229 + $0x40] sm:$0xff]
              %248 = vst [vmem:[%s230 + $0x40] sm:$0xff] %v247
              %v249 = vld [vmem:[%s229 + $0x48] sm:$0xff]
              %250 = vst [vmem:[%s230 + $0x48] sm:$0xff] %v249
              %v251 = vld [vmem:[%s229 + $0x50] sm:$0xff]
              %252 = vst [vmem:[%s230 + $0x50] sm:$0xff] %v251
              %v253 = vld [vmem:[%s229 + $0x58] sm:$0xff]
              %254 = vst [vmem:[%s230 + $0x58] sm:$0xff] %v253
              %v255 = vld [vmem:[%s229 + $0x60] sm:$0xff]
              %256 = vst [vmem:[%s230 + $0x60] sm:$0xff] %v255
              %v257 = vld [vmem:[%s229 + $0x68] sm:$0xff]
              %258 = vst [vmem:[%s230 + $0x68] sm:$0xff] %v257
              %v259 = vld [vmem:[%s229 + $0x70] sm:$0xff]
              %260 = vst [vmem:[%s230 + $0x70] sm:$0xff] %v259
              %v261 = vld [vmem:[%s229 + $0x78] sm:$0xff]
              %262 = vst [vmem:[%s230 + $0x78] sm:$0xff] %v261
              %v263 = vld [vmem:[%s229 + $0x80] sm:$0xff]
              %264 = vst [vmem:[%s230 + $0x80] sm:$0xff] %v263
              %v265 = vld [vmem:[%s229 + $0x88] sm:$0xff]
              %266 = vst [vmem:[%s230 + $0x88] sm:$0xff] %v265
              %v267 = vld [vmem:[%s229 + $0x90] sm:$0xff]
              %268 = vst [vmem:[%s230 + $0x90] sm:$0xff] %v267
              %v269 = vld [vmem:[%s229 + $0x98] sm:$0xff]
              %270 = vst [vmem:[%s230 + $0x98] sm:$0xff] %v269
              %v271 = vld [vmem:[%s229 + $0xa0] sm:$0xff]
              %272 = vst [vmem:[%s230 + $0xa0] sm:$0xff] %v271
              %v273 = vld [vmem:[%s229 + $0xa8] sm:$0xff]
              %274 = vst [vmem:[%s230 + $0xa8] sm:$0xff] %v273
              %v275 = vld [vmem:[%s229 + $0xb0] sm:$0xff]
              %276 = vst [vmem:[%s230 + $0xb0] sm:$0xff] %v275
              %v277 = vld [vmem:[%s229 + $0xb8] sm:$0xff]
              %278 = vst [vmem:[%s230 + $0xb8] sm:$0xff] %v277
              %v279 = vld [vmem:[%s229 + $0xc0] sm:$0xff]
              %280 = vst [vmem:[%s230 + $0xc0] sm:$0xff] %v279
              %v281 = vld [vmem:[%s229 + $0xc8] sm:$0xff]
              %282 = vst [vmem:[%s230 + $0xc8] sm:$0xff] %v281
              %v283 = vld [vmem:[%s229 + $0xd0] sm:$0xff]
              %284 = vst [vmem:[%s230 + $0xd0] sm:$0xff] %v283
              %v285 = vld [vmem:[%s229 + $0xd8] sm:$0xff]
              %286 = vst [vmem:[%s230 + $0xd8] sm:$0xff] %v285
              %v287 = vld [vmem:[%s229 + $0xe0] sm:$0xff]
              %288 = vst [vmem:[%s230 + $0xe0] sm:$0xff] %v287
              %v289 = vld [vmem:[%s229 + $0xe8] sm:$0xff]
              %290 = vst [vmem:[%s230 + $0xe8] sm:$0xff] %v289
              %v291 = vld [vmem:[%s229 + $0xf0] sm:$0xff]
              %292 = vst [vmem:[%s230 + $0xf0] sm:$0xff] %v291
              %v293 = vld [vmem:[%s229 + $0xf8] sm:$0xff]
              %294 = vst [vmem:[%s230 + $0xf8] sm:$0xff] %v293
              %v295 = vld [vmem:[%s229 + $0x100] sm:$0xff]
              %296 = vst [vmem:[%s230 + $0x100] sm:$0xff] %v295
              %v297 = vld [vmem:[%s229 + $0x108] sm:$0xff]
              %298 = vst [vmem:[%s230 + $0x108] sm:$0xff] %v297
              %v299 = vld [vmem:[%s229 + $0x110] sm:$0xff]
              %300 = vst [vmem:[%s230 + $0x110] sm:$0xff] %v299
              %v301 = vld [vmem:[%s229 + $0x118] sm:$0xff]
              %302 = vst [vmem:[%s230 + $0x118] sm:$0xff] %v301
              %v303 = vld [vmem:[%s229 + $0x120] sm:$0xff]
              %304 = vst [vmem:[%s230 + $0x120] sm:$0xff] %v303
              %v305 = vld [vmem:[%s229 + $0x128] sm:$0xff]
              %306 = vst [vmem:[%s230 + $0x128] sm:$0xff] %v305
              %v307 = vld [vmem:[%s229 + $0x130] sm:$0xff]
              %308 = vst [vmem:[%s230 + $0x130] sm:$0xff] %v307
              %v309 = vld [vmem:[%s229 + $0x138] sm:$0xff]
              %310 = vst [vmem:[%s230 + $0x138] sm:$0xff] %v309
              %v311 = vld [vmem:[%s229 + $0x140] sm:$0xff]
              %312 = vst [vmem:[%s230 + $0x140] sm:$0xff] %v311
              %v313 = vld [vmem:[%s229 + $0x148] sm:$0xff]
              %314 = vst [vmem:[%s230 + $0x148] sm:$0xff] %v313
              %v315 = vld [vmem:[%s229 + $0x150] sm:$0xff]
              %316 = vst [vmem:[%s230 + $0x150] sm:$0xff] %v315
              %v317 = vld [vmem:[%s229 + $0x158] sm:$0xff]
              %318 = vst [vmem:[%s230 + $0x158] sm:$0xff] %v317
              %v319 = vld [vmem:[%s229 + $0x160] sm:$0xff]
              %320 = vst [vmem:[%s230 + $0x160] sm:$0xff] %v319
              %v321 = vld [vmem:[%s229 + $0x168] sm:$0xff]
              %322 = vst [vmem:[%s230 + $0x168] sm:$0xff] %v321
              %v323 = vld [vmem:[%s229 + $0x170] sm:$0xff]
              %324 = vst [vmem:[%s230 + $0x170] sm:$0xff] %v323
              %v325 = vld [vmem:[%s229 + $0x178] sm:$0xff]
              %326 = vst [vmem:[%s230 + $0x178] sm:$0xff] %v325
              %v327 = vld [vmem:[%s229 + $0x1b0] sm:$0xff]
              %328 = vst [vmem:[%s230 + $0x180] sm:$0xff] %v327
              %v329 = vld [vmem:[%s229 + $0x1b8] sm:$0xff]
              %330 = vst [vmem:[%s230 + $0x188] sm:$0xff] %v329
              %v331 = vld [vmem:[%s229 + $0x1c0] sm:$0xff]
              %332 = vst [vmem:[%s230 + $0x190] sm:$0xff] %v331
              %v333 = vld [vmem:[%s229 + $0x1c8] sm:$0xff]
              %334 = vst [vmem:[%s230 + $0x198] sm:$0xff] %v333
              %v335 = vld [vmem:[%s229 + $0x1d0] sm:$0xff]
              %336 = vst [vmem:[%s230 + $0x1a0] sm:$0xff] %v335
              %v337 = vld [vmem:[%s229 + $0x1d8] sm:$0xff]
              %338 = vst [vmem:[%s230 + $0x1a8] sm:$0xff] %v337
              %v339 = vld [vmem:[%s229 + $0x1e0] sm:$0xff]
              %340 = vst [vmem:[%s230 + $0x1b0] sm:$0xff] %v339
              %v341 = vld [vmem:[%s229 + $0x1e8] sm:$0xff]
              %342 = vst [vmem:[%s230 + $0x1b8] sm:$0xff] %v341
              %v343 = vld [vmem:[%s229 + $0x1f0] sm:$0xff]
              %344 = vst [vmem:[%s230 + $0x1c0] sm:$0xff] %v343
              %v345 = vld [vmem:[%s229 + $0x1f8] sm:$0xff]
              %346 = vst [vmem:[%s230 + $0x1c8] sm:$0xff] %v345
              %v347 = vld [vmem:[%s229 + $0x200] sm:$0xff]
              %348 = vst [vmem:[%s230 + $0x1d0] sm:$0xff] %v347
              %v349 = vld [vmem:[%s229 + $0x208] sm:$0xff]
              %350 = vst [vmem:[%s230 + $0x1d8] sm:$0xff] %v349
              %v351 = vld [vmem:[%s229 + $0x210] sm:$0xff]
              %352 = vst [vmem:[%s230 + $0x1e0] sm:$0xff] %v351
              %v353 = vld [vmem:[%s229 + $0x218] sm:$0xff]
              %354 = vst [vmem:[%s230 + $0x1e8] sm:$0xff] %v353
              %v355 = vld [vmem:[%s229 + $0x220] sm:$0xff]
              %356 = vst [vmem:[%s230 + $0x1f0] sm:$0xff] %v355
              %v357 = vld [vmem:[%s229 + $0x228] sm:$0xff]
              %358 = vst [vmem:[%s230 + $0x1f8] sm:$0xff] %v357
              %v359 = vld [vmem:[%s229 + $0x230] sm:$0xff]
              %360 = vst [vmem:[%s230 + $0x200] sm:$0xff] %v359
              %v361 = vld [vmem:[%s229 + $0x238] sm:$0xff]
              %362 = vst [vmem:[%s230 + $0x208] sm:$0xff] %v361
              %v363 = vld [vmem:[%s229 + $0x240] sm:$0xff]
              %364 = vst [vmem:[%s230 + $0x210] sm:$0xff] %v363
              %v365 = vld [vmem:[%s229 + $0x248] sm:$0xff]
              %366 = vst [vmem:[%s230 + $0x218] sm:$0xff] %v365
              %v367 = vld [vmem:[%s229 + $0x250] sm:$0xff]
              %368 = vst [vmem:[%s230 + $0x220] sm:$0xff] %v367
              %v369 = vld [vmem:[%s229 + $0x258] sm:$0xff]
              %370 = vst [vmem:[%s230 + $0x228] sm:$0xff] %v369
              %v371 = vld [vmem:[%s229 + $0x260] sm:$0xff]
              %372 = vst [vmem:[%s230 + $0x230] sm:$0xff] %v371
              %v373 = vld [vmem:[%s229 + $0x268] sm:$0xff]
              %374 = vst [vmem:[%s230 + $0x238] sm:$0xff] %v373
              %v375 = vld [vmem:[%s229 + $0x270] sm:$0xff]
              %376 = vst [vmem:[%s230 + $0x240] sm:$0xff] %v375
              %v377 = vld [vmem:[%s229 + $0x278] sm:$0xff]
              %378 = vst [vmem:[%s230 + $0x248] sm:$0xff] %v377
              %v379 = vld [vmem:[%s229 + $0x280] sm:$0xff]
              %380 = vst [vmem:[%s230 + $0x250] sm:$0xff] %v379
              %v381 = vld [vmem:[%s229 + $0x288] sm:$0xff]
              %382 = vst [vmem:[%s230 + $0x258] sm:$0xff] %v381
              %v383 = vld [vmem:[%s229 + $0x290] sm:$0xff]
              %384 = vst [vmem:[%s230 + $0x260] sm:$0xff] %v383
              %v385 = vld [vmem:[%s229 + $0x298] sm:$0xff]
              %386 = vst [vmem:[%s230 + $0x268] sm:$0xff] %v385
              %v387 = vld [vmem:[%s229 + $0x2a0] sm:$0xff]
              %388 = vst [vmem:[%s230 + $0x270] sm:$0xff] %v387
              %v389 = vld [vmem:[%s229 + $0x2a8] sm:$0xff]
              %390 = vst [vmem:[%s230 + $0x278] sm:$0xff] %v389
              %v391 = vld [vmem:[%s229 + $0x2b0] sm:$0xff]
              %392 = vst [vmem:[%s230 + $0x280] sm:$0xff] %v391
              %v393 = vld [vmem:[%s229 + $0x2b8] sm:$0xff]
              %394 = vst [vmem:[%s230 + $0x288] sm:$0xff] %v393
              %v395 = vld [vmem:[%s229 + $0x2c0] sm:$0xff]
              %396 = vst [vmem:[%s230 + $0x290] sm:$0xff] %v395
              %v397 = vld [vmem:[%s229 + $0x2c8] sm:$0xff]
              %398 = vst [vmem:[%s230 + $0x298] sm:$0xff] %v397
              %v399 = vld [vmem:[%s229 + $0x2d0] sm:$0xff]
              %400 = vst [vmem:[%s230 + $0x2a0] sm:$0xff] %v399
              %v401 = vld [vmem:[%s229 + $0x2d8] sm:$0xff]
              %402 = vst [vmem:[%s230 + $0x2a8] sm:$0xff] %v401
              %v403 = vld [vmem:[%s229 + $0x2e0] sm:$0xff]
              %404 = vst [vmem:[%s230 + $0x2b0] sm:$0xff] %v403
              %v405 = vld [vmem:[%s229 + $0x2e8] sm:$0xff]
              %406 = vst [vmem:[%s230 + $0x2b8] sm:$0xff] %v405
              %v407 = vld [vmem:[%s229 + $0x2f0] sm:$0xff]
              %408 = vst [vmem:[%s230 + $0x2c0] sm:$0xff] %v407
              %v409 = vld [vmem:[%s229 + $0x2f8] sm:$0xff]
              %410 = vst [vmem:[%s230 + $0x2c8] sm:$0xff] %v409
              %v411 = vld [vmem:[%s229 + $0x300] sm:$0xff]
              %412 = vst [vmem:[%s230 + $0x2d0] sm:$0xff] %v411
              %v413 = vld [vmem:[%s229 + $0x308] sm:$0xff]
              %414 = vst [vmem:[%s230 + $0x2d8] sm:$0xff] %v413
              %v415 = vld [vmem:[%s229 + $0x310] sm:$0xff]
              %416 = vst [vmem:[%s230 + $0x2e0] sm:$0xff] %v415
              %v417 = vld [vmem:[%s229 + $0x318] sm:$0xff]
              %418 = vst [vmem:[%s230 + $0x2e8] sm:$0xff] %v417
              %v419 = vld [vmem:[%s229 + $0x320] sm:$0xff]
              %420 = vst [vmem:[%s230 + $0x2f0] sm:$0xff] %v419
              %v421 = vld [vmem:[%s229 + $0x328] sm:$0xff]
              %422 = vst [vmem:[%s230 + $0x2f8] sm:$0xff] %v421
            $region33: #{tpu_custom_call.1} parent=27 // loop_footer
              %s228 = sadd.s32 1, %s224
            $region34: #{tpu_custom_call.1} parent=27 // loop_footer_branch
              %223 = sbr.rel target = $region30
            $region35: #{tpu_custom_call.1} parent=27 // loop_exit
              _
          $region28: #{tpu_custom_call.1} parent=12 // pred_fallthru
            _
          // Predicated region
          $region36: #{tpu_custom_call.1} parent=12 // pred_check
            _
          $region37: #{tpu_custom_call.1} parent=12 // pred_check_branch
            %424 = sbr.rel target = $region39
          $region38: #{tpu_custom_call.1} parent=12 // pred_region
            _
          $region39: #{tpu_custom_call.1} parent=12 // pred_fallthru
            _
        $region13: #{tpu_custom_call.1} parent=8 // pred_fallthru
          _
        // Predicated region
        $region14: #{tpu_custom_call.1} parent=8 // pred_check
          _
        $region15: #{tpu_custom_call.1} parent=8 // pred_check_branch
          %19 = sbr.rel target = $region17
        $region16: #{tpu_custom_call.1} parent=8 // pred_region
          loop: start=0, step=1, limit=1
          $region18: #{tpu_custom_call.1} parent=16 // loop_pre_header
            _
          $region19: #{tpu_custom_call.1} parent=16 // loop_header
            %s22 = sphi 0, %s26
            %p23 = scmp.ge.s32.totalorder %s22, 1
            %s27 = sphi %s0, %s0
            %s28 = sphi [#allocation4], [#allocation4]
          $region20: #{tpu_custom_call.1} parent=16 // loop_header_branch
            %25 = sbr.rel (%p23) target = $region24
          $region21: #{tpu_custom_call.1} parent=16 // loop_body
            %v29 = vld [vmem:[%s27] sm:$0xff]
            %30 = vst [vmem:[%s28] sm:$0xff] %v29
            %v31 = vld [vmem:[%s27 + $0x8] sm:$0xff]
            %32 = vst [vmem:[%s28 + $0x8] sm:$0xff] %v31
            %v33 = vld [vmem:[%s27 + $0x10] sm:$0xff]
            %34 = vst [vmem:[%s28 + $0x10] sm:$0xff] %v33
            %v35 = vld [vmem:[%s27 + $0x18] sm:$0xff]
            %36 = vst [vmem:[%s28 + $0x18] sm:$0xff] %v35
            %v37 = vld [vmem:[%s27 + $0x20] sm:$0xff]
            %38 = vst [vmem:[%s28 + $0x20] sm:$0xff] %v37
            %v39 = vld [vmem:[%s27 + $0x28] sm:$0xff]
            %40 = vst [vmem:[%s28 + $0x28] sm:$0xff] %v39
            %v41 = vld [vmem:[%s27 + $0x30] sm:$0xff]
            %42 = vst [vmem:[%s28 + $0x30] sm:$0xff] %v41
            %v43 = vld [vmem:[%s27 + $0x38] sm:$0xff]
            %44 = vst [vmem:[%s28 + $0x38] sm:$0xff] %v43
            %v45 = vld [vmem:[%s27 + $0x40] sm:$0xff]
            %46 = vst [vmem:[%s28 + $0x40] sm:$0xff] %v45
            %v47 = vld [vmem:[%s27 + $0x48] sm:$0xff]
            %48 = vst [vmem:[%s28 + $0x48] sm:$0xff] %v47
            %v49 = vld [vmem:[%s27 + $0x50] sm:$0xff]
            %50 = vst [vmem:[%s28 + $0x50] sm:$0xff] %v49
            %v51 = vld [vmem:[%s27 + $0x58] sm:$0xff]
            %52 = vst [vmem:[%s28 + $0x58] sm:$0xff] %v51
            %v53 = vld [vmem:[%s27 + $0x60] sm:$0xff]
            %54 = vst [vmem:[%s28 + $0x60] sm:$0xff] %v53
            %v55 = vld [vmem:[%s27 + $0x68] sm:$0xff]
            %56 = vst [vmem:[%s28 + $0x68] sm:$0xff] %v55
            %v57 = vld [vmem:[%s27 + $0x70] sm:$0xff]
            %58 = vst [vmem:[%s28 + $0x70] sm:$0xff] %v57
            %v59 = vld [vmem:[%s27 + $0x78] sm:$0xff]
            %60 = vst [vmem:[%s28 + $0x78] sm:$0xff] %v59
            %v61 = vld [vmem:[%s27 + $0x80] sm:$0xff]
            %62 = vst [vmem:[%s28 + $0x80] sm:$0xff] %v61
            %v63 = vld [vmem:[%s27 + $0x88] sm:$0xff]
            %64 = vst [vmem:[%s28 + $0x88] sm:$0xff] %v63
            %v65 = vld [vmem:[%s27 + $0x90] sm:$0xff]
            %66 = vst [vmem:[%s28 + $0x90] sm:$0xff] %v65
            %v67 = vld [vmem:[%s27 + $0x98] sm:$0xff]
            %68 = vst [vmem:[%s28 + $0x98] sm:$0xff] %v67
            %v69 = vld [vmem:[%s27 + $0xa0] sm:$0xff]
            %70 = vst [vmem:[%s28 + $0xa0] sm:$0xff] %v69
            %v71 = vld [vmem:[%s27 + $0xa8] sm:$0xff]
            %72 = vst [vmem:[%s28 + $0xa8] sm:$0xff] %v71
            %v73 = vld [vmem:[%s27 + $0xb0] sm:$0xff]
            %74 = vst [vmem:[%s28 + $0xb0] sm:$0xff] %v73
            %v75 = vld [vmem:[%s27 + $0xb8] sm:$0xff]
            %76 = vst [vmem:[%s28 + $0xb8] sm:$0xff] %v75
            %v77 = vld [vmem:[%s27 + $0xc0] sm:$0xff]
            %78 = vst [vmem:[%s28 + $0xc0] sm:$0xff] %v77
            %v79 = vld [vmem:[%s27 + $0xc8] sm:$0xff]
            %80 = vst [vmem:[%s28 + $0xc8] sm:$0xff] %v79
            %v81 = vld [vmem:[%s27 + $0xd0] sm:$0xff]
            %82 = vst [vmem:[%s28 + $0xd0] sm:$0xff] %v81
            %v83 = vld [vmem:[%s27 + $0xd8] sm:$0xff]
            %84 = vst [vmem:[%s28 + $0xd8] sm:$0xff] %v83
            %v85 = vld [vmem:[%s27 + $0xe0] sm:$0xff]
            %86 = vst [vmem:[%s28 + $0xe0] sm:$0xff] %v85
            %v87 = vld [vmem:[%s27 + $0xe8] sm:$0xff]
            %88 = vst [vmem:[%s28 + $0xe8] sm:$0xff] %v87
            %v89 = vld [vmem:[%s27 + $0xf0] sm:$0xff]
            %90 = vst [vmem:[%s28 + $0xf0] sm:$0xff] %v89
            %v91 = vld [vmem:[%s27 + $0xf8] sm:$0xff]
            %92 = vst [vmem:[%s28 + $0xf8] sm:$0xff] %v91
            %v93 = vld [vmem:[%s27 + $0x100] sm:$0xff]
            %94 = vst [vmem:[%s28 + $0x100] sm:$0xff] %v93
            %v95 = vld [vmem:[%s27 + $0x108] sm:$0xff]
            %96 = vst [vmem:[%s28 + $0x108] sm:$0xff] %v95
            %v97 = vld [vmem:[%s27 + $0x110] sm:$0xff]
            %98 = vst [vmem:[%s28 + $0x110] sm:$0xff] %v97
            %v99 = vld [vmem:[%s27 + $0x118] sm:$0xff]
            %100 = vst [vmem:[%s28 + $0x118] sm:$0xff] %v99
            %v101 = vld [vmem:[%s27 + $0x120] sm:$0xff]
            %102 = vst [vmem:[%s28 + $0x120] sm:$0xff] %v101
            %v103 = vld [vmem:[%s27 + $0x128] sm:$0xff]
            %104 = vst [vmem:[%s28 + $0x128] sm:$0xff] %v103
            %v105 = vld [vmem:[%s27 + $0x130] sm:$0xff]
            %106 = vst [vmem:[%s28 + $0x130] sm:$0xff] %v105
            %v107 = vld [vmem:[%s27 + $0x138] sm:$0xff]
            %108 = vst [vmem:[%s28 + $0x138] sm:$0xff] %v107
            %v109 = vld [vmem:[%s27 + $0x140] sm:$0xff]
            %110 = vst [vmem:[%s28 + $0x140] sm:$0xff] %v109
            %v111 = vld [vmem:[%s27 + $0x148] sm:$0xff]
            %112 = vst [vmem:[%s28 + $0x148] sm:$0xff] %v111
            %v113 = vld [vmem:[%s27 + $0x150] sm:$0xff]
            %114 = vst [vmem:[%s28 + $0x150] sm:$0xff] %v113
            %v115 = vld [vmem:[%s27 + $0x158] sm:$0xff]
            %116 = vst [vmem:[%s28 + $0x158] sm:$0xff] %v115
            %v117 = vld [vmem:[%s27 + $0x160] sm:$0xff]
            %118 = vst [vmem:[%s28 + $0x160] sm:$0xff] %v117
            %v119 = vld [vmem:[%s27 + $0x168] sm:$0xff]
            %120 = vst [vmem:[%s28 + $0x168] sm:$0xff] %v119
            %v121 = vld [vmem:[%s27 + $0x170] sm:$0xff]
            %122 = vst [vmem:[%s28 + $0x170] sm:$0xff] %v121
            %v123 = vld [vmem:[%s27 + $0x178] sm:$0xff]
            %124 = vst [vmem:[%s28 + $0x178] sm:$0xff] %v123
            %v125 = vld [vmem:[%s27 + $0x1b0] sm:$0xff]
            %126 = vst [vmem:[%s28 + $0x180] sm:$0xff] %v125
            %v127 = vld [vmem:[%s27 + $0x1b8] sm:$0xff]
            %128 = vst [vmem:[%s28 + $0x188] sm:$0xff] %v127
            %v129 = vld [vmem:[%s27 + $0x1c0] sm:$0xff]
            %130 = vst [vmem:[%s28 + $0x190] sm:$0xff] %v129
            %v131 = vld [vmem:[%s27 + $0x1c8] sm:$0xff]
            %132 = vst [vmem:[%s28 + $0x198] sm:$0xff] %v131
            %v133 = vld [vmem:[%s27 + $0x1d0] sm:$0xff]
            %134 = vst [vmem:[%s28 + $0x1a0] sm:$0xff] %v133
            %v135 = vld [vmem:[%s27 + $0x1d8] sm:$0xff]
            %136 = vst [vmem:[%s28 + $0x1a8] sm:$0xff] %v135
            %v137 = vld [vmem:[%s27 + $0x1e0] sm:$0xff]
            %138 = vst [vmem:[%s28 + $0x1b0] sm:$0xff] %v137
            %v139 = vld [vmem:[%s27 + $0x1e8] sm:$0xff]
            %140 = vst [vmem:[%s28 + $0x1b8] sm:$0xff] %v139
            %v141 = vld [vmem:[%s27 + $0x1f0] sm:$0xff]
            %142 = vst [vmem:[%s28 + $0x1c0] sm:$0xff] %v141
            %v143 = vld [vmem:[%s27 + $0x1f8] sm:$0xff]
            %144 = vst [vmem:[%s28 + $0x1c8] sm:$0xff] %v143
            %v145 = vld [vmem:[%s27 + $0x200] sm:$0xff]
            %146 = vst [vmem:[%s28 + $0x1d0] sm:$0xff] %v145
            %v147 = vld [vmem:[%s27 + $0x208] sm:$0xff]
            %148 = vst [vmem:[%s28 + $0x1d8] sm:$0xff] %v147
            %v149 = vld [vmem:[%s27 + $0x210] sm:$0xff]
            %150 = vst [vmem:[%s28 + $0x1e0] sm:$0xff] %v149
            %v151 = vld [vmem:[%s27 + $0x218] sm:$0xff]
            %152 = vst [vmem:[%s28 + $0x1e8] sm:$0xff] %v151
            %v153 = vld [vmem:[%s27 + $0x220] sm:$0xff]
            %154 = vst [vmem:[%s28 + $0x1f0] sm:$0xff] %v153
            %v155 = vld [vmem:[%s27 + $0x228] sm:$0xff]
            %156 = vst [vmem:[%s28 + $0x1f8] sm:$0xff] %v155
            %v157 = vld [vmem:[%s27 + $0x230] sm:$0xff]
            %158 = vst [vmem:[%s28 + $0x200] sm:$0xff] %v157
            %v159 = vld [vmem:[%s27 + $0x238] sm:$0xff]
            %160 = vst [vmem:[%s28 + $0x208] sm:$0xff] %v159
            %v161 = vld [vmem:[%s27 + $0x240] sm:$0xff]
            %162 = vst [vmem:[%s28 + $0x210] sm:$0xff] %v161
            %v163 = vld [vmem:[%s27 + $0x248] sm:$0xff]
            %164 = vst [vmem:[%s28 + $0x218] sm:$0xff] %v163
            %v165 = vld [vmem:[%s27 + $0x250] sm:$0xff]
            %166 = vst [vmem:[%s28 + $0x220] sm:$0xff] %v165
            %v167 = vld [vmem:[%s27 + $0x258] sm:$0xff]
            %168 = vst [vmem:[%s28 + $0x228] sm:$0xff] %v167
            %v169 = vld [vmem:[%s27 + $0x260] sm:$0xff]
            %170 = vst [vmem:[%s28 + $0x230] sm:$0xff] %v169
            %v171 = vld [vmem:[%s27 + $0x268] sm:$0xff]
            %172 = vst [vmem:[%s28 + $0x238] sm:$0xff] %v171
            %v173 = vld [vmem:[%s27 + $0x270] sm:$0xff]
            %174 = vst [vmem:[%s28 + $0x240] sm:$0xff] %v173
            %v175 = vld [vmem:[%s27 + $0x278] sm:$0xff]
            %176 = vst [vmem:[%s28 + $0x248] sm:$0xff] %v175
            %v177 = vld [vmem:[%s27 + $0x280] sm:$0xff]
            %178 = vst [vmem:[%s28 + $0x250] sm:$0xff] %v177
            %v179 = vld [vmem:[%s27 + $0x288] sm:$0xff]
            %180 = vst [vmem:[%s28 + $0x258] sm:$0xff] %v179
            %v181 = vld [vmem:[%s27 + $0x290] sm:$0xff]
            %182 = vst [vmem:[%s28 + $0x260] sm:$0xff] %v181
            %v183 = vld [vmem:[%s27 + $0x298] sm:$0xff]
            %184 = vst [vmem:[%s28 + $0x268] sm:$0xff] %v183
            %v185 = vld [vmem:[%s27 + $0x2a0] sm:$0xff]
            %186 = vst [vmem:[%s28 + $0x270] sm:$0xff] %v185
            %v187 = vld [vmem:[%s27 + $0x2a8] sm:$0xff]
            %188 = vst [vmem:[%s28 + $0x278] sm:$0xff] %v187
            %v189 = vld [vmem:[%s27 + $0x2b0] sm:$0xff]
            %190 = vst [vmem:[%s28 + $0x280] sm:$0xff] %v189
            %v191 = vld [vmem:[%s27 + $0x2b8] sm:$0xff]
            %192 = vst [vmem:[%s28 + $0x288] sm:$0xff] %v191
            %v193 = vld [vmem:[%s27 + $0x2c0] sm:$0xff]
            %194 = vst [vmem:[%s28 + $0x290] sm:$0xff] %v193
            %v195 = vld [vmem:[%s27 + $0x2c8] sm:$0xff]
            %196 = vst [vmem:[%s28 + $0x298] sm:$0xff] %v195
            %v197 = vld [vmem:[%s27 + $0x2d0] sm:$0xff]
            %198 = vst [vmem:[%s28 + $0x2a0] sm:$0xff] %v197
            %v199 = vld [vmem:[%s27 + $0x2d8] sm:$0xff]
            %200 = vst [vmem:[%s28 + $0x2a8] sm:$0xff] %v199
            %v201 = vld [vmem:[%s27 + $0x2e0] sm:$0xff]
            %202 = vst [vmem:[%s28 + $0x2b0] sm:$0xff] %v201
            %v203 = vld [vmem:[%s27 + $0x2e8] sm:$0xff]
            %204 = vst [vmem:[%s28 + $0x2b8] sm:$0xff] %v203
            %v205 = vld [vmem:[%s27 + $0x2f0] sm:$0xff]
            %206 = vst [vmem:[%s28 + $0x2c0] sm:$0xff] %v205
            %v207 = vld [vmem:[%s27 + $0x2f8] sm:$0xff]
            %208 = vst [vmem:[%s28 + $0x2c8] sm:$0xff] %v207
            %v209 = vld [vmem:[%s27 + $0x300] sm:$0xff]
            %210 = vst [vmem:[%s28 + $0x2d0] sm:$0xff] %v209
            %v211 = vld [vmem:[%s27 + $0x308] sm:$0xff]
            %212 = vst [vmem:[%s28 + $0x2d8] sm:$0xff] %v211
            %v213 = vld [vmem:[%s27 + $0x310] sm:$0xff]
            %214 = vst [vmem:[%s28 + $0x2e0] sm:$0xff] %v213
            %v215 = vld [vmem:[%s27 + $0x318] sm:$0xff]
            %216 = vst [vmem:[%s28 + $0x2e8] sm:$0xff] %v215
            %v217 = vld [vmem:[%s27 + $0x320] sm:$0xff]
            %218 = vst [vmem:[%s28 + $0x2f0] sm:$0xff] %v217
            %v219 = vld [vmem:[%s27 + $0x328] sm:$0xff]
            %220 = vst [vmem:[%s28 + $0x2f8] sm:$0xff] %v219
          $region22: #{tpu_custom_call.1} parent=16 // loop_footer
            %s26 = sadd.s32 1, %s22
          $region23: #{tpu_custom_call.1} parent=16 // loop_footer_branch
            %21 = sbr.rel target = $region19
          $region24: #{tpu_custom_call.1} parent=16 // loop_exit
            _
        $region17: #{tpu_custom_call.1} parent=8 // pred_fallthru
          _
      $region9: #{tpu_custom_call.1} parent=4 // pred_fallthru
        _
      %425 = vnop
    $region5: #{tpu_custom_call.1} parent=1 // pred_fallthru
      _
    // Predicated region
    $region40: #{tpu_custom_call.1} parent=1 // pred_check
      _
    $region41: #{tpu_custom_call.1} parent=1 // pred_check_branch
      %427 = sbr.rel (0) target = $region43
    $region42: #{tpu_custom_call.1} parent=1 // pred_region
      %s428 = sadd.s32 0, 1
      %s429 = smul.u32 %s428, 8
      %s430 = smul.u32 2, %s429
      %s431 = smul.addr %s430, 3
      %s432 = smul.addr %s431, 8
      %s433 = scalar_lea.vmem %s1, %s432
      // Predicated region
      $region44: #{tpu_custom_call.1} parent=42 // pred_check
        _
      $region45: #{tpu_custom_call.1} parent=42 // pred_check_branch
        %435 = sbr.rel (0) target = $region47
      $region46: #{tpu_custom_call.1} parent=42 // pred_region
        // Predicated region
        $region48: #{tpu_custom_call.1} parent=46 // pred_check
          _
        $region49: #{tpu_custom_call.1} parent=46 // pred_check_branch
          %437 = sbr.rel (0) target = $region51
        $region50: #{tpu_custom_call.1} parent=46 // pred_region
          // Predicated region
          $region63: #{tpu_custom_call.1} parent=50 // pred_check
            _
          $region64: #{tpu_custom_call.1} parent=50 // pred_check_branch
            %474 = sbr.rel (0) target = $region66
          $region65: #{tpu_custom_call.1} parent=50 // pred_region
            loop: start=0, step=1, limit=1
            $region67: #{tpu_custom_call.1} parent=65 // loop_pre_header
              _
            $region68: #{tpu_custom_call.1} parent=65 // loop_header
              %s476 = sphi 0, %s480
              %p477 = scmp.ge.s32.totalorder %s476, 1
              %s481 = sphi %s433, %s433
              %s482 = sphi [#allocation5], [#allocation5]
            $region69: #{tpu_custom_call.1} parent=65 // loop_header_branch
              %479 = sbr.rel (%p477) target = $region73
            $region70: #{tpu_custom_call.1} parent=65 // loop_body
              %v483 = vld [vmem:[%s481] sm:$0xff]
              %484 = vst [vmem:[%s482] sm:$0xff] %v483
              %v485 = vld [vmem:[%s481 + $0x8] sm:$0xff]
              %486 = vst [vmem:[%s482 + $0x8] sm:$0xff] %v485
              %v487 = vld [vmem:[%s481 + $0x10] sm:$0xff]
              %488 = vst [vmem:[%s482 + $0x10] sm:$0xff] %v487
              %v489 = vld [vmem:[%s481 + $0x18] sm:$0xff]
              %490 = vst [vmem:[%s482 + $0x18] sm:$0xff] %v489
              %v491 = vld [vmem:[%s481 + $0x20] sm:$0xff]
              %492 = vst [vmem:[%s482 + $0x20] sm:$0xff] %v491
              %v493 = vld [vmem:[%s481 + $0x28] sm:$0xff]
              %494 = vst [vmem:[%s482 + $0x28] sm:$0xff] %v493
              %v495 = vld [vmem:[%s481 + $0x1b0] sm:$0xff]
              %496 = vst [vmem:[%s482 + $0x30] sm:$0xff] %v495
              %v497 = vld [vmem:[%s481 + $0x1b8] sm:$0xff]
              %498 = vst [vmem:[%s482 + $0x38] sm:$0xff] %v497
              %v499 = vld [vmem:[%s481 + $0x1c0] sm:$0xff]
              %500 = vst [vmem:[%s482 + $0x40] sm:$0xff] %v499
              %v501 = vld [vmem:[%s481 + $0x1c8] sm:$0xff]
              %502 = vst [vmem:[%s482 + $0x48] sm:$0xff] %v501
              %v503 = vld [vmem:[%s481 + $0x1d0] sm:$0xff]
              %504 = vst [vmem:[%s482 + $0x50] sm:$0xff] %v503
              %v505 = vld [vmem:[%s481 + $0x1d8] sm:$0xff]
              %506 = vst [vmem:[%s482 + $0x58] sm:$0xff] %v505
            $region71: #{tpu_custom_call.1} parent=65 // loop_footer
              %s480 = sadd.s32 1, %s476
            $region72: #{tpu_custom_call.1} parent=65 // loop_footer_branch
              %475 = sbr.rel target = $region68
            $region73: #{tpu_custom_call.1} parent=65 // loop_exit
              _
          $region66: #{tpu_custom_call.1} parent=50 // pred_fallthru
            _
          // Predicated region
          $region74: #{tpu_custom_call.1} parent=50 // pred_check
            _
          $region75: #{tpu_custom_call.1} parent=50 // pred_check_branch
            %508 = sbr.rel target = $region77
          $region76: #{tpu_custom_call.1} parent=50 // pred_region
            _
          $region77: #{tpu_custom_call.1} parent=50 // pred_fallthru
            _
        $region51: #{tpu_custom_call.1} parent=46 // pred_fallthru
          _
        // Predicated region
        $region52: #{tpu_custom_call.1} parent=46 // pred_check
          _
        $region53: #{tpu_custom_call.1} parent=46 // pred_check_branch
          %439 = sbr.rel target = $region55
        $region54: #{tpu_custom_call.1} parent=46 // pred_region
          loop: start=0, step=1, limit=1
          $region56: #{tpu_custom_call.1} parent=54 // loop_pre_header
            _
          $region57: #{tpu_custom_call.1} parent=54 // loop_header
            %s442 = sphi 0, %s446
            %p443 = scmp.ge.s32.totalorder %s442, 1
            %s447 = sphi %s433, %s433
            %s448 = sphi [#allocation5], [#allocation5]
          $region58: #{tpu_custom_call.1} parent=54 // loop_header_branch
            %445 = sbr.rel (%p443) target = $region62
          $region59: #{tpu_custom_call.1} parent=54 // loop_body
            %v449 = vld [vmem:[%s447] sm:$0xff]
            %450 = vst [vmem:[%s448] sm:$0xff] %v449
            %v451 = vld [vmem:[%s447 + $0x8] sm:$0xff]
            %452 = vst [vmem:[%s448 + $0x8] sm:$0xff] %v451
            %v453 = vld [vmem:[%s447 + $0x10] sm:$0xff]
            %454 = vst [vmem:[%s448 + $0x10] sm:$0xff] %v453
            %v455 = vld [vmem:[%s447 + $0x18] sm:$0xff]
            %456 = vst [vmem:[%s448 + $0x18] sm:$0xff] %v455
            %v457 = vld [vmem:[%s447 + $0x20] sm:$0xff]
            %458 = vst [vmem:[%s448 + $0x20] sm:$0xff] %v457
            %v459 = vld [vmem:[%s447 + $0x28] sm:$0xff]
            %460 = vst [vmem:[%s448 + $0x28] sm:$0xff] %v459
            %v461 = vld [vmem:[%s447 + $0x1b0] sm:$0xff]
            %462 = vst [vmem:[%s448 + $0x30] sm:$0xff] %v461
            %v463 = vld [vmem:[%s447 + $0x1b8] sm:$0xff]
            %464 = vst [vmem:[%s448 + $0x38] sm:$0xff] %v463
            %v465 = vld [vmem:[%s447 + $0x1c0] sm:$0xff]
            %466 = vst [vmem:[%s448 + $0x40] sm:$0xff] %v465
            %v467 = vld [vmem:[%s447 + $0x1c8] sm:$0xff]
            %468 = vst [vmem:[%s448 + $0x48] sm:$0xff] %v467
            %v469 = vld [vmem:[%s447 + $0x1d0] sm:$0xff]
            %470 = vst [vmem:[%s448 + $0x50] sm:$0xff] %v469
            %v471 = vld [vmem:[%s447 + $0x1d8] sm:$0xff]
            %472 = vst [vmem:[%s448 + $0x58] sm:$0xff] %v471
          $region60: #{tpu_custom_call.1} parent=54 // loop_footer
            %s446 = sadd.s32 1, %s442
          $region61: #{tpu_custom_call.1} parent=54 // loop_footer_branch
            %441 = sbr.rel target = $region57
          $region62: #{tpu_custom_call.1} parent=54 // loop_exit
            _
        $region55: #{tpu_custom_call.1} parent=46 // pred_fallthru
          _
      $region47: #{tpu_custom_call.1} parent=42 // pred_fallthru
        _
      %509 = vnop
    $region43: #{tpu_custom_call.1} parent=1 // pred_fallthru
      _
    // Predicated region
    $region78: #{tpu_custom_call.1} parent=1 // pred_check
      _
    $region79: #{tpu_custom_call.1} parent=1 // pred_check_branch
      %511 = sbr.rel (0) target = $region81
    $region80: #{tpu_custom_call.1} parent=1 // pred_region
      _
    $region81: #{tpu_custom_call.1} parent=1 // pred_fallthru
      _
    // Predicated region
    $region82: #{tpu_custom_call.1} parent=1 // pred_check
      _
    $region83: #{tpu_custom_call.1} parent=1 // pred_check_branch
      %513 = sbr.rel (0) target = $region85
    $region84: #{tpu_custom_call.1} parent=1 // pred_region
      _
    $region85: #{tpu_custom_call.1} parent=1 // pred_fallthru
      _
    // Predicated region
    $region86: #{tpu_custom_call.1} parent=1 // pred_check
      _
    $region87: #{tpu_custom_call.1} parent=1 // pred_check_branch
      %515 = sbr.rel (0) target = $region89
    $region88: #{tpu_custom_call.1} parent=1 // pred_region
      _
    $region89: #{tpu_custom_call.1} parent=1 // pred_fallthru
      _
    // Predicated region
    $region90: #{tpu_custom_call.1} parent=1 // pred_check
      _
    $region91: #{tpu_custom_call.1} parent=1 // pred_check_branch
      %517 = sbr.rel (0) target = $region93
    $region92: #{tpu_custom_call.1} parent=1 // pred_region
      _
    $region93: #{tpu_custom_call.1} parent=1 // pred_fallthru
      _
    // Predicated region
    $region94: #{tpu_custom_call.1} parent=1 // pred_check
      _
    $region95: #{tpu_custom_call.1} parent=1 // pred_check_branch
      %519 = sbr.rel (0) target = $region97
    $region96: #{tpu_custom_call.1} parent=1 // pred_region
      _
    $region97: #{tpu_custom_call.1} parent=1 // pred_fallthru
      _
    // Predicated region
    $region98: #{tpu_custom_call.1} parent=1 // pred_check
      _
    $region99: #{tpu_custom_call.1} parent=1 // pred_check_branch
      %521 = sbr.rel (0) target = $region101
    $region100: #{tpu_custom_call.1} parent=1 // pred_region
      _
    $region101: #{tpu_custom_call.1} parent=1 // pred_fallthru
      _
    %s522 = sadd.s32 0, 1
    %s523 = smul.u32 %s522, 8
    %s524 = smul.u32 2, %s523
    %p525 = scmp.eq.s32.totalorder 0, 0
    // Predicated region
    $region102: #{tpu_custom_call.1} parent=1 // pred_check
      %p526 = pneg %p525
    $region103: #{tpu_custom_call.1} parent=1 // pred_check_branch
      %528 = sbr.rel (%p526) target = $region105
    $region104: #{tpu_custom_call.1} parent=1 // pred_region
      %vm529 = vcmask 254976
      %530 = vst.msk [vmem:[#allocation2] sm:$0x3] %vm529, 0.0
    $region105: #{tpu_custom_call.1} parent=1 // pred_fallthru
      _
    %v531 = vld [vmem:[#allocation4] sm:$0xff]
    %v532 = vld [vmem:[#allocation4 + $0x8] sm:$0xff]
    %v533 = vld [vmem:[#allocation4 + $0x18] sm:$0xff]
    %v534 = vld [vmem:[#allocation4 + $0x20] sm:$0xff]
    %v535 = vld [vmem:[#allocation4 + $0x30] sm:$0xff]
    %v536 = vld [vmem:[#allocation4 + $0x38] sm:$0xff]
    %v537 = vld [vmem:[#allocation4 + $0x48] sm:$0xff]
    %v538 = vld [vmem:[#allocation4 + $0x50] sm:$0xff]
    %v539 = vld [vmem:[#allocation4 + $0x60] sm:$0xff]
    %v540 = vld [vmem:[#allocation4 + $0x68] sm:$0xff]
    %v541 = vld [vmem:[#allocation4 + $0x78] sm:$0xff]
    %v542 = vld [vmem:[#allocation4 + $0x80] sm:$0xff]
    %v543 = vld [vmem:[#allocation4 + $0x90] sm:$0xff]
    %v544 = vld [vmem:[#allocation4 + $0x98] sm:$0xff]
    %v545 = vld [vmem:[#allocation4 + $0xa8] sm:$0xff]
    %v546 = vld [vmem:[#allocation4 + $0xb0] sm:$0xff]
    %v547 = vld [vmem:[#allocation4 + $0xc0] sm:$0xff]
    %v548 = vld [vmem:[#allocation4 + $0xc8] sm:$0xff]
    %v549 = vld [vmem:[#allocation4 + $0xd8] sm:$0xff]
    %v550 = vld [vmem:[#allocation4 + $0xe0] sm:$0xff]
    %v551 = vld [vmem:[#allocation4 + $0xf0] sm:$0xff]
    %v552 = vld [vmem:[#allocation4 + $0xf8] sm:$0xff]
    %v553 = vld [vmem:[#allocation4 + $0x108] sm:$0xff]
    %v554 = vld [vmem:[#allocation4 + $0x110] sm:$0xff]
    %v555 = vld [vmem:[#allocation4 + $0x120] sm:$0xff]
    %v556 = vld [vmem:[#allocation4 + $0x128] sm:$0xff]
    %v557 = vld [vmem:[#allocation4 + $0x138] sm:$0xff]
    %v558 = vld [vmem:[#allocation4 + $0x140] sm:$0xff]
    %v559 = vld [vmem:[#allocation4 + $0x150] sm:$0xff]
    %v560 = vld [vmem:[#allocation4 + $0x158] sm:$0xff]
    %v561 = vld [vmem:[#allocation4 + $0x168] sm:$0xff]
    %v562 = vld [vmem:[#allocation4 + $0x170] sm:$0xff]
    %v563 = vld [vmem:[#allocation4 + $0x180] sm:$0xff]
    %v564 = vld [vmem:[#allocation4 + $0x188] sm:$0xff]
    %v565 = vld [vmem:[#allocation4 + $0x198] sm:$0xff]
    %v566 = vld [vmem:[#allocation4 + $0x1a0] sm:$0xff]
    %v567 = vld [vmem:[#allocation4 + $0x1b0] sm:$0xff]
    %v568 = vld [vmem:[#allocation4 + $0x1b8] sm:$0xff]
    %v569 = vld [vmem:[#allocation4 + $0x1c8] sm:$0xff]
    %v570 = vld [vmem:[#allocation4 + $0x1d0] sm:$0xff]
    %v571 = vld [vmem:[#allocation4 + $0x1e0] sm:$0xff]
    %v572 = vld [vmem:[#allocation4 + $0x1e8] sm:$0xff]
    %v573 = vld [vmem:[#allocation4 + $0x1f8] sm:$0xff]
    %v574 = vld [vmem:[#allocation4 + $0x200] sm:$0xff]
    %v575 = vld [vmem:[#allocation4 + $0x210] sm:$0xff]
    %v576 = vld [vmem:[#allocation4 + $0x218] sm:$0xff]
    %v577 = vld [vmem:[#allocation4 + $0x228] sm:$0xff]
    %v578 = vld [vmem:[#allocation4 + $0x230] sm:$0xff]
    %v579 = vld [vmem:[#allocation4 + $0x240] sm:$0xff]
    %v580 = vld [vmem:[#allocation4 + $0x248] sm:$0xff]
    %v581 = vld [vmem:[#allocation4 + $0x258] sm:$0xff]
    %v582 = vld [vmem:[#allocation4 + $0x260] sm:$0xff]
    %v583 = vld [vmem:[#allocation4 + $0x270] sm:$0xff]
    %v584 = vld [vmem:[#allocation4 + $0x278] sm:$0xff]
    %v585 = vld [vmem:[#allocation4 + $0x288] sm:$0xff]
    %v586 = vld [vmem:[#allocation4 + $0x290] sm:$0xff]
    %v587 = vld [vmem:[#allocation4 + $0x2a0] sm:$0xff]
    %v588 = vld [vmem:[#allocation4 + $0x2a8] sm:$0xff]
    %v589 = vld [vmem:[#allocation4 + $0x2b8] sm:$0xff]
    %v590 = vld [vmem:[#allocation4 + $0x2c0] sm:$0xff]
    %v591 = vld [vmem:[#allocation4 + $0x2d0] sm:$0xff]
    %v592 = vld [vmem:[#allocation4 + $0x2d8] sm:$0xff]
    %v593 = vld [vmem:[#allocation4 + $0x2e8] sm:$0xff]
    %v594 = vld [vmem:[#allocation4 + $0x2f0] sm:$0xff]
    %vm595 = vcmask 31744
    %596 = vst.msk [vmem:[#allocation3] sm:$0xff] %vm595, %v531
    %597 = vst.msk [vmem:[#allocation3 + $0x8] sm:$0xff] %vm595, %v532
    %598 = vst.msk [vmem:[#allocation3 + $0x10] sm:$0xff] %vm595, %v533
    %599 = vst.msk [vmem:[#allocation3 + $0x18] sm:$0xff] %vm595, %v534
    %600 = vst.msk [vmem:[#allocation3 + $0x20] sm:$0xff] %vm595, %v535
    %601 = vst.msk [vmem:[#allocation3 + $0x28] sm:$0xff] %vm595, %v536
    %602 = vst.msk [vmem:[#allocation3 + $0x30] sm:$0xff] %vm595, %v537
    %603 = vst.msk [vmem:[#allocation3 + $0x38] sm:$0xff] %vm595, %v538
    %604 = vst.msk [vmem:[#allocation3 + $0x40] sm:$0xff] %vm595, %v539
    %605 = vst.msk [vmem:[#allocation3 + $0x48] sm:$0xff] %vm595, %v540
    %606 = vst.msk [vmem:[#allocation3 + $0x50] sm:$0xff] %vm595, %v541
    %607 = vst.msk [vmem:[#allocation3 + $0x58] sm:$0xff] %vm595, %v542
    %608 = vst.msk [vmem:[#allocation3 + $0x60] sm:$0xff] %vm595, %v543
    %609 = vst.msk [vmem:[#allocation3 + $0x68] sm:$0xff] %vm595, %v544
    %610 = vst.msk [vmem:[#allocation3 + $0x70] sm:$0xff] %vm595, %v545
    %611 = vst.msk [vmem:[#allocation3 + $0x78] sm:$0xff] %vm595, %v546
    %612 = vst.msk [vmem:[#allocation3 + $0x80] sm:$0xff] %vm595, %v547
    %613 = vst.msk [vmem:[#allocation3 + $0x88] sm:$0xff] %vm595, %v548
    %614 = vst.msk [vmem:[#allocation3 + $0x90] sm:$0xff] %vm595, %v549
    %615 = vst.msk [vmem:[#allocation3 + $0x98] sm:$0xff] %vm595, %v550
    %616 = vst.msk [vmem:[#allocation3 + $0xa0] sm:$0xff] %vm595, %v551
    %617 = vst.msk [vmem:[#allocation3 + $0xa8] sm:$0xff] %vm595, %v552
    %618 = vst.msk [vmem:[#allocation3 + $0xb0] sm:$0xff] %vm595, %v553
    %619 = vst.msk [vmem:[#allocation3 + $0xb8] sm:$0xff] %vm595, %v554
    %620 = vst.msk [vmem:[#allocation3 + $0xc0] sm:$0xff] %vm595, %v555
    %621 = vst.msk [vmem:[#allocation3 + $0xc8] sm:$0xff] %vm595, %v556
    %622 = vst.msk [vmem:[#allocation3 + $0xd0] sm:$0xff] %vm595, %v557
    %623 = vst.msk [vmem:[#allocation3 + $0xd8] sm:$0xff] %vm595, %v558
    %624 = vst.msk [vmem:[#allocation3 + $0xe0] sm:$0xff] %vm595, %v559
    %625 = vst.msk [vmem:[#allocation3 + $0xe8] sm:$0xff] %vm595, %v560
    %626 = vst.msk [vmem:[#allocation3 + $0xf0] sm:$0xff] %vm595, %v561
    %627 = vst.msk [vmem:[#allocation3 + $0xf8] sm:$0xff] %vm595, %v562
    %628 = vst.msk [vmem:[#allocation3 + $0x100] sm:$0xff] %vm595, %v563
    %629 = vst.msk [vmem:[#allocation3 + $0x108] sm:$0xff] %vm595, %v564
    %630 = vst.msk [vmem:[#allocation3 + $0x110] sm:$0xff] %vm595, %v565
    %631 = vst.msk [vmem:[#allocation3 + $0x118] sm:$0xff] %vm595, %v566
    %632 = vst.msk [vmem:[#allocation3 + $0x120] sm:$0xff] %vm595, %v567
    %633 = vst.msk [vmem:[#allocation3 + $0x128] sm:$0xff] %vm595, %v568
    %634 = vst.msk [vmem:[#allocation3 + $0x130] sm:$0xff] %vm595, %v569
    %635 = vst.msk [vmem:[#allocation3 + $0x138] sm:$0xff] %vm595, %v570
    %636 = vst.msk [vmem:[#allocation3 + $0x140] sm:$0xff] %vm595, %v571
    %637 = vst.msk [vmem:[#allocation3 + $0x148] sm:$0xff] %vm595, %v572
    %638 = vst.msk [vmem:[#allocation3 + $0x150] sm:$0xff] %vm595, %v573
    %639 = vst.msk [vmem:[#allocation3 + $0x158] sm:$0xff] %vm595, %v574
    %640 = vst.msk [vmem:[#allocation3 + $0x160] sm:$0xff] %vm595, %v575
    %641 = vst.msk [vmem:[#allocation3 + $0x168] sm:$0xff] %vm595, %v576
    %642 = vst.msk [vmem:[#allocation3 + $0x170] sm:$0xff] %vm595, %v577
    %643 = vst.msk [vmem:[#allocation3 + $0x178] sm:$0xff] %vm595, %v578
    %644 = vst.msk [vmem:[#allocation3 + $0x180] sm:$0xff] %vm595, %v579
    %645 = vst.msk [vmem:[#allocation3 + $0x188] sm:$0xff] %vm595, %v580
    %646 = vst.msk [vmem:[#allocation3 + $0x190] sm:$0xff] %vm595, %v581
    %647 = vst.msk [vmem:[#allocation3 + $0x198] sm:$0xff] %vm595, %v582
    %648 = vst.msk [vmem:[#allocation3 + $0x1a0] sm:$0xff] %vm595, %v583
    %649 = vst.msk [vmem:[#allocation3 + $0x1a8] sm:$0xff] %vm595, %v584
    %650 = vst.msk [vmem:[#allocation3 + $0x1b0] sm:$0xff] %vm595, %v585
    %651 = vst.msk [vmem:[#allocation3 + $0x1b8] sm:$0xff] %vm595, %v586
    %652 = vst.msk [vmem:[#allocation3 + $0x1c0] sm:$0xff] %vm595, %v587
    %653 = vst.msk [vmem:[#allocation3 + $0x1c8] sm:$0xff] %vm595, %v588
    %654 = vst.msk [vmem:[#allocation3 + $0x1d0] sm:$0xff] %vm595, %v589
    %655 = vst.msk [vmem:[#allocation3 + $0x1d8] sm:$0xff] %vm595, %v590
    %656 = vst.msk [vmem:[#allocation3 + $0x1e0] sm:$0xff] %vm595, %v591
    %657 = vst.msk [vmem:[#allocation3 + $0x1e8] sm:$0xff] %vm595, %v592
    %658 = vst.msk [vmem:[#allocation3 + $0x1f0] sm:$0xff] %vm595, %v593
    %659 = vst.msk [vmem:[#allocation3 + $0x1f8] sm:$0xff] %vm595, %v594
    %v660 = vld [vmem:[#allocation4 + $0x1] sm:$0xff]
    %v661 = vld [vmem:[#allocation4 + $0x9] sm:$0xff]
    %v662 = vld [vmem:[#allocation4 + $0x19] sm:$0xff]
    %v663 = vld [vmem:[#allocation4 + $0x21] sm:$0xff]
    %v664 = vld [vmem:[#allocation4 + $0x31] sm:$0xff]
    %v665 = vld [vmem:[#allocation4 + $0x39] sm:$0xff]
    %v666 = vld [vmem:[#allocation4 + $0x49] sm:$0xff]
    %v667 = vld [vmem:[#allocation4 + $0x51] sm:$0xff]
    %v668 = vld [vmem:[#allocation4 + $0x61] sm:$0xff]
    %v669 = vld [vmem:[#allocation4 + $0x69] sm:$0xff]
    %v670 = vld [vmem:[#allocation4 + $0x79] sm:$0xff]
    %v671 = vld [vmem:[#allocation4 + $0x81] sm:$0xff]
    %v672 = vld [vmem:[#allocation4 + $0x91] sm:$0xff]
    %v673 = vld [vmem:[#allocation4 + $0x99] sm:$0xff]
    %v674 = vld [vmem:[#allocation4 + $0xa9] sm:$0xff]
    %v675 = vld [vmem:[#allocation4 + $0xb1] sm:$0xff]
    %v676 = vld [vmem:[#allocation4 + $0xc1] sm:$0xff]
    %v677 = vld [vmem:[#allocation4 + $0xc9] sm:$0xff]
    %v678 = vld [vmem:[#allocation4 + $0xd9] sm:$0xff]
    %v679 = vld [vmem:[#allocation4 + $0xe1] sm:$0xff]
    %v680 = vld [vmem:[#allocation4 + $0xf1] sm:$0xff]
    %v681 = vld [vmem:[#allocation4 + $0xf9] sm:$0xff]
    %v682 = vld [vmem:[#allocation4 + $0x109] sm:$0xff]
    %v683 = vld [vmem:[#allocation4 + $0x111] sm:$0xff]
    %v684 = vld [vmem:[#allocation4 + $0x121] sm:$0xff]
    %v685 = vld [vmem:[#allocation4 + $0x129] sm:$0xff]
    %v686 = vld [vmem:[#allocation4 + $0x139] sm:$0xff]
    %v687 = vld [vmem:[#allocation4 + $0x141] sm:$0xff]
    %v688 = vld [vmem:[#allocation4 + $0x151] sm:$0xff]
    %v689 = vld [vmem:[#allocation4 + $0x159] sm:$0xff]
    %v690 = vld [vmem:[#allocation4 + $0x169] sm:$0xff]
    %v691 = vld [vmem:[#allocation4 + $0x171] sm:$0xff]
    %v692 = vld [vmem:[#allocation4 + $0x181] sm:$0xff]
    %v693 = vld [vmem:[#allocation4 + $0x189] sm:$0xff]
    %v694 = vld [vmem:[#allocation4 + $0x199] sm:$0xff]
    %v695 = vld [vmem:[#allocation4 + $0x1a1] sm:$0xff]
    %v696 = vld [vmem:[#allocation4 + $0x1b1] sm:$0xff]
    %v697 = vld [vmem:[#allocation4 + $0x1b9] sm:$0xff]
    %v698 = vld [vmem:[#allocation4 + $0x1c9] sm:$0xff]
    %v699 = vld [vmem:[#allocation4 + $0x1d1] sm:$0xff]
    %v700 = vld [vmem:[#allocation4 + $0x1e1] sm:$0xff]
    %v701 = vld [vmem:[#allocation4 + $0x1e9] sm:$0xff]
    %v702 = vld [vmem:[#allocation4 + $0x1f9] sm:$0xff]
    %v703 = vld [vmem:[#allocation4 + $0x201] sm:$0xff]
    %v704 = vld [vmem:[#allocation4 + $0x211] sm:$0xff]
    %v705 = vld [vmem:[#allocation4 + $0x219] sm:$0xff]
    %v706 = vld [vmem:[#allocation4 + $0x229] sm:$0xff]
    %v707 = vld [vmem:[#allocation4 + $0x231] sm:$0xff]
    %v708 = vld [vmem:[#allocation4 + $0x241] sm:$0xff]
    %v709 = vld [vmem:[#allocation4 + $0x249] sm:$0xff]
    %v710 = vld [vmem:[#allocation4 + $0x259] sm:$0xff]
    %v711 = vld [vmem:[#allocation4 + $0x261] sm:$0xff]
    %v712 = vld [vmem:[#allocation4 + $0x271] sm:$0xff]
    %v713 = vld [vmem:[#allocation4 + $0x279] sm:$0xff]
    %v714 = vld [vmem:[#allocation4 + $0x289] sm:$0xff]
    %v715 = vld [vmem:[#allocation4 + $0x291] sm:$0xff]
    %v716 = vld [vmem:[#allocation4 + $0x2a1] sm:$0xff]
    %v717 = vld [vmem:[#allocation4 + $0x2a9] sm:$0xff]
    %v718 = vld [vmem:[#allocation4 + $0x2b9] sm:$0xff]
    %v719 = vld [vmem:[#allocation4 + $0x2c1] sm:$0xff]
    %v720 = vld [vmem:[#allocation4 + $0x2d1] sm:$0xff]
    %v721 = vld [vmem:[#allocation4 + $0x2d9] sm:$0xff]
    %v722 = vld [vmem:[#allocation4 + $0x2e9] sm:$0xff]
    %v723 = vld [vmem:[#allocation4 + $0x2f1] sm:$0xff]
    %788 = vrot.lane.b32.xlu0 %v660, 4
    %v789 = vpop.permute.xlu0 %788
    %790 = vrot.lane.b32.xlu0 %v661, 4
    %v791 = vpop.permute.xlu0 %790
    %792 = vrot.lane.b32.xlu0 %v662, 4
    %v793 = vpop.permute.xlu0 %792
    %794 = vrot.lane.b32.xlu0 %v663, 4
    %v795 = vpop.permute.xlu0 %794
    %796 = vrot.lane.b32.xlu0 %v664, 4
    %v797 = vpop.permute.xlu0 %796
    %798 = vrot.lane.b32.xlu0 %v665, 4
    %v799 = vpop.permute.xlu0 %798
    %800 = vrot.lane.b32.xlu0 %v666, 4
    %v801 = vpop.permute.xlu0 %800
    %802 = vrot.lane.b32.xlu0 %v667, 4
    %v803 = vpop.permute.xlu0 %802
    %804 = vrot.lane.b32.xlu0 %v668, 4
    %v805 = vpop.permute.xlu0 %804
    %806 = vrot.lane.b32.xlu0 %v669, 4
    %v807 = vpop.permute.xlu0 %806
    %808 = vrot.lane.b32.xlu0 %v670, 4
    %v809 = vpop.permute.xlu0 %808
    %810 = vrot.lane.b32.xlu0 %v671, 4
    %v811 = vpop.permute.xlu0 %810
    %812 = vrot.lane.b32.xlu0 %v672, 4
    %v813 = vpop.permute.xlu0 %812
    %814 = vrot.lane.b32.xlu0 %v673, 4
    %v815 = vpop.permute.xlu0 %814
    %816 = vrot.lane.b32.xlu0 %v674, 4
    %v817 = vpop.permute.xlu0 %816
    %818 = vrot.lane.b32.xlu0 %v675, 4
    %v819 = vpop.permute.xlu0 %818
    %820 = vrot.lane.b32.xlu0 %v676, 4
    %v821 = vpop.permute.xlu0 %820
    %822 = vrot.lane.b32.xlu0 %v677, 4
    %v823 = vpop.permute.xlu0 %822
    %824 = vrot.lane.b32.xlu0 %v678, 4
    %v825 = vpop.permute.xlu0 %824
    %826 = vrot.lane.b32.xlu0 %v679, 4
    %v827 = vpop.permute.xlu0 %826
    %828 = vrot.lane.b32.xlu0 %v680, 4
    %v829 = vpop.permute.xlu0 %828
    %830 = vrot.lane.b32.xlu0 %v681, 4
    %v831 = vpop.permute.xlu0 %830
    %832 = vrot.lane.b32.xlu0 %v682, 4
    %v833 = vpop.permute.xlu0 %832
    %834 = vrot.lane.b32.xlu0 %v683, 4
    %v835 = vpop.permute.xlu0 %834
    %836 = vrot.lane.b32.xlu0 %v684, 4
    %v837 = vpop.permute.xlu0 %836
    %838 = vrot.lane.b32.xlu0 %v685, 4
    %v839 = vpop.permute.xlu0 %838
    %840 = vrot.lane.b32.xlu0 %v686, 4
    %v841 = vpop.permute.xlu0 %840
    %842 = vrot.lane.b32.xlu0 %v687, 4
    %v843 = vpop.permute.xlu0 %842
    %844 = vrot.lane.b32.xlu0 %v688, 4
    %v845 = vpop.permute.xlu0 %844
    %846 = vrot.lane.b32.xlu0 %v689, 4
    %v847 = vpop.permute.xlu0 %846
    %848 = vrot.lane.b32.xlu0 %v690, 4
    %v849 = vpop.permute.xlu0 %848
    %850 = vrot.lane.b32.xlu0 %v691, 4
    %v851 = vpop.permute.xlu0 %850
    %852 = vrot.lane.b32.xlu0 %v692, 4
    %v853 = vpop.permute.xlu0 %852
    %854 = vrot.lane.b32.xlu0 %v693, 4
    %v855 = vpop.permute.xlu0 %854
    %856 = vrot.lane.b32.xlu0 %v694, 4
    %v857 = vpop.permute.xlu0 %856
    %858 = vrot.lane.b32.xlu0 %v695, 4
    %v859 = vpop.permute.xlu0 %858
    %860 = vrot.lane.b32.xlu0 %v696, 4
    %v861 = vpop.permute.xlu0 %860
    %862 = vrot.lane.b32.xlu0 %v697, 4
    %v863 = vpop.permute.xlu0 %862
    %864 = vrot.lane.b32.xlu0 %v698, 4
    %v865 = vpop.permute.xlu0 %864
    %866 = vrot.lane.b32.xlu0 %v699, 4
    %v867 = vpop.permute.xlu0 %866
    %868 = vrot.lane.b32.xlu0 %v700, 4
    %v869 = vpop.permute.xlu0 %868
    %870 = vrot.lane.b32.xlu0 %v701, 4
    %v871 = vpop.permute.xlu0 %870
    %872 = vrot.lane.b32.xlu0 %v702, 4
    %v873 = vpop.permute.xlu0 %872
    %874 = vrot.lane.b32.xlu0 %v703, 4
    %v875 = vpop.permute.xlu0 %874
    %876 = vrot.lane.b32.xlu0 %v704, 4
    %v877 = vpop.permute.xlu0 %876
    %878 = vrot.lane.b32.xlu0 %v705, 4
    %v879 = vpop.permute.xlu0 %878
    %880 = vrot.lane.b32.xlu0 %v706, 4
    %v881 = vpop.permute.xlu0 %880
    %882 = vrot.lane.b32.xlu0 %v707, 4
    %v883 = vpop.permute.xlu0 %882
    %884 = vrot.lane.b32.xlu0 %v708, 4
    %v885 = vpop.permute.xlu0 %884
    %886 = vrot.lane.b32.xlu0 %v709, 4
    %v887 = vpop.permute.xlu0 %886
    %888 = vrot.lane.b32.xlu0 %v710, 4
    %v889 = vpop.permute.xlu0 %888
    %890 = vrot.lane.b32.xlu0 %v711, 4
    %v891 = vpop.permute.xlu0 %890
    %892 = vrot.lane.b32.xlu0 %v712, 4
    %v893 = vpop.permute.xlu0 %892
    %894 = vrot.lane.b32.xlu0 %v713, 4
    %v895 = vpop.permute.xlu0 %894
    %896 = vrot.lane.b32.xlu0 %v714, 4
    %v897 = vpop.permute.xlu0 %896
    %898 = vrot.lane.b32.xlu0 %v715, 4
    %v899 = vpop.permute.xlu0 %898
    %900 = vrot.lane.b32.xlu0 %v716, 4
    %v901 = vpop.permute.xlu0 %900
    %902 = vrot.lane.b32.xlu0 %v717, 4
    %v903 = vpop.permute.xlu0 %902
    %904 = vrot.lane.b32.xlu0 %v718, 4
    %v905 = vpop.permute.xlu0 %904
    %906 = vrot.lane.b32.xlu0 %v719, 4
    %v907 = vpop.permute.xlu0 %906
    %908 = vrot.lane.b32.xlu0 %v720, 4
    %v909 = vpop.permute.xlu0 %908
    %910 = vrot.lane.b32.xlu0 %v721, 4
    %v911 = vpop.permute.xlu0 %910
    %912 = vrot.lane.b32.xlu0 %v722, 4
    %v913 = vpop.permute.xlu0 %912
    %914 = vrot.lane.b32.xlu0 %v723, 4
    %v915 = vpop.permute.xlu0 %914
    %vm980 = vcmask 64544
    %981 = vst.msk [vmem:[#allocation3] sm:$0xff] %vm980, %v789
    %982 = vst.msk [vmem:[#allocation3 + $0x8] sm:$0xff] %vm980, %v791
    %983 = vst.msk [vmem:[#allocation3 + $0x10] sm:$0xff] %vm980, %v793
    %984 = vst.msk [vmem:[#allocation3 + $0x18] sm:$0xff] %vm980, %v795
    %985 = vst.msk [vmem:[#allocation3 + $0x20] sm:$0xff] %vm980, %v797
    %986 = vst.msk [vmem:[#allocation3 + $0x28] sm:$0xff] %vm980, %v799
    %987 = vst.msk [vmem:[#allocation3 + $0x30] sm:$0xff] %vm980, %v801
    %988 = vst.msk [vmem:[#allocation3 + $0x38] sm:$0xff] %vm980, %v803
    %989 = vst.msk [vmem:[#allocation3 + $0x40] sm:$0xff] %vm980, %v805
    %990 = vst.msk [vmem:[#allocation3 + $0x48] sm:$0xff] %vm980, %v807
    %991 = vst.msk [vmem:[#allocation3 + $0x50] sm:$0xff] %vm980, %v809
    %992 = vst.msk [vmem:[#allocation3 + $0x58] sm:$0xff] %vm980, %v811
    %993 = vst.msk [vmem:[#allocation3 + $0x60] sm:$0xff] %vm980, %v813
    %994 = vst.msk [vmem:[#allocation3 + $0x68] sm:$0xff] %vm980, %v815
    %995 = vst.msk [vmem:[#allocation3 + $0x70] sm:$0xff] %vm980, %v817
    %996 = vst.msk [vmem:[#allocation3 + $0x78] sm:$0xff] %vm980, %v819
    %997 = vst.msk [vmem:[#allocation3 + $0x80] sm:$0xff] %vm980, %v821
    %998 = vst.msk [vmem:[#allocation3 + $0x88] sm:$0xff] %vm980, %v823
    %999 = vst.msk [vmem:[#allocation3 + $0x90] sm:$0xff] %vm980, %v825
    %1000 = vst.msk [vmem:[#allocation3 + $0x98] sm:$0xff] %vm980, %v827
    %1001 = vst.msk [vmem:[#allocation3 + $0xa0] sm:$0xff] %vm980, %v829
    %1002 = vst.msk [vmem:[#allocation3 + $0xa8] sm:$0xff] %vm980, %v831
    %1003 = vst.msk [vmem:[#allocation3 + $0xb0] sm:$0xff] %vm980, %v833
    %1004 = vst.msk [vmem:[#allocation3 + $0xb8] sm:$0xff] %vm980, %v835
    %1005 = vst.msk [vmem:[#allocation3 + $0xc0] sm:$0xff] %vm980, %v837
    %1006 = vst.msk [vmem:[#allocation3 + $0xc8] sm:$0xff] %vm980, %v839
    %1007 = vst.msk [vmem:[#allocation3 + $0xd0] sm:$0xff] %vm980, %v841
    %1008 = vst.msk [vmem:[#allocation3 + $0xd8] sm:$0xff] %vm980, %v843
    %1009 = vst.msk [vmem:[#allocation3 + $0xe0] sm:$0xff] %vm980, %v845
    %1010 = vst.msk [vmem:[#allocation3 + $0xe8] sm:$0xff] %vm980, %v847
    %1011 = vst.msk [vmem:[#allocation3 + $0xf0] sm:$0xff] %vm980, %v849
    %1012 = vst.msk [vmem:[#allocation3 + $0xf8] sm:$0xff] %vm980, %v851
    %1013 = vst.msk [vmem:[#allocation3 + $0x100] sm:$0xff] %vm980, %v853
    %1014 = vst.msk [vmem:[#allocation3 + $0x108] sm:$0xff] %vm980, %v855
    %1015 = vst.msk [vmem:[#allocation3 + $0x110] sm:$0xff] %vm980, %v857
    %1016 = vst.msk [vmem:[#allocation3 + $0x118] sm:$0xff] %vm980, %v859
    %1017 = vst.msk [vmem:[#allocation3 + $0x120] sm:$0xff] %vm980, %v861
    %1018 = vst.msk [vmem:[#allocation3 + $0x128] sm:$0xff] %vm980, %v863
    %1019 = vst.msk [vmem:[#allocation3 + $0x130] sm:$0xff] %vm980, %v865
    %1020 = vst.msk [vmem:[#allocation3 + $0x138] sm:$0xff] %vm980, %v867
    %1021 = vst.msk [vmem:[#allocation3 + $0x140] sm:$0xff] %vm980, %v869
    %1022 = vst.msk [vmem:[#allocation3 + $0x148] sm:$0xff] %vm980, %v871
    %1023 = vst.msk [vmem:[#allocation3 + $0x150] sm:$0xff] %vm980, %v873
    %1024 = vst.msk [vmem:[#allocation3 + $0x158] sm:$0xff] %vm980, %v875
    %1025 = vst.msk [vmem:[#allocation3 + $0x160] sm:$0xff] %vm980, %v877
    %1026 = vst.msk [vmem:[#allocation3 + $0x168] sm:$0xff] %vm980, %v879
    %1027 = vst.msk [vmem:[#allocation3 + $0x170] sm:$0xff] %vm980, %v881
    %1028 = vst.msk [vmem:[#allocation3 + $0x178] sm:$0xff] %vm980, %v883
    %1029 = vst.msk [vmem:[#allocation3 + $0x180] sm:$0xff] %vm980, %v885
    %1030 = vst.msk [vmem:[#allocation3 + $0x188] sm:$0xff] %vm980, %v887
    %1031 = vst.msk [vmem:[#allocation3 + $0x190] sm:$0xff] %vm980, %v889
    %1032 = vst.msk [vmem:[#allocation3 + $0x198] sm:$0xff] %vm980, %v891
    %1033 = vst.msk [vmem:[#allocation3 + $0x1a0] sm:$0xff] %vm980, %v893
    %1034 = vst.msk [vmem:[#allocation3 + $0x1a8] sm:$0xff] %vm980, %v895
    %1035 = vst.msk [vmem:[#allocation3 + $0x1b0] sm:$0xff] %vm980, %v897
    %1036 = vst.msk [vmem:[#allocation3 + $0x1b8] sm:$0xff] %vm980, %v899
    %1037 = vst.msk [vmem:[#allocation3 + $0x1c0] sm:$0xff] %vm980, %v901
    %1038 = vst.msk [vmem:[#allocation3 + $0x1c8] sm:$0xff] %vm980, %v903
    %1039 = vst.msk [vmem:[#allocation3 + $0x1d0] sm:$0xff] %vm980, %v905
    %1040 = vst.msk [vmem:[#allocation3 + $0x1d8] sm:$0xff] %vm980, %v907
    %1041 = vst.msk [vmem:[#allocation3 + $0x1e0] sm:$0xff] %vm980, %v909
    %1042 = vst.msk [vmem:[#allocation3 + $0x1e8] sm:$0xff] %vm980, %v911
    %1043 = vst.msk [vmem:[#allocation3 + $0x1f0] sm:$0xff] %vm980, %v913
    %1044 = vst.msk [vmem:[#allocation3 + $0x1f8] sm:$0xff] %vm980, %v915
    %v1045 = vld [vmem:[#allocation4 + $0x2] sm:$0xff]
    %v1046 = vld [vmem:[#allocation4 + $0xa] sm:$0xff]
    %v1047 = vld [vmem:[#allocation4 + $0x1a] sm:$0xff]
    %v1048 = vld [vmem:[#allocation4 + $0x22] sm:$0xff]
    %v1049 = vld [vmem:[#allocation4 + $0x32] sm:$0xff]
    %v1050 = vld [vmem:[#allocation4 + $0x3a] sm:$0xff]
    %v1051 = vld [vmem:[#allocation4 + $0x4a] sm:$0xff]
    %v1052 = vld [vmem:[#allocation4 + $0x52] sm:$0xff]
    %v1053 = vld [vmem:[#allocation4 + $0x62] sm:$0xff]
    %v1054 = vld [vmem:[#allocation4 + $0x6a] sm:$0xff]
    %v1055 = vld [vmem:[#allocation4 + $0x7a] sm:$0xff]
    %v1056 = vld [vmem:[#allocation4 + $0x82] sm:$0xff]
    %v1057 = vld [vmem:[#allocation4 + $0x92] sm:$0xff]
    %v1058 = vld [vmem:[#allocation4 + $0x9a] sm:$0xff]
    %v1059 = vld [vmem:[#allocation4 + $0xaa] sm:$0xff]
    %v1060 = vld [vmem:[#allocation4 + $0xb2] sm:$0xff]
    %v1061 = vld [vmem:[#allocation4 + $0xc2] sm:$0xff]
    %v1062 = vld [vmem:[#allocation4 + $0xca] sm:$0xff]
    %v1063 = vld [vmem:[#allocation4 + $0xda] sm:$0xff]
    %v1064 = vld [vmem:[#allocation4 + $0xe2] sm:$0xff]
    %v1065 = vld [vmem:[#allocation4 + $0xf2] sm:$0xff]
    %v1066 = vld [vmem:[#allocation4 + $0xfa] sm:$0xff]
    %v1067 = vld [vmem:[#allocation4 + $0x10a] sm:$0xff]
    %v1068 = vld [vmem:[#allocation4 + $0x112] sm:$0xff]
    %v1069 = vld [vmem:[#allocation4 + $0x122] sm:$0xff]
    %v1070 = vld [vmem:[#allocation4 + $0x12a] sm:$0xff]
    %v1071 = vld [vmem:[#allocation4 + $0x13a] sm:$0xff]
    %v1072 = vld [vmem:[#allocation4 + $0x142] sm:$0xff]
    %v1073 = vld [vmem:[#allocation4 + $0x152] sm:$0xff]
    %v1074 = vld [vmem:[#allocation4 + $0x15a] sm:$0xff]
    %v1075 = vld [vmem:[#allocation4 + $0x16a] sm:$0xff]
    %v1076 = vld [vmem:[#allocation4 + $0x172] sm:$0xff]
    %v1077 = vld [vmem:[#allocation4 + $0x182] sm:$0xff]
    %v1078 = vld [vmem:[#allocation4 + $0x18a] sm:$0xff]
    %v1079 = vld [vmem:[#allocation4 + $0x19a] sm:$0xff]
    %v1080 = vld [vmem:[#allocation4 + $0x1a2] sm:$0xff]
    %v1081 = vld [vmem:[#allocation4 + $0x1b2] sm:$0xff]
    %v1082 = vld [vmem:[#allocation4 + $0x1ba] sm:$0xff]
    %v1083 = vld [vmem:[#allocation4 + $0x1ca] sm:$0xff]
    %v1084 = vld [vmem:[#allocation4 + $0x1d2] sm:$0xff]
    %v1085 = vld [vmem:[#allocation4 + $0x1e2] sm:$0xff]
    %v1086 = vld [vmem:[#allocation4 + $0x1ea] sm:$0xff]
    %v1087 = vld [vmem:[#allocation4 + $0x1fa] sm:$0xff]
    %v1088 = vld [vmem:[#allocation4 + $0x202] sm:$0xff]
    %v1089 = vld [vmem:[#allocation4 + $0x212] sm:$0xff]
    %v1090 = vld [vmem:[#allocation4 + $0x21a] sm:$0xff]
    %v1091 = vld [vmem:[#allocation4 + $0x22a] sm:$0xff]
    %v1092 = vld [vmem:[#allocation4 + $0x232] sm:$0xff]
    %v1093 = vld [vmem:[#allocation4 + $0x242] sm:$0xff]
    %v1094 = vld [vmem:[#allocation4 + $0x24a] sm:$0xff]
    %v1095 = vld [vmem:[#allocation4 + $0x25a] sm:$0xff]
    %v1096 = vld [vmem:[#allocation4 + $0x262] sm:$0xff]
    %v1097 = vld [vmem:[#allocation4 + $0x272] sm:$0xff]
    %v1098 = vld [vmem:[#allocation4 + $0x27a] sm:$0xff]
    %v1099 = vld [vmem:[#allocation4 + $0x28a] sm:$0xff]
    %v1100 = vld [vmem:[#allocation4 + $0x292] sm:$0xff]
    %v1101 = vld [vmem:[#allocation4 + $0x2a2] sm:$0xff]
    %v1102 = vld [vmem:[#allocation4 + $0x2aa] sm:$0xff]
    %v1103 = vld [vmem:[#allocation4 + $0x2ba] sm:$0xff]
    %v1104 = vld [vmem:[#allocation4 + $0x2c2] sm:$0xff]
    %v1105 = vld [vmem:[#allocation4 + $0x2d2] sm:$0xff]
    %v1106 = vld [vmem:[#allocation4 + $0x2da] sm:$0xff]
    %v1107 = vld [vmem:[#allocation4 + $0x2ea] sm:$0xff]
    %v1108 = vld [vmem:[#allocation4 + $0x2f2] sm:$0xff]
    %1173 = vrot.lane.b32.xlu0 %v1045, 8
    %v1174 = vpop.permute.xlu0 %1173
    %1175 = vrot.lane.b32.xlu0 %v1046, 8
    %v1176 = vpop.permute.xlu0 %1175
    %1177 = vrot.lane.b32.xlu0 %v1047, 8
    %v1178 = vpop.permute.xlu0 %1177
    %1179 = vrot.lane.b32.xlu0 %v1048, 8
    %v1180 = vpop.permute.xlu0 %1179
    %1181 = vrot.lane.b32.xlu0 %v1049, 8
    %v1182 = vpop.permute.xlu0 %1181
    %1183 = vrot.lane.b32.xlu0 %v1050, 8
    %v1184 = vpop.permute.xlu0 %1183
    %1185 = vrot.lane.b32.xlu0 %v1051, 8
    %v1186 = vpop.permute.xlu0 %1185
    %1187 = vrot.lane.b32.xlu0 %v1052, 8
    %v1188 = vpop.permute.xlu0 %1187
    %1189 = vrot.lane.b32.xlu0 %v1053, 8
    %v1190 = vpop.permute.xlu0 %1189
    %1191 = vrot.lane.b32.xlu0 %v1054, 8
    %v1192 = vpop.permute.xlu0 %1191
    %1193 = vrot.lane.b32.xlu0 %v1055, 8
    %v1194 = vpop.permute.xlu0 %1193
    %1195 = vrot.lane.b32.xlu0 %v1056, 8
    %v1196 = vpop.permute.xlu0 %1195
    %1197 = vrot.lane.b32.xlu0 %v1057, 8
    %v1198 = vpop.permute.xlu0 %1197
    %1199 = vrot.lane.b32.xlu0 %v1058, 8
    %v1200 = vpop.permute.xlu0 %1199
    %1201 = vrot.lane.b32.xlu0 %v1059, 8
    %v1202 = vpop.permute.xlu0 %1201
    %1203 = vrot.lane.b32.xlu0 %v1060, 8
    %v1204 = vpop.permute.xlu0 %1203
    %1205 = vrot.lane.b32.xlu0 %v1061, 8
    %v1206 = vpop.permute.xlu0 %1205
    %1207 = vrot.lane.b32.xlu0 %v1062, 8
    %v1208 = vpop.permute.xlu0 %1207
    %1209 = vrot.lane.b32.xlu0 %v1063, 8
    %v1210 = vpop.permute.xlu0 %1209
    %1211 = vrot.lane.b32.xlu0 %v1064, 8
    %v1212 = vpop.permute.xlu0 %1211
    %1213 = vrot.lane.b32.xlu0 %v1065, 8
    %v1214 = vpop.permute.xlu0 %1213
    %1215 = vrot.lane.b32.xlu0 %v1066, 8
    %v1216 = vpop.permute.xlu0 %1215
    %1217 = vrot.lane.b32.xlu0 %v1067, 8
    %v1218 = vpop.permute.xlu0 %1217
    %1219 = vrot.lane.b32.xlu0 %v1068, 8
    %v1220 = vpop.permute.xlu0 %1219
    %1221 = vrot.lane.b32.xlu0 %v1069, 8
    %v1222 = vpop.permute.xlu0 %1221
    %1223 = vrot.lane.b32.xlu0 %v1070, 8
    %v1224 = vpop.permute.xlu0 %1223
    %1225 = vrot.lane.b32.xlu0 %v1071, 8
    %v1226 = vpop.permute.xlu0 %1225
    %1227 = vrot.lane.b32.xlu0 %v1072, 8
    %v1228 = vpop.permute.xlu0 %1227
    %1229 = vrot.lane.b32.xlu0 %v1073, 8
    %v1230 = vpop.permute.xlu0 %1229
    %1231 = vrot.lane.b32.xlu0 %v1074, 8
    %v1232 = vpop.permute.xlu0 %1231
    %1233 = vrot.lane.b32.xlu0 %v1075, 8
    %v1234 = vpop.permute.xlu0 %1233
    %1235 = vrot.lane.b32.xlu0 %v1076, 8
    %v1236 = vpop.permute.xlu0 %1235
    %1237 = vrot.lane.b32.xlu0 %v1077, 8
    %v1238 = vpop.permute.xlu0 %1237
    %1239 = vrot.lane.b32.xlu0 %v1078, 8
    %v1240 = vpop.permute.xlu0 %1239
    %1241 = vrot.lane.b32.xlu0 %v1079, 8
    %v1242 = vpop.permute.xlu0 %1241
    %1243 = vrot.lane.b32.xlu0 %v1080, 8
    %v1244 = vpop.permute.xlu0 %1243
    %1245 = vrot.lane.b32.xlu0 %v1081, 8
    %v1246 = vpop.permute.xlu0 %1245
    %1247 = vrot.lane.b32.xlu0 %v1082, 8
    %v1248 = vpop.permute.xlu0 %1247
    %1249 = vrot.lane.b32.xlu0 %v1083, 8
    %v1250 = vpop.permute.xlu0 %1249
    %1251 = vrot.lane.b32.xlu0 %v1084, 8
    %v1252 = vpop.permute.xlu0 %1251
    %1253 = vrot.lane.b32.xlu0 %v1085, 8
    %v1254 = vpop.permute.xlu0 %1253
    %1255 = vrot.lane.b32.xlu0 %v1086, 8
    %v1256 = vpop.permute.xlu0 %1255
    %1257 = vrot.lane.b32.xlu0 %v1087, 8
    %v1258 = vpop.permute.xlu0 %1257
    %1259 = vrot.lane.b32.xlu0 %v1088, 8
    %v1260 = vpop.permute.xlu0 %1259
    %1261 = vrot.lane.b32.xlu0 %v1089, 8
    %v1262 = vpop.permute.xlu0 %1261
    %1263 = vrot.lane.b32.xlu0 %v1090, 8
    %v1264 = vpop.permute.xlu0 %1263
    %1265 = vrot.lane.b32.xlu0 %v1091, 8
    %v1266 = vpop.permute.xlu0 %1265
    %1267 = vrot.lane.b32.xlu0 %v1092, 8
    %v1268 = vpop.permute.xlu0 %1267
    %1269 = vrot.lane.b32.xlu0 %v1093, 8
    %v1270 = vpop.permute.xlu0 %1269
    %1271 = vrot.lane.b32.xlu0 %v1094, 8
    %v1272 = vpop.permute.xlu0 %1271
    %1273 = vrot.lane.b32.xlu0 %v1095, 8
    %v1274 = vpop.permute.xlu0 %1273
    %1275 = vrot.lane.b32.xlu0 %v1096, 8
    %v1276 = vpop.permute.xlu0 %1275
    %1277 = vrot.lane.b32.xlu0 %v1097, 8
    %v1278 = vpop.permute.xlu0 %1277
    %1279 = vrot.lane.b32.xlu0 %v1098, 8
    %v1280 = vpop.permute.xlu0 %1279
    %1281 = vrot.lane.b32.xlu0 %v1099, 8
    %v1282 = vpop.permute.xlu0 %1281
    %1283 = vrot.lane.b32.xlu0 %v1100, 8
    %v1284 = vpop.permute.xlu0 %1283
    %1285 = vrot.lane.b32.xlu0 %v1101, 8
    %v1286 = vpop.permute.xlu0 %1285
    %1287 = vrot.lane.b32.xlu0 %v1102, 8
    %v1288 = vpop.permute.xlu0 %1287
    %1289 = vrot.lane.b32.xlu0 %v1103, 8
    %v1290 = vpop.permute.xlu0 %1289
    %1291 = vrot.lane.b32.xlu0 %v1104, 8
    %v1292 = vpop.permute.xlu0 %1291
    %1293 = vrot.lane.b32.xlu0 %v1105, 8
    %v1294 = vpop.permute.xlu0 %1293
    %1295 = vrot.lane.b32.xlu0 %v1106, 8
    %v1296 = vpop.permute.xlu0 %1295
    %1297 = vrot.lane.b32.xlu0 %v1107, 8
    %v1298 = vpop.permute.xlu0 %1297
    %1299 = vrot.lane.b32.xlu0 %v1108, 8
    %v1300 = vpop.permute.xlu0 %1299
    %vm1365 = vcmask 97344
    %1366 = vst.msk [vmem:[#allocation3] sm:$0xff] %vm1365, %v1174
    %1367 = vst.msk [vmem:[#allocation3 + $0x8] sm:$0xff] %vm1365, %v1176
    %1368 = vst.msk [vmem:[#allocation3 + $0x10] sm:$0xff] %vm1365, %v1178
    %1369 = vst.msk [vmem:[#allocation3 + $0x18] sm:$0xff] %vm1365, %v1180
    %1370 = vst.msk [vmem:[#allocation3 + $0x20] sm:$0xff] %vm1365, %v1182
    %1371 = vst.msk [vmem:[#allocation3 + $0x28] sm:$0xff] %vm1365, %v1184
    %1372 = vst.msk [vmem:[#allocation3 + $0x30] sm:$0xff] %vm1365, %v1186
    %1373 = vst.msk [vmem:[#allocation3 + $0x38] sm:$0xff] %vm1365, %v1188
    %1374 = vst.msk [vmem:[#allocation3 + $0x40] sm:$0xff] %vm1365, %v1190
    %1375 = vst.msk [vmem:[#allocation3 + $0x48] sm:$0xff] %vm1365, %v1192
    %1376 = vst.msk [vmem:[#allocation3 + $0x50] sm:$0xff] %vm1365, %v1194
    %1377 = vst.msk [vmem:[#allocation3 + $0x58] sm:$0xff] %vm1365, %v1196
    %1378 = vst.msk [vmem:[#allocation3 + $0x60] sm:$0xff] %vm1365, %v1198
    %1379 = vst.msk [vmem:[#allocation3 + $0x68] sm:$0xff] %vm1365, %v1200
    %1380 = vst.msk [vmem:[#allocation3 + $0x70] sm:$0xff] %vm1365, %v1202
    %1381 = vst.msk [vmem:[#allocation3 + $0x78] sm:$0xff] %vm1365, %v1204
    %1382 = vst.msk [vmem:[#allocation3 + $0x80] sm:$0xff] %vm1365, %v1206
    %1383 = vst.msk [vmem:[#allocation3 + $0x88] sm:$0xff] %vm1365, %v1208
    %1384 = vst.msk [vmem:[#allocation3 + $0x90] sm:$0xff] %vm1365, %v1210
    %1385 = vst.msk [vmem:[#allocation3 + $0x98] sm:$0xff] %vm1365, %v1212
    %1386 = vst.msk [vmem:[#allocation3 + $0xa0] sm:$0xff] %vm1365, %v1214
    %1387 = vst.msk [vmem:[#allocation3 + $0xa8] sm:$0xff] %vm1365, %v1216
    %1388 = vst.msk [vmem:[#allocation3 + $0xb0] sm:$0xff] %vm1365, %v1218
    %1389 = vst.msk [vmem:[#allocation3 + $0xb8] sm:$0xff] %vm1365, %v1220
    %1390 = vst.msk [vmem:[#allocation3 + $0xc0] sm:$0xff] %vm1365, %v1222
    %1391 = vst.msk [vmem:[#allocation3 + $0xc8] sm:$0xff] %vm1365, %v1224
    %1392 = vst.msk [vmem:[#allocation3 + $0xd0] sm:$0xff] %vm1365, %v1226
    %1393 = vst.msk [vmem:[#allocation3 + $0xd8] sm:$0xff] %vm1365, %v1228
    %1394 = vst.msk [vmem:[#allocation3 + $0xe0] sm:$0xff] %vm1365, %v1230
    %1395 = vst.msk [vmem:[#allocation3 + $0xe8] sm:$0xff] %vm1365, %v1232
    %1396 = vst.msk [vmem:[#allocation3 + $0xf0] sm:$0xff] %vm1365, %v1234
    %1397 = vst.msk [vmem:[#allocation3 + $0xf8] sm:$0xff] %vm1365, %v1236
    %1398 = vst.msk [vmem:[#allocation3 + $0x100] sm:$0xff] %vm1365, %v1238
    %1399 = vst.msk [vmem:[#allocation3 + $0x108] sm:$0xff] %vm1365, %v1240
    %1400 = vst.msk [vmem:[#allocation3 + $0x110] sm:$0xff] %vm1365, %v1242
    %1401 = vst.msk [vmem:[#allocation3 + $0x118] sm:$0xff] %vm1365, %v1244
    %1402 = vst.msk [vmem:[#allocation3 + $0x120] sm:$0xff] %vm1365, %v1246
    %1403 = vst.msk [vmem:[#allocation3 + $0x128] sm:$0xff] %vm1365, %v1248
    %1404 = vst.msk [vmem:[#allocation3 + $0x130] sm:$0xff] %vm1365, %v1250
    %1405 = vst.msk [vmem:[#allocation3 + $0x138] sm:$0xff] %vm1365, %v1252
    %1406 = vst.msk [vmem:[#allocation3 + $0x140] sm:$0xff] %vm1365, %v1254
    %1407 = vst.msk [vmem:[#allocation3 + $0x148] sm:$0xff] %vm1365, %v1256
    %1408 = vst.msk [vmem:[#allocation3 + $0x150] sm:$0xff] %vm1365, %v1258
    %1409 = vst.msk [vmem:[#allocation3 + $0x158] sm:$0xff] %vm1365, %v1260
    %1410 = vst.msk [vmem:[#allocation3 + $0x160] sm:$0xff] %vm1365, %v1262
    %1411 = vst.msk [vmem:[#allocation3 + $0x168] sm:$0xff] %vm1365, %v1264
    %1412 = vst.msk [vmem:[#allocation3 + $0x170] sm:$0xff] %vm1365, %v1266
    %1413 = vst.msk [vmem:[#allocation3 + $0x178] sm:$0xff] %vm1365, %v1268
    %1414 = vst.msk [vmem:[#allocation3 + $0x180] sm:$0xff] %vm1365, %v1270
    %1415 = vst.msk [vmem:[#allocation3 + $0x188] sm:$0xff] %vm1365, %v1272
    %1416 = vst.msk [vmem:[#allocation3 + $0x190] sm:$0xff] %vm1365, %v1274
    %1417 = vst.msk [vmem:[#allocation3 + $0x198] sm:$0xff] %vm1365, %v1276
    %1418 = vst.msk [vmem:[#allocation3 + $0x1a0] sm:$0xff] %vm1365, %v1278
    %1419 = vst.msk [vmem:[#allocation3 + $0x1a8] sm:$0xff] %vm1365, %v1280
    %1420 = vst.msk [vmem:[#allocation3 + $0x1b0] sm:$0xff] %vm1365, %v1282
    %1421 = vst.msk [vmem:[#allocation3 + $0x1b8] sm:$0xff] %vm1365, %v1284
    %1422 = vst.msk [vmem:[#allocation3 + $0x1c0] sm:$0xff] %vm1365, %v1286
    %1423 = vst.msk [vmem:[#allocation3 + $0x1c8] sm:$0xff] %vm1365, %v1288
    %1424 = vst.msk [vmem:[#allocation3 + $0x1d0] sm:$0xff] %vm1365, %v1290
    %1425 = vst.msk [vmem:[#allocation3 + $0x1d8] sm:$0xff] %vm1365, %v1292
    %1426 = vst.msk [vmem:[#allocation3 + $0x1e0] sm:$0xff] %vm1365, %v1294
    %1427 = vst.msk [vmem:[#allocation3 + $0x1e8] sm:$0xff] %vm1365, %v1296
    %1428 = vst.msk [vmem:[#allocation3 + $0x1f0] sm:$0xff] %vm1365, %v1298
    %1429 = vst.msk [vmem:[#allocation3 + $0x1f8] sm:$0xff] %vm1365, %v1300
    %s1430 = scalar_lea.vmem [#allocation4], 24
    %v1431 = vld [vmem:[%s1430] sm:$0xff]
    %v1432 = vld [vmem:[%s1430 + $0x8] sm:$0xff]
    %v1433 = vld [vmem:[%s1430 + $0x18] sm:$0xff]
    %v1434 = vld [vmem:[%s1430 + $0x20] sm:$0xff]
    %v1435 = vld [vmem:[%s1430 + $0x30] sm:$0xff]
    %v1436 = vld [vmem:[%s1430 + $0x38] sm:$0xff]
    %v1437 = vld [vmem:[%s1430 + $0x48] sm:$0xff]
    %v1438 = vld [vmem:[%s1430 + $0x50] sm:$0xff]
    %v1439 = vld [vmem:[%s1430 + $0x60] sm:$0xff]
    %v1440 = vld [vmem:[%s1430 + $0x68] sm:$0xff]
    %v1441 = vld [vmem:[%s1430 + $0x78] sm:$0xff]
    %v1442 = vld [vmem:[%s1430 + $0x80] sm:$0xff]
    %v1443 = vld [vmem:[%s1430 + $0x90] sm:$0xff]
    %v1444 = vld [vmem:[%s1430 + $0x98] sm:$0xff]
    %v1445 = vld [vmem:[%s1430 + $0xa8] sm:$0xff]
    %v1446 = vld [vmem:[%s1430 + $0xb0] sm:$0xff]
    %v1447 = vld [vmem:[%s1430 + $0xc0] sm:$0xff]
    %v1448 = vld [vmem:[%s1430 + $0xc8] sm:$0xff]
    %v1449 = vld [vmem:[%s1430 + $0xd8] sm:$0xff]
    %v1450 = vld [vmem:[%s1430 + $0xe0] sm:$0xff]
    %v1451 = vld [vmem:[%s1430 + $0xf0] sm:$0xff]
    %v1452 = vld [vmem:[%s1430 + $0xf8] sm:$0xff]
    %v1453 = vld [vmem:[%s1430 + $0x108] sm:$0xff]
    %v1454 = vld [vmem:[%s1430 + $0x110] sm:$0xff]
    %v1455 = vld [vmem:[%s1430 + $0x120] sm:$0xff]
    %v1456 = vld [vmem:[%s1430 + $0x128] sm:$0xff]
    %v1457 = vld [vmem:[%s1430 + $0x138] sm:$0xff]
    %v1458 = vld [vmem:[%s1430 + $0x140] sm:$0xff]
    %v1459 = vld [vmem:[%s1430 + $0x150] sm:$0xff]
    %v1460 = vld [vmem:[%s1430 + $0x158] sm:$0xff]
    %v1461 = vld [vmem:[%s1430 + $0x180] sm:$0xff]
    %v1462 = vld [vmem:[%s1430 + $0x188] sm:$0xff]
    %v1463 = vld [vmem:[%s1430 + $0x198] sm:$0xff]
    %v1464 = vld [vmem:[%s1430 + $0x1a0] sm:$0xff]
    %v1465 = vld [vmem:[%s1430 + $0x1b0] sm:$0xff]
    %v1466 = vld [vmem:[%s1430 + $0x1b8] sm:$0xff]
    %v1467 = vld [vmem:[%s1430 + $0x1c8] sm:$0xff]
    %v1468 = vld [vmem:[%s1430 + $0x1d0] sm:$0xff]
    %v1469 = vld [vmem:[%s1430 + $0x1e0] sm:$0xff]
    %v1470 = vld [vmem:[%s1430 + $0x1e8] sm:$0xff]
    %v1471 = vld [vmem:[%s1430 + $0x1f8] sm:$0xff]
    %v1472 = vld [vmem:[%s1430 + $0x200] sm:$0xff]
    %v1473 = vld [vmem:[%s1430 + $0x210] sm:$0xff]
    %v1474 = vld [vmem:[%s1430 + $0x218] sm:$0xff]
    %v1475 = vld [vmem:[%s1430 + $0x228] sm:$0xff]
    %v1476 = vld [vmem:[%s1430 + $0x230] sm:$0xff]
    %v1477 = vld [vmem:[%s1430 + $0x240] sm:$0xff]
    %v1478 = vld [vmem:[%s1430 + $0x248] sm:$0xff]
    %v1479 = vld [vmem:[%s1430 + $0x258] sm:$0xff]
    %v1480 = vld [vmem:[%s1430 + $0x260] sm:$0xff]
    %v1481 = vld [vmem:[%s1430 + $0x270] sm:$0xff]
    %v1482 = vld [vmem:[%s1430 + $0x278] sm:$0xff]
    %v1483 = vld [vmem:[%s1430 + $0x288] sm:$0xff]
    %v1484 = vld [vmem:[%s1430 + $0x290] sm:$0xff]
    %v1485 = vld [vmem:[%s1430 + $0x2a0] sm:$0xff]
    %v1486 = vld [vmem:[%s1430 + $0x2a8] sm:$0xff]
    %v1487 = vld [vmem:[%s1430 + $0x2b8] sm:$0xff]
    %v1488 = vld [vmem:[%s1430 + $0x2c0] sm:$0xff]
    %v1489 = vld [vmem:[%s1430 + $0x2d0] sm:$0xff]
    %v1490 = vld [vmem:[%s1430 + $0x2d8] sm:$0xff]
    %v1491 = vld [vmem:[#allocation5] sm:$0xff]
    %v1492 = vld [vmem:[#allocation5 + $0x8] sm:$0xff]
    %v1493 = vld [vmem:[#allocation5 + $0x30] sm:$0xff]
    %v1494 = vld [vmem:[#allocation5 + $0x38] sm:$0xff]
    %1559 = vrot.lane.b32.xlu0 %v1431, 12
    %v1560 = vpop.permute.xlu0 %1559
    %1561 = vrot.lane.b32.xlu0 %v1432, 12
    %v1562 = vpop.permute.xlu0 %1561
    %1563 = vrot.lane.b32.xlu0 %v1433, 12
    %v1564 = vpop.permute.xlu0 %1563
    %1565 = vrot.lane.b32.xlu0 %v1434, 12
    %v1566 = vpop.permute.xlu0 %1565
    %1567 = vrot.lane.b32.xlu0 %v1435, 12
    %v1568 = vpop.permute.xlu0 %1567
    %1569 = vrot.lane.b32.xlu0 %v1436, 12
    %v1570 = vpop.permute.xlu0 %1569
    %1571 = vrot.lane.b32.xlu0 %v1437, 12
    %v1572 = vpop.permute.xlu0 %1571
    %1573 = vrot.lane.b32.xlu0 %v1438, 12
    %v1574 = vpop.permute.xlu0 %1573
    %1575 = vrot.lane.b32.xlu0 %v1439, 12
    %v1576 = vpop.permute.xlu0 %1575
    %1577 = vrot.lane.b32.xlu0 %v1440, 12
    %v1578 = vpop.permute.xlu0 %1577
    %1579 = vrot.lane.b32.xlu0 %v1441, 12
    %v1580 = vpop.permute.xlu0 %1579
    %1581 = vrot.lane.b32.xlu0 %v1442, 12
    %v1582 = vpop.permute.xlu0 %1581
    %1583 = vrot.lane.b32.xlu0 %v1443, 12
    %v1584 = vpop.permute.xlu0 %1583
    %1585 = vrot.lane.b32.xlu0 %v1444, 12
    %v1586 = vpop.permute.xlu0 %1585
    %1587 = vrot.lane.b32.xlu0 %v1445, 12
    %v1588 = vpop.permute.xlu0 %1587
    %1589 = vrot.lane.b32.xlu0 %v1446, 12
    %v1590 = vpop.permute.xlu0 %1589
    %1591 = vrot.lane.b32.xlu0 %v1447, 12
    %v1592 = vpop.permute.xlu0 %1591
    %1593 = vrot.lane.b32.xlu0 %v1448, 12
    %v1594 = vpop.permute.xlu0 %1593
    %1595 = vrot.lane.b32.xlu0 %v1449, 12
    %v1596 = vpop.permute.xlu0 %1595
    %1597 = vrot.lane.b32.xlu0 %v1450, 12
    %v1598 = vpop.permute.xlu0 %1597
    %1599 = vrot.lane.b32.xlu0 %v1451, 12
    %v1600 = vpop.permute.xlu0 %1599
    %1601 = vrot.lane.b32.xlu0 %v1452, 12
    %v1602 = vpop.permute.xlu0 %1601
    %1603 = vrot.lane.b32.xlu0 %v1453, 12
    %v1604 = vpop.permute.xlu0 %1603
    %1605 = vrot.lane.b32.xlu0 %v1454, 12
    %v1606 = vpop.permute.xlu0 %1605
    %1607 = vrot.lane.b32.xlu0 %v1455, 12
    %v1608 = vpop.permute.xlu0 %1607
    %1609 = vrot.lane.b32.xlu0 %v1456, 12
    %v1610 = vpop.permute.xlu0 %1609
    %1611 = vrot.lane.b32.xlu0 %v1457, 12
    %v1612 = vpop.permute.xlu0 %1611
    %1613 = vrot.lane.b32.xlu0 %v1458, 12
    %v1614 = vpop.permute.xlu0 %1613
    %1615 = vrot.lane.b32.xlu0 %v1459, 12
    %v1616 = vpop.permute.xlu0 %1615
    %1617 = vrot.lane.b32.xlu0 %v1460, 12
    %v1618 = vpop.permute.xlu0 %1617
    %1619 = vrot.lane.b32.xlu0 %v1491, 12
    %v1620 = vpop.permute.xlu0 %1619
    %1621 = vrot.lane.b32.xlu0 %v1492, 12
    %v1622 = vpop.permute.xlu0 %1621
    %1623 = vrot.lane.b32.xlu0 %v1461, 12
    %v1624 = vpop.permute.xlu0 %1623
    %1625 = vrot.lane.b32.xlu0 %v1462, 12
    %v1626 = vpop.permute.xlu0 %1625
    %1627 = vrot.lane.b32.xlu0 %v1463, 12
    %v1628 = vpop.permute.xlu0 %1627
    %1629 = vrot.lane.b32.xlu0 %v1464, 12
    %v1630 = vpop.permute.xlu0 %1629
    %1631 = vrot.lane.b32.xlu0 %v1465, 12
    %v1632 = vpop.permute.xlu0 %1631
    %1633 = vrot.lane.b32.xlu0 %v1466, 12
    %v1634 = vpop.permute.xlu0 %1633
    %1635 = vrot.lane.b32.xlu0 %v1467, 12
    %v1636 = vpop.permute.xlu0 %1635
    %1637 = vrot.lane.b32.xlu0 %v1468, 12
    %v1638 = vpop.permute.xlu0 %1637
    %1639 = vrot.lane.b32.xlu0 %v1469, 12
    %v1640 = vpop.permute.xlu0 %1639
    %1641 = vrot.lane.b32.xlu0 %v1470, 12
    %v1642 = vpop.permute.xlu0 %1641
    %1643 = vrot.lane.b32.xlu0 %v1471, 12
    %v1644 = vpop.permute.xlu0 %1643
    %1645 = vrot.lane.b32.xlu0 %v1472, 12
    %v1646 = vpop.permute.xlu0 %1645
    %1647 = vrot.lane.b32.xlu0 %v1473, 12
    %v1648 = vpop.permute.xlu0 %1647
    %1649 = vrot.lane.b32.xlu0 %v1474, 12
    %v1650 = vpop.permute.xlu0 %1649
    %1651 = vrot.lane.b32.xlu0 %v1475, 12
    %v1652 = vpop.permute.xlu0 %1651
    %1653 = vrot.lane.b32.xlu0 %v1476, 12
    %v1654 = vpop.permute.xlu0 %1653
    %1655 = vrot.lane.b32.xlu0 %v1477, 12
    %v1656 = vpop.permute.xlu0 %1655
    %1657 = vrot.lane.b32.xlu0 %v1478, 12
    %v1658 = vpop.permute.xlu0 %1657
    %1659 = vrot.lane.b32.xlu0 %v1479, 12
    %v1660 = vpop.permute.xlu0 %1659
    %1661 = vrot.lane.b32.xlu0 %v1480, 12
    %v1662 = vpop.permute.xlu0 %1661
    %1663 = vrot.lane.b32.xlu0 %v1481, 12
    %v1664 = vpop.permute.xlu0 %1663
    %1665 = vrot.lane.b32.xlu0 %v1482, 12
    %v1666 = vpop.permute.xlu0 %1665
    %1667 = vrot.lane.b32.xlu0 %v1483, 12
    %v1668 = vpop.permute.xlu0 %1667
    %1669 = vrot.lane.b32.xlu0 %v1484, 12
    %v1670 = vpop.permute.xlu0 %1669
    %1671 = vrot.lane.b32.xlu0 %v1485, 12
    %v1672 = vpop.permute.xlu0 %1671
    %1673 = vrot.lane.b32.xlu0 %v1486, 12
    %v1674 = vpop.permute.xlu0 %1673
    %1675 = vrot.lane.b32.xlu0 %v1487, 12
    %v1676 = vpop.permute.xlu0 %1675
    %1677 = vrot.lane.b32.xlu0 %v1488, 12
    %v1678 = vpop.permute.xlu0 %1677
    %1679 = vrot.lane.b32.xlu0 %v1489, 12
    %v1680 = vpop.permute.xlu0 %1679
    %1681 = vrot.lane.b32.xlu0 %v1490, 12
    %v1682 = vpop.permute.xlu0 %1681
    %1683 = vrot.lane.b32.xlu0 %v1493, 12
    %v1684 = vpop.permute.xlu0 %1683
    %1685 = vrot.lane.b32.xlu0 %v1494, 12
    %v1686 = vpop.permute.xlu0 %1685
    %vm1751 = vcmask 130144
    %1752 = vst.msk [vmem:[#allocation3] sm:$0xff] %vm1751, %v1560
    %1753 = vst.msk [vmem:[#allocation3 + $0x8] sm:$0xff] %vm1751, %v1562
    %1754 = vst.msk [vmem:[#allocation3 + $0x10] sm:$0xff] %vm1751, %v1564
    %1755 = vst.msk [vmem:[#allocation3 + $0x18] sm:$0xff] %vm1751, %v1566
    %1756 = vst.msk [vmem:[#allocation3 + $0x20] sm:$0xff] %vm1751, %v1568
    %1757 = vst.msk [vmem:[#allocation3 + $0x28] sm:$0xff] %vm1751, %v1570
    %1758 = vst.msk [vmem:[#allocation3 + $0x30] sm:$0xff] %vm1751, %v1572
    %1759 = vst.msk [vmem:[#allocation3 + $0x38] sm:$0xff] %vm1751, %v1574
    %1760 = vst.msk [vmem:[#allocation3 + $0x40] sm:$0xff] %vm1751, %v1576
    %1761 = vst.msk [vmem:[#allocation3 + $0x48] sm:$0xff] %vm1751, %v1578
    %1762 = vst.msk [vmem:[#allocation3 + $0x50] sm:$0xff] %vm1751, %v1580
    %1763 = vst.msk [vmem:[#allocation3 + $0x58] sm:$0xff] %vm1751, %v1582
    %1764 = vst.msk [vmem:[#allocation3 + $0x60] sm:$0xff] %vm1751, %v1584
    %1765 = vst.msk [vmem:[#allocation3 + $0x68] sm:$0xff] %vm1751, %v1586
    %1766 = vst.msk [vmem:[#allocation3 + $0x70] sm:$0xff] %vm1751, %v1588
    %1767 = vst.msk [vmem:[#allocation3 + $0x78] sm:$0xff] %vm1751, %v1590
    %1768 = vst.msk [vmem:[#allocation3 + $0x80] sm:$0xff] %vm1751, %v1592
    %1769 = vst.msk [vmem:[#allocation3 + $0x88] sm:$0xff] %vm1751, %v1594
    %1770 = vst.msk [vmem:[#allocation3 + $0x90] sm:$0xff] %vm1751, %v1596
    %1771 = vst.msk [vmem:[#allocation3 + $0x98] sm:$0xff] %vm1751, %v1598
    %1772 = vst.msk [vmem:[#allocation3 + $0xa0] sm:$0xff] %vm1751, %v1600
    %1773 = vst.msk [vmem:[#allocation3 + $0xa8] sm:$0xff] %vm1751, %v1602
    %1774 = vst.msk [vmem:[#allocation3 + $0xb0] sm:$0xff] %vm1751, %v1604
    %1775 = vst.msk [vmem:[#allocation3 + $0xb8] sm:$0xff] %vm1751, %v1606
    %1776 = vst.msk [vmem:[#allocation3 + $0xc0] sm:$0xff] %vm1751, %v1608
    %1777 = vst.msk [vmem:[#allocation3 + $0xc8] sm:$0xff] %vm1751, %v1610
    %1778 = vst.msk [vmem:[#allocation3 + $0xd0] sm:$0xff] %vm1751, %v1612
    %1779 = vst.msk [vmem:[#allocation3 + $0xd8] sm:$0xff] %vm1751, %v1614
    %1780 = vst.msk [vmem:[#allocation3 + $0xe0] sm:$0xff] %vm1751, %v1616
    %1781 = vst.msk [vmem:[#allocation3 + $0xe8] sm:$0xff] %vm1751, %v1618
    %1782 = vst.msk [vmem:[#allocation3 + $0xf0] sm:$0xff] %vm1751, %v1620
    %1783 = vst.msk [vmem:[#allocation3 + $0xf8] sm:$0xff] %vm1751, %v1622
    %1784 = vst.msk [vmem:[#allocation3 + $0x100] sm:$0xff] %vm1751, %v1624
    %1785 = vst.msk [vmem:[#allocation3 + $0x108] sm:$0xff] %vm1751, %v1626
    %1786 = vst.msk [vmem:[#allocation3 + $0x110] sm:$0xff] %vm1751, %v1628
    %1787 = vst.msk [vmem:[#allocation3 + $0x118] sm:$0xff] %vm1751, %v1630
    %1788 = vst.msk [vmem:[#allocation3 + $0x120] sm:$0xff] %vm1751, %v1632
    %1789 = vst.msk [vmem:[#allocation3 + $0x128] sm:$0xff] %vm1751, %v1634
    %1790 = vst.msk [vmem:[#allocation3 + $0x130] sm:$0xff] %vm1751, %v1636
    %1791 = vst.msk [vmem:[#allocation3 + $0x138] sm:$0xff] %vm1751, %v1638
    %1792 = vst.msk [vmem:[#allocation3 + $0x140] sm:$0xff] %vm1751, %v1640
    %1793 = vst.msk [vmem:[#allocation3 + $0x148] sm:$0xff] %vm1751, %v1642
    %1794 = vst.msk [vmem:[#allocation3 + $0x150] sm:$0xff] %vm1751, %v1644
    %1795 = vst.msk [vmem:[#allocation3 + $0x158] sm:$0xff] %vm1751, %v1646
    %1796 = vst.msk [vmem:[#allocation3 + $0x160] sm:$0xff] %vm1751, %v1648
    %1797 = vst.msk [vmem:[#allocation3 + $0x168] sm:$0xff] %vm1751, %v1650
    %1798 = vst.msk [vmem:[#allocation3 + $0x170] sm:$0xff] %vm1751, %v1652
    %1799 = vst.msk [vmem:[#allocation3 + $0x178] sm:$0xff] %vm1751, %v1654
    %1800 = vst.msk [vmem:[#allocation3 + $0x180] sm:$0xff] %vm1751, %v1656
    %1801 = vst.msk [vmem:[#allocation3 + $0x188] sm:$0xff] %vm1751, %v1658
    %1802 = vst.msk [vmem:[#allocation3 + $0x190] sm:$0xff] %vm1751, %v1660
    %1803 = vst.msk [vmem:[#allocation3 + $0x198] sm:$0xff] %vm1751, %v1662
    %1804 = vst.msk [vmem:[#allocation3 + $0x1a0] sm:$0xff] %vm1751, %v1664
    %1805 = vst.msk [vmem:[#allocation3 + $0x1a8] sm:$0xff] %vm1751, %v1666
    %1806 = vst.msk [vmem:[#allocation3 + $0x1b0] sm:$0xff] %vm1751, %v1668
    %1807 = vst.msk [vmem:[#allocation3 + $0x1b8] sm:$0xff] %vm1751, %v1670
    %1808 = vst.msk [vmem:[#allocation3 + $0x1c0] sm:$0xff] %vm1751, %v1672
    %1809 = vst.msk [vmem:[#allocation3 + $0x1c8] sm:$0xff] %vm1751, %v1674
    %1810 = vst.msk [vmem:[#allocation3 + $0x1d0] sm:$0xff] %vm1751, %v1676
    %1811 = vst.msk [vmem:[#allocation3 + $0x1d8] sm:$0xff] %vm1751, %v1678
    %1812 = vst.msk [vmem:[#allocation3 + $0x1e0] sm:$0xff] %vm1751, %v1680
    %1813 = vst.msk [vmem:[#allocation3 + $0x1e8] sm:$0xff] %vm1751, %v1682
    %1814 = vst.msk [vmem:[#allocation3 + $0x1f0] sm:$0xff] %vm1751, %v1684
    %1815 = vst.msk [vmem:[#allocation3 + $0x1f8] sm:$0xff] %vm1751, %v1686
    %v1816 = vld [vmem:[%s1430 + $0x1] sm:$0xff]
    %v1817 = vld [vmem:[%s1430 + $0x9] sm:$0xff]
    %v1818 = vld [vmem:[%s1430 + $0x19] sm:$0xff]
    %v1819 = vld [vmem:[%s1430 + $0x21] sm:$0xff]
    %v1820 = vld [vmem:[%s1430 + $0x31] sm:$0xff]
    %v1821 = vld [vmem:[%s1430 + $0x39] sm:$0xff]
    %v1822 = vld [vmem:[%s1430 + $0x49] sm:$0xff]
    %v1823 = vld [vmem:[%s1430 + $0x51] sm:$0xff]
    %v1824 = vld [vmem:[%s1430 + $0x61] sm:$0xff]
    %v1825 = vld [vmem:[%s1430 + $0x69] sm:$0xff]
    %v1826 = vld [vmem:[%s1430 + $0x79] sm:$0xff]
    %v1827 = vld [vmem:[%s1430 + $0x81] sm:$0xff]
    %v1828 = vld [vmem:[%s1430 + $0x91] sm:$0xff]
    %v1829 = vld [vmem:[%s1430 + $0x99] sm:$0xff]
    %v1830 = vld [vmem:[%s1430 + $0xa9] sm:$0xff]
    %v1831 = vld [vmem:[%s1430 + $0xb1] sm:$0xff]
    %v1832 = vld [vmem:[%s1430 + $0xc1] sm:$0xff]
    %v1833 = vld [vmem:[%s1430 + $0xc9] sm:$0xff]
    %v1834 = vld [vmem:[%s1430 + $0xd9] sm:$0xff]
    %v1835 = vld [vmem:[%s1430 + $0xe1] sm:$0xff]
    %v1836 = vld [vmem:[%s1430 + $0xf1] sm:$0xff]
    %v1837 = vld [vmem:[%s1430 + $0xf9] sm:$0xff]
    %v1838 = vld [vmem:[%s1430 + $0x109] sm:$0xff]
    %v1839 = vld [vmem:[%s1430 + $0x111] sm:$0xff]
    %v1840 = vld [vmem:[%s1430 + $0x121] sm:$0xff]
    %v1841 = vld [vmem:[%s1430 + $0x129] sm:$0xff]
    %v1842 = vld [vmem:[%s1430 + $0x139] sm:$0xff]
    %v1843 = vld [vmem:[%s1430 + $0x141] sm:$0xff]
    %v1844 = vld [vmem:[%s1430 + $0x151] sm:$0xff]
    %v1845 = vld [vmem:[%s1430 + $0x159] sm:$0xff]
    %v1846 = vld [vmem:[%s1430 + $0x181] sm:$0xff]
    %v1847 = vld [vmem:[%s1430 + $0x189] sm:$0xff]
    %v1848 = vld [vmem:[%s1430 + $0x199] sm:$0xff]
    %v1849 = vld [vmem:[%s1430 + $0x1a1] sm:$0xff]
    %v1850 = vld [vmem:[%s1430 + $0x1b1] sm:$0xff]
    %v1851 = vld [vmem:[%s1430 + $0x1b9] sm:$0xff]
    %v1852 = vld [vmem:[%s1430 + $0x1c9] sm:$0xff]
    %v1853 = vld [vmem:[%s1430 + $0x1d1] sm:$0xff]
    %v1854 = vld [vmem:[%s1430 + $0x1e1] sm:$0xff]
    %v1855 = vld [vmem:[%s1430 + $0x1e9] sm:$0xff]
    %v1856 = vld [vmem:[%s1430 + $0x1f9] sm:$0xff]
    %v1857 = vld [vmem:[%s1430 + $0x201] sm:$0xff]
    %v1858 = vld [vmem:[%s1430 + $0x211] sm:$0xff]
    %v1859 = vld [vmem:[%s1430 + $0x219] sm:$0xff]
    %v1860 = vld [vmem:[%s1430 + $0x229] sm:$0xff]
    %v1861 = vld [vmem:[%s1430 + $0x231] sm:$0xff]
    %v1862 = vld [vmem:[%s1430 + $0x241] sm:$0xff]
    %v1863 = vld [vmem:[%s1430 + $0x249] sm:$0xff]
    %v1864 = vld [vmem:[%s1430 + $0x259] sm:$0xff]
    %v1865 = vld [vmem:[%s1430 + $0x261] sm:$0xff]
    %v1866 = vld [vmem:[%s1430 + $0x271] sm:$0xff]
    %v1867 = vld [vmem:[%s1430 + $0x279] sm:$0xff]
    %v1868 = vld [vmem:[%s1430 + $0x289] sm:$0xff]
    %v1869 = vld [vmem:[%s1430 + $0x291] sm:$0xff]
    %v1870 = vld [vmem:[%s1430 + $0x2a1] sm:$0xff]
    %v1871 = vld [vmem:[%s1430 + $0x2a9] sm:$0xff]
    %v1872 = vld [vmem:[%s1430 + $0x2b9] sm:$0xff]
    %v1873 = vld [vmem:[%s1430 + $0x2c1] sm:$0xff]
    %v1874 = vld [vmem:[%s1430 + $0x2d1] sm:$0xff]
    %v1875 = vld [vmem:[%s1430 + $0x2d9] sm:$0xff]
    %v1876 = vld [vmem:[#allocation5 + $0x1] sm:$0xff]
    %v1877 = vld [vmem:[#allocation5 + $0x9] sm:$0xff]
    %v1878 = vld [vmem:[#allocation5 + $0x31] sm:$0xff]
    %v1879 = vld [vmem:[#allocation5 + $0x39] sm:$0xff]
    %1944 = vrot.lane.b32.xlu0 %v1816, 16
    %v1945 = vpop.permute.xlu0 %1944
    %1946 = vrot.lane.b32.xlu0 %v1817, 16
    %v1947 = vpop.permute.xlu0 %1946
    %1948 = vrot.lane.b32.xlu0 %v1818, 16
    %v1949 = vpop.permute.xlu0 %1948
    %1950 = vrot.lane.b32.xlu0 %v1819, 16
    %v1951 = vpop.permute.xlu0 %1950
    %1952 = vrot.lane.b32.xlu0 %v1820, 16
    %v1953 = vpop.permute.xlu0 %1952
    %1954 = vrot.lane.b32.xlu0 %v1821, 16
    %v1955 = vpop.permute.xlu0 %1954
    %1956 = vrot.lane.b32.xlu0 %v1822, 16
    %v1957 = vpop.permute.xlu0 %1956
    %1958 = vrot.lane.b32.xlu0 %v1823, 16
    %v1959 = vpop.permute.xlu0 %1958
    %1960 = vrot.lane.b32.xlu0 %v1824, 16
    %v1961 = vpop.permute.xlu0 %1960
    %1962 = vrot.lane.b32.xlu0 %v1825, 16
    %v1963 = vpop.permute.xlu0 %1962
    %1964 = vrot.lane.b32.xlu0 %v1826, 16
    %v1965 = vpop.permute.xlu0 %1964
    %1966 = vrot.lane.b32.xlu0 %v1827, 16
    %v1967 = vpop.permute.xlu0 %1966
    %1968 = vrot.lane.b32.xlu0 %v1828, 16
    %v1969 = vpop.permute.xlu0 %1968
    %1970 = vrot.lane.b32.xlu0 %v1829, 16
    %v1971 = vpop.permute.xlu0 %1970
    %1972 = vrot.lane.b32.xlu0 %v1830, 16
    %v1973 = vpop.permute.xlu0 %1972
    %1974 = vrot.lane.b32.xlu0 %v1831, 16
    %v1975 = vpop.permute.xlu0 %1974
    %1976 = vrot.lane.b32.xlu0 %v1832, 16
    %v1977 = vpop.permute.xlu0 %1976
    %1978 = vrot.lane.b32.xlu0 %v1833, 16
    %v1979 = vpop.permute.xlu0 %1978
    %1980 = vrot.lane.b32.xlu0 %v1834, 16
    %v1981 = vpop.permute.xlu0 %1980
    %1982 = vrot.lane.b32.xlu0 %v1835, 16
    %v1983 = vpop.permute.xlu0 %1982
    %1984 = vrot.lane.b32.xlu0 %v1836, 16
    %v1985 = vpop.permute.xlu0 %1984
    %1986 = vrot.lane.b32.xlu0 %v1837, 16
    %v1987 = vpop.permute.xlu0 %1986
    %1988 = vrot.lane.b32.xlu0 %v1838, 16
    %v1989 = vpop.permute.xlu0 %1988
    %1990 = vrot.lane.b32.xlu0 %v1839, 16
    %v1991 = vpop.permute.xlu0 %1990
    %1992 = vrot.lane.b32.xlu0 %v1840, 16
    %v1993 = vpop.permute.xlu0 %1992
    %1994 = vrot.lane.b32.xlu0 %v1841, 16
    %v1995 = vpop.permute.xlu0 %1994
    %1996 = vrot.lane.b32.xlu0 %v1842, 16
    %v1997 = vpop.permute.xlu0 %1996
    %1998 = vrot.lane.b32.xlu0 %v1843, 16
    %v1999 = vpop.permute.xlu0 %1998
    %2000 = vrot.lane.b32.xlu0 %v1844, 16
    %v2001 = vpop.permute.xlu0 %2000
    %2002 = vrot.lane.b32.xlu0 %v1845, 16
    %v2003 = vpop.permute.xlu0 %2002
    %2004 = vrot.lane.b32.xlu0 %v1876, 16
    %v2005 = vpop.permute.xlu0 %2004
    %2006 = vrot.lane.b32.xlu0 %v1877, 16
    %v2007 = vpop.permute.xlu0 %2006
    %2008 = vrot.lane.b32.xlu0 %v1846, 16
    %v2009 = vpop.permute.xlu0 %2008
    %2010 = vrot.lane.b32.xlu0 %v1847, 16
    %v2011 = vpop.permute.xlu0 %2010
    %2012 = vrot.lane.b32.xlu0 %v1848, 16
    %v2013 = vpop.permute.xlu0 %2012
    %2014 = vrot.lane.b32.xlu0 %v1849, 16
    %v2015 = vpop.permute.xlu0 %2014
    %2016 = vrot.lane.b32.xlu0 %v1850, 16
    %v2017 = vpop.permute.xlu0 %2016
    %2018 = vrot.lane.b32.xlu0 %v1851, 16
    %v2019 = vpop.permute.xlu0 %2018
    %2020 = vrot.lane.b32.xlu0 %v1852, 16
    %v2021 = vpop.permute.xlu0 %2020
    %2022 = vrot.lane.b32.xlu0 %v1853, 16
    %v2023 = vpop.permute.xlu0 %2022
    %2024 = vrot.lane.b32.xlu0 %v1854, 16
    %v2025 = vpop.permute.xlu0 %2024
    %2026 = vrot.lane.b32.xlu0 %v1855, 16
    %v2027 = vpop.permute.xlu0 %2026
    %2028 = vrot.lane.b32.xlu0 %v1856, 16
    %v2029 = vpop.permute.xlu0 %2028
    %2030 = vrot.lane.b32.xlu0 %v1857, 16
    %v2031 = vpop.permute.xlu0 %2030
    %2032 = vrot.lane.b32.xlu0 %v1858, 16
    %v2033 = vpop.permute.xlu0 %2032
    %2034 = vrot.lane.b32.xlu0 %v1859, 16
    %v2035 = vpop.permute.xlu0 %2034
    %2036 = vrot.lane.b32.xlu0 %v1860, 16
    %v2037 = vpop.permute.xlu0 %2036
    %2038 = vrot.lane.b32.xlu0 %v1861, 16
    %v2039 = vpop.permute.xlu0 %2038
    %2040 = vrot.lane.b32.xlu0 %v1862, 16
    %v2041 = vpop.permute.xlu0 %2040
    %2042 = vrot.lane.b32.xlu0 %v1863, 16
    %v2043 = vpop.permute.xlu0 %2042
    %2044 = vrot.lane.b32.xlu0 %v1864, 16
    %v2045 = vpop.permute.xlu0 %2044
    %2046 = vrot.lane.b32.xlu0 %v1865, 16
    %v2047 = vpop.permute.xlu0 %2046
    %2048 = vrot.lane.b32.xlu0 %v1866, 16
    %v2049 = vpop.permute.xlu0 %2048
    %2050 = vrot.lane.b32.xlu0 %v1867, 16
    %v2051 = vpop.permute.xlu0 %2050
    %2052 = vrot.lane.b32.xlu0 %v1868, 16
    %v2053 = vpop.permute.xlu0 %2052
    %2054 = vrot.lane.b32.xlu0 %v1869, 16
    %v2055 = vpop.permute.xlu0 %2054
    %2056 = vrot.lane.b32.xlu0 %v1870, 16
    %v2057 = vpop.permute.xlu0 %2056
    %2058 = vrot.lane.b32.xlu0 %v1871, 16
    %v2059 = vpop.permute.xlu0 %2058
    %2060 = vrot.lane.b32.xlu0 %v1872, 16
    %v2061 = vpop.permute.xlu0 %2060
    %2062 = vrot.lane.b32.xlu0 %v1873, 16
    %v2063 = vpop.permute.xlu0 %2062
    %2064 = vrot.lane.b32.xlu0 %v1874, 16
    %v2065 = vpop.permute.xlu0 %2064
    %2066 = vrot.lane.b32.xlu0 %v1875, 16
    %v2067 = vpop.permute.xlu0 %2066
    %2068 = vrot.lane.b32.xlu0 %v1878, 16
    %v2069 = vpop.permute.xlu0 %2068
    %2070 = vrot.lane.b32.xlu0 %v1879, 16
    %v2071 = vpop.permute.xlu0 %2070
    %vm2136 = vcmask 162944
    %2137 = vst.msk [vmem:[#allocation3] sm:$0xff] %vm2136, %v1945
    %2138 = vst.msk [vmem:[#allocation3 + $0x8] sm:$0xff] %vm2136, %v1947
    %2139 = vst.msk [vmem:[#allocation3 + $0x10] sm:$0xff] %vm2136, %v1949
    %2140 = vst.msk [vmem:[#allocation3 + $0x18] sm:$0xff] %vm2136, %v1951
    %2141 = vst.msk [vmem:[#allocation3 + $0x20] sm:$0xff] %vm2136, %v1953
    %2142 = vst.msk [vmem:[#allocation3 + $0x28] sm:$0xff] %vm2136, %v1955
    %2143 = vst.msk [vmem:[#allocation3 + $0x30] sm:$0xff] %vm2136, %v1957
    %2144 = vst.msk [vmem:[#allocation3 + $0x38] sm:$0xff] %vm2136, %v1959
    %2145 = vst.msk [vmem:[#allocation3 + $0x40] sm:$0xff] %vm2136, %v1961
    %2146 = vst.msk [vmem:[#allocation3 + $0x48] sm:$0xff] %vm2136, %v1963
    %2147 = vst.msk [vmem:[#allocation3 + $0x50] sm:$0xff] %vm2136, %v1965
    %2148 = vst.msk [vmem:[#allocation3 + $0x58] sm:$0xff] %vm2136, %v1967
    %2149 = vst.msk [vmem:[#allocation3 + $0x60] sm:$0xff] %vm2136, %v1969
    %2150 = vst.msk [vmem:[#allocation3 + $0x68] sm:$0xff] %vm2136, %v1971
    %2151 = vst.msk [vmem:[#allocation3 + $0x70] sm:$0xff] %vm2136, %v1973
    %2152 = vst.msk [vmem:[#allocation3 + $0x78] sm:$0xff] %vm2136, %v1975
    %2153 = vst.msk [vmem:[#allocation3 + $0x80] sm:$0xff] %vm2136, %v1977
    %2154 = vst.msk [vmem:[#allocation3 + $0x88] sm:$0xff] %vm2136, %v1979
    %2155 = vst.msk [vmem:[#allocation3 + $0x90] sm:$0xff] %vm2136, %v1981
    %2156 = vst.msk [vmem:[#allocation3 + $0x98] sm:$0xff] %vm2136, %v1983
    %2157 = vst.msk [vmem:[#allocation3 + $0xa0] sm:$0xff] %vm2136, %v1985
    %2158 = vst.msk [vmem:[#allocation3 + $0xa8] sm:$0xff] %vm2136, %v1987
    %2159 = vst.msk [vmem:[#allocation3 + $0xb0] sm:$0xff] %vm2136, %v1989
    %2160 = vst.msk [vmem:[#allocation3 + $0xb8] sm:$0xff] %vm2136, %v1991
    %2161 = vst.msk [vmem:[#allocation3 + $0xc0] sm:$0xff] %vm2136, %v1993
    %2162 = vst.msk [vmem:[#allocation3 + $0xc8] sm:$0xff] %vm2136, %v1995
    %2163 = vst.msk [vmem:[#allocation3 + $0xd0] sm:$0xff] %vm2136, %v1997
    %2164 = vst.msk [vmem:[#allocation3 + $0xd8] sm:$0xff] %vm2136, %v1999
    %2165 = vst.msk [vmem:[#allocation3 + $0xe0] sm:$0xff] %vm2136, %v2001
    %2166 = vst.msk [vmem:[#allocation3 + $0xe8] sm:$0xff] %vm2136, %v2003
    %2167 = vst.msk [vmem:[#allocation3 + $0xf0] sm:$0xff] %vm2136, %v2005
    %2168 = vst.msk [vmem:[#allocation3 + $0xf8] sm:$0xff] %vm2136, %v2007
    %2169 = vst.msk [vmem:[#allocation3 + $0x100] sm:$0xff] %vm2136, %v2009
    %2170 = vst.msk [vmem:[#allocation3 + $0x108] sm:$0xff] %vm2136, %v2011
    %2171 = vst.msk [vmem:[#allocation3 + $0x110] sm:$0xff] %vm2136, %v2013
    %2172 = vst.msk [vmem:[#allocation3 + $0x118] sm:$0xff] %vm2136, %v2015
    %2173 = vst.msk [vmem:[#allocation3 + $0x120] sm:$0xff] %vm2136, %v2017
    %2174 = vst.msk [vmem:[#allocation3 + $0x128] sm:$0xff] %vm2136, %v2019
    %2175 = vst.msk [vmem:[#allocation3 + $0x130] sm:$0xff] %vm2136, %v2021
    %2176 = vst.msk [vmem:[#allocation3 + $0x138] sm:$0xff] %vm2136, %v2023
    %2177 = vst.msk [vmem:[#allocation3 + $0x140] sm:$0xff] %vm2136, %v2025
    %2178 = vst.msk [vmem:[#allocation3 + $0x148] sm:$0xff] %vm2136, %v2027
    %2179 = vst.msk [vmem:[#allocation3 + $0x150] sm:$0xff] %vm2136, %v2029
    %2180 = vst.msk [vmem:[#allocation3 + $0x158] sm:$0xff] %vm2136, %v2031
    %2181 = vst.msk [vmem:[#allocation3 + $0x160] sm:$0xff] %vm2136, %v2033
    %2182 = vst.msk [vmem:[#allocation3 + $0x168] sm:$0xff] %vm2136, %v2035
    %2183 = vst.msk [vmem:[#allocation3 + $0x170] sm:$0xff] %vm2136, %v2037
    %2184 = vst.msk [vmem:[#allocation3 + $0x178] sm:$0xff] %vm2136, %v2039
    %2185 = vst.msk [vmem:[#allocation3 + $0x180] sm:$0xff] %vm2136, %v2041
    %2186 = vst.msk [vmem:[#allocation3 + $0x188] sm:$0xff] %vm2136, %v2043
    %2187 = vst.msk [vmem:[#allocation3 + $0x190] sm:$0xff] %vm2136, %v2045
    %2188 = vst.msk [vmem:[#allocation3 + $0x198] sm:$0xff] %vm2136, %v2047
    %2189 = vst.msk [vmem:[#allocation3 + $0x1a0] sm:$0xff] %vm2136, %v2049
    %2190 = vst.msk [vmem:[#allocation3 + $0x1a8] sm:$0xff] %vm2136, %v2051
    %2191 = vst.msk [vmem:[#allocation3 + $0x1b0] sm:$0xff] %vm2136, %v2053
    %2192 = vst.msk [vmem:[#allocation3 + $0x1b8] sm:$0xff] %vm2136, %v2055
    %2193 = vst.msk [vmem:[#allocation3 + $0x1c0] sm:$0xff] %vm2136, %v2057
    %2194 = vst.msk [vmem:[#allocation3 + $0x1c8] sm:$0xff] %vm2136, %v2059
    %2195 = vst.msk [vmem:[#allocation3 + $0x1d0] sm:$0xff] %vm2136, %v2061
    %2196 = vst.msk [vmem:[#allocation3 + $0x1d8] sm:$0xff] %vm2136, %v2063
    %2197 = vst.msk [vmem:[#allocation3 + $0x1e0] sm:$0xff] %vm2136, %v2065
    %2198 = vst.msk [vmem:[#allocation3 + $0x1e8] sm:$0xff] %vm2136, %v2067
    %2199 = vst.msk [vmem:[#allocation3 + $0x1f0] sm:$0xff] %vm2136, %v2069
    %2200 = vst.msk [vmem:[#allocation3 + $0x1f8] sm:$0xff] %vm2136, %v2071
    %v2201 = vld [vmem:[%s1430 + $0x2] sm:$0xff]
    %v2202 = vld [vmem:[%s1430 + $0xa] sm:$0xff]
    %v2203 = vld [vmem:[%s1430 + $0x1a] sm:$0xff]
    %v2204 = vld [vmem:[%s1430 + $0x22] sm:$0xff]
    %v2205 = vld [vmem:[%s1430 + $0x32] sm:$0xff]
    %v2206 = vld [vmem:[%s1430 + $0x3a] sm:$0xff]
    %v2207 = vld [vmem:[%s1430 + $0x4a] sm:$0xff]
    %v2208 = vld [vmem:[%s1430 + $0x52] sm:$0xff]
    %v2209 = vld [vmem:[%s1430 + $0x62] sm:$0xff]
    %v2210 = vld [vmem:[%s1430 + $0x6a] sm:$0xff]
    %v2211 = vld [vmem:[%s1430 + $0x7a] sm:$0xff]
    %v2212 = vld [vmem:[%s1430 + $0x82] sm:$0xff]
    %v2213 = vld [vmem:[%s1430 + $0x92] sm:$0xff]
    %v2214 = vld [vmem:[%s1430 + $0x9a] sm:$0xff]
    %v2215 = vld [vmem:[%s1430 + $0xaa] sm:$0xff]
    %v2216 = vld [vmem:[%s1430 + $0xb2] sm:$0xff]
    %v2217 = vld [vmem:[%s1430 + $0xc2] sm:$0xff]
    %v2218 = vld [vmem:[%s1430 + $0xca] sm:$0xff]
    %v2219 = vld [vmem:[%s1430 + $0xda] sm:$0xff]
    %v2220 = vld [vmem:[%s1430 + $0xe2] sm:$0xff]
    %v2221 = vld [vmem:[%s1430 + $0xf2] sm:$0xff]
    %v2222 = vld [vmem:[%s1430 + $0xfa] sm:$0xff]
    %v2223 = vld [vmem:[%s1430 + $0x10a] sm:$0xff]
    %v2224 = vld [vmem:[%s1430 + $0x112] sm:$0xff]
    %v2225 = vld [vmem:[%s1430 + $0x122] sm:$0xff]
    %v2226 = vld [vmem:[%s1430 + $0x12a] sm:$0xff]
    %v2227 = vld [vmem:[%s1430 + $0x13a] sm:$0xff]
    %v2228 = vld [vmem:[%s1430 + $0x142] sm:$0xff]
    %v2229 = vld [vmem:[%s1430 + $0x152] sm:$0xff]
    %v2230 = vld [vmem:[%s1430 + $0x15a] sm:$0xff]
    %v2231 = vld [vmem:[%s1430 + $0x182] sm:$0xff]
    %v2232 = vld [vmem:[%s1430 + $0x18a] sm:$0xff]
    %v2233 = vld [vmem:[%s1430 + $0x19a] sm:$0xff]
    %v2234 = vld [vmem:[%s1430 + $0x1a2] sm:$0xff]
    %v2235 = vld [vmem:[%s1430 + $0x1b2] sm:$0xff]
    %v2236 = vld [vmem:[%s1430 + $0x1ba] sm:$0xff]
    %v2237 = vld [vmem:[%s1430 + $0x1ca] sm:$0xff]
    %v2238 = vld [vmem:[%s1430 + $0x1d2] sm:$0xff]
    %v2239 = vld [vmem:[%s1430 + $0x1e2] sm:$0xff]
    %v2240 = vld [vmem:[%s1430 + $0x1ea] sm:$0xff]
    %v2241 = vld [vmem:[%s1430 + $0x1fa] sm:$0xff]
    %v2242 = vld [vmem:[%s1430 + $0x202] sm:$0xff]
    %v2243 = vld [vmem:[%s1430 + $0x212] sm:$0xff]
    %v2244 = vld [vmem:[%s1430 + $0x21a] sm:$0xff]
    %v2245 = vld [vmem:[%s1430 + $0x22a] sm:$0xff]
    %v2246 = vld [vmem:[%s1430 + $0x232] sm:$0xff]
    %v2247 = vld [vmem:[%s1430 + $0x242] sm:$0xff]
    %v2248 = vld [vmem:[%s1430 + $0x24a] sm:$0xff]
    %v2249 = vld [vmem:[%s1430 + $0x25a] sm:$0xff]
    %v2250 = vld [vmem:[%s1430 + $0x262] sm:$0xff]
    %v2251 = vld [vmem:[%s1430 + $0x272] sm:$0xff]
    %v2252 = vld [vmem:[%s1430 + $0x27a] sm:$0xff]
    %v2253 = vld [vmem:[%s1430 + $0x28a] sm:$0xff]
    %v2254 = vld [vmem:[%s1430 + $0x292] sm:$0xff]
    %v2255 = vld [vmem:[%s1430 + $0x2a2] sm:$0xff]
    %v2256 = vld [vmem:[%s1430 + $0x2aa] sm:$0xff]
    %v2257 = vld [vmem:[%s1430 + $0x2ba] sm:$0xff]
    %v2258 = vld [vmem:[%s1430 + $0x2c2] sm:$0xff]
    %v2259 = vld [vmem:[%s1430 + $0x2d2] sm:$0xff]
    %v2260 = vld [vmem:[%s1430 + $0x2da] sm:$0xff]
    %v2261 = vld [vmem:[#allocation5 + $0x2] sm:$0xff]
    %v2262 = vld [vmem:[#allocation5 + $0xa] sm:$0xff]
    %v2263 = vld [vmem:[#allocation5 + $0x32] sm:$0xff]
    %v2264 = vld [vmem:[#allocation5 + $0x3a] sm:$0xff]
    %2329 = vrot.lane.b32.xlu0 %v2201, 20
    %v2330 = vpop.permute.xlu0 %2329
    %2331 = vrot.lane.b32.xlu0 %v2202, 20
    %v2332 = vpop.permute.xlu0 %2331
    %2333 = vrot.lane.b32.xlu0 %v2203, 20
    %v2334 = vpop.permute.xlu0 %2333
    %2335 = vrot.lane.b32.xlu0 %v2204, 20
    %v2336 = vpop.permute.xlu0 %2335
    %2337 = vrot.lane.b32.xlu0 %v2205, 20
    %v2338 = vpop.permute.xlu0 %2337
    %2339 = vrot.lane.b32.xlu0 %v2206, 20
    %v2340 = vpop.permute.xlu0 %2339
    %2341 = vrot.lane.b32.xlu0 %v2207, 20
    %v2342 = vpop.permute.xlu0 %2341
    %2343 = vrot.lane.b32.xlu0 %v2208, 20
    %v2344 = vpop.permute.xlu0 %2343
    %2345 = vrot.lane.b32.xlu0 %v2209, 20
    %v2346 = vpop.permute.xlu0 %2345
    %2347 = vrot.lane.b32.xlu0 %v2210, 20
    %v2348 = vpop.permute.xlu0 %2347
    %2349 = vrot.lane.b32.xlu0 %v2211, 20
    %v2350 = vpop.permute.xlu0 %2349
    %2351 = vrot.lane.b32.xlu0 %v2212, 20
    %v2352 = vpop.permute.xlu0 %2351
    %2353 = vrot.lane.b32.xlu0 %v2213, 20
    %v2354 = vpop.permute.xlu0 %2353
    %2355 = vrot.lane.b32.xlu0 %v2214, 20
    %v2356 = vpop.permute.xlu0 %2355
    %2357 = vrot.lane.b32.xlu0 %v2215, 20
    %v2358 = vpop.permute.xlu0 %2357
    %2359 = vrot.lane.b32.xlu0 %v2216, 20
    %v2360 = vpop.permute.xlu0 %2359
    %2361 = vrot.lane.b32.xlu0 %v2217, 20
    %v2362 = vpop.permute.xlu0 %2361
    %2363 = vrot.lane.b32.xlu0 %v2218, 20
    %v2364 = vpop.permute.xlu0 %2363
    %2365 = vrot.lane.b32.xlu0 %v2219, 20
    %v2366 = vpop.permute.xlu0 %2365
    %2367 = vrot.lane.b32.xlu0 %v2220, 20
    %v2368 = vpop.permute.xlu0 %2367
    %2369 = vrot.lane.b32.xlu0 %v2221, 20
    %v2370 = vpop.permute.xlu0 %2369
    %2371 = vrot.lane.b32.xlu0 %v2222, 20
    %v2372 = vpop.permute.xlu0 %2371
    %2373 = vrot.lane.b32.xlu0 %v2223, 20
    %v2374 = vpop.permute.xlu0 %2373
    %2375 = vrot.lane.b32.xlu0 %v2224, 20
    %v2376 = vpop.permute.xlu0 %2375
    %2377 = vrot.lane.b32.xlu0 %v2225, 20
    %v2378 = vpop.permute.xlu0 %2377
    %2379 = vrot.lane.b32.xlu0 %v2226, 20
    %v2380 = vpop.permute.xlu0 %2379
    %2381 = vrot.lane.b32.xlu0 %v2227, 20
    %v2382 = vpop.permute.xlu0 %2381
    %2383 = vrot.lane.b32.xlu0 %v2228, 20
    %v2384 = vpop.permute.xlu0 %2383
    %2385 = vrot.lane.b32.xlu0 %v2229, 20
    %v2386 = vpop.permute.xlu0 %2385
    %2387 = vrot.lane.b32.xlu0 %v2230, 20
    %v2388 = vpop.permute.xlu0 %2387
    %2389 = vrot.lane.b32.xlu0 %v2261, 20
    %v2390 = vpop.permute.xlu0 %2389
    %2391 = vrot.lane.b32.xlu0 %v2262, 20
    %v2392 = vpop.permute.xlu0 %2391
    %2393 = vrot.lane.b32.xlu0 %v2231, 20
    %v2394 = vpop.permute.xlu0 %2393
    %2395 = vrot.lane.b32.xlu0 %v2232, 20
    %v2396 = vpop.permute.xlu0 %2395
    %2397 = vrot.lane.b32.xlu0 %v2233, 20
    %v2398 = vpop.permute.xlu0 %2397
    %2399 = vrot.lane.b32.xlu0 %v2234, 20
    %v2400 = vpop.permute.xlu0 %2399
    %2401 = vrot.lane.b32.xlu0 %v2235, 20
    %v2402 = vpop.permute.xlu0 %2401
    %2403 = vrot.lane.b32.xlu0 %v2236, 20
    %v2404 = vpop.permute.xlu0 %2403
    %2405 = vrot.lane.b32.xlu0 %v2237, 20
    %v2406 = vpop.permute.xlu0 %2405
    %2407 = vrot.lane.b32.xlu0 %v2238, 20
    %v2408 = vpop.permute.xlu0 %2407
    %2409 = vrot.lane.b32.xlu0 %v2239, 20
    %v2410 = vpop.permute.xlu0 %2409
    %2411 = vrot.lane.b32.xlu0 %v2240, 20
    %v2412 = vpop.permute.xlu0 %2411
    %2413 = vrot.lane.b32.xlu0 %v2241, 20
    %v2414 = vpop.permute.xlu0 %2413
    %2415 = vrot.lane.b32.xlu0 %v2242, 20
    %v2416 = vpop.permute.xlu0 %2415
    %2417 = vrot.lane.b32.xlu0 %v2243, 20
    %v2418 = vpop.permute.xlu0 %2417
    %2419 = vrot.lane.b32.xlu0 %v2244, 20
    %v2420 = vpop.permute.xlu0 %2419
    %2421 = vrot.lane.b32.xlu0 %v2245, 20
    %v2422 = vpop.permute.xlu0 %2421
    %2423 = vrot.lane.b32.xlu0 %v2246, 20
    %v2424 = vpop.permute.xlu0 %2423
    %2425 = vrot.lane.b32.xlu0 %v2247, 20
    %v2426 = vpop.permute.xlu0 %2425
    %2427 = vrot.lane.b32.xlu0 %v2248, 20
    %v2428 = vpop.permute.xlu0 %2427
    %2429 = vrot.lane.b32.xlu0 %v2249, 20
    %v2430 = vpop.permute.xlu0 %2429
    %2431 = vrot.lane.b32.xlu0 %v2250, 20
    %v2432 = vpop.permute.xlu0 %2431
    %2433 = vrot.lane.b32.xlu0 %v2251, 20
    %v2434 = vpop.permute.xlu0 %2433
    %2435 = vrot.lane.b32.xlu0 %v2252, 20
    %v2436 = vpop.permute.xlu0 %2435
    %2437 = vrot.lane.b32.xlu0 %v2253, 20
    %v2438 = vpop.permute.xlu0 %2437
    %2439 = vrot.lane.b32.xlu0 %v2254, 20
    %v2440 = vpop.permute.xlu0 %2439
    %2441 = vrot.lane.b32.xlu0 %v2255, 20
    %v2442 = vpop.permute.xlu0 %2441
    %2443 = vrot.lane.b32.xlu0 %v2256, 20
    %v2444 = vpop.permute.xlu0 %2443
    %2445 = vrot.lane.b32.xlu0 %v2257, 20
    %v2446 = vpop.permute.xlu0 %2445
    %2447 = vrot.lane.b32.xlu0 %v2258, 20
    %v2448 = vpop.permute.xlu0 %2447
    %2449 = vrot.lane.b32.xlu0 %v2259, 20
    %v2450 = vpop.permute.xlu0 %2449
    %2451 = vrot.lane.b32.xlu0 %v2260, 20
    %v2452 = vpop.permute.xlu0 %2451
    %2453 = vrot.lane.b32.xlu0 %v2263, 20
    %v2454 = vpop.permute.xlu0 %2453
    %2455 = vrot.lane.b32.xlu0 %v2264, 20
    %v2456 = vpop.permute.xlu0 %2455
    %vm2521 = vcmask 195744
    %2522 = vst.msk [vmem:[#allocation3] sm:$0xff] %vm2521, %v2330
    %2523 = vst.msk [vmem:[#allocation3 + $0x8] sm:$0xff] %vm2521, %v2332
    %2524 = vst.msk [vmem:[#allocation3 + $0x10] sm:$0xff] %vm2521, %v2334
    %2525 = vst.msk [vmem:[#allocation3 + $0x18] sm:$0xff] %vm2521, %v2336
    %2526 = vst.msk [vmem:[#allocation3 + $0x20] sm:$0xff] %vm2521, %v2338
    %2527 = vst.msk [vmem:[#allocation3 + $0x28] sm:$0xff] %vm2521, %v2340
    %2528 = vst.msk [vmem:[#allocation3 + $0x30] sm:$0xff] %vm2521, %v2342
    %2529 = vst.msk [vmem:[#allocation3 + $0x38] sm:$0xff] %vm2521, %v2344
    %2530 = vst.msk [vmem:[#allocation3 + $0x40] sm:$0xff] %vm2521, %v2346
    %2531 = vst.msk [vmem:[#allocation3 + $0x48] sm:$0xff] %vm2521, %v2348
    %2532 = vst.msk [vmem:[#allocation3 + $0x50] sm:$0xff] %vm2521, %v2350
    %2533 = vst.msk [vmem:[#allocation3 + $0x58] sm:$0xff] %vm2521, %v2352
    %2534 = vst.msk [vmem:[#allocation3 + $0x60] sm:$0xff] %vm2521, %v2354
    %2535 = vst.msk [vmem:[#allocation3 + $0x68] sm:$0xff] %vm2521, %v2356
    %2536 = vst.msk [vmem:[#allocation3 + $0x70] sm:$0xff] %vm2521, %v2358
    %2537 = vst.msk [vmem:[#allocation3 + $0x78] sm:$0xff] %vm2521, %v2360
    %2538 = vst.msk [vmem:[#allocation3 + $0x80] sm:$0xff] %vm2521, %v2362
    %2539 = vst.msk [vmem:[#allocation3 + $0x88] sm:$0xff] %vm2521, %v2364
    %2540 = vst.msk [vmem:[#allocation3 + $0x90] sm:$0xff] %vm2521, %v2366
    %2541 = vst.msk [vmem:[#allocation3 + $0x98] sm:$0xff] %vm2521, %v2368
    %2542 = vst.msk [vmem:[#allocation3 + $0xa0] sm:$0xff] %vm2521, %v2370
    %2543 = vst.msk [vmem:[#allocation3 + $0xa8] sm:$0xff] %vm2521, %v2372
    %2544 = vst.msk [vmem:[#allocation3 + $0xb0] sm:$0xff] %vm2521, %v2374
    %2545 = vst.msk [vmem:[#allocation3 + $0xb8] sm:$0xff] %vm2521, %v2376
    %2546 = vst.msk [vmem:[#allocation3 + $0xc0] sm:$0xff] %vm2521, %v2378
    %2547 = vst.msk [vmem:[#allocation3 + $0xc8] sm:$0xff] %vm2521, %v2380
    %2548 = vst.msk [vmem:[#allocation3 + $0xd0] sm:$0xff] %vm2521, %v2382
    %2549 = vst.msk [vmem:[#allocation3 + $0xd8] sm:$0xff] %vm2521, %v2384
    %2550 = vst.msk [vmem:[#allocation3 + $0xe0] sm:$0xff] %vm2521, %v2386
    %2551 = vst.msk [vmem:[#allocation3 + $0xe8] sm:$0xff] %vm2521, %v2388
    %2552 = vst.msk [vmem:[#allocation3 + $0xf0] sm:$0xff] %vm2521, %v2390
    %2553 = vst.msk [vmem:[#allocation3 + $0xf8] sm:$0xff] %vm2521, %v2392
    %2554 = vst.msk [vmem:[#allocation3 + $0x100] sm:$0xff] %vm2521, %v2394
    %2555 = vst.msk [vmem:[#allocation3 + $0x108] sm:$0xff] %vm2521, %v2396
    %2556 = vst.msk [vmem:[#allocation3 + $0x110] sm:$0xff] %vm2521, %v2398
    %2557 = vst.msk [vmem:[#allocation3 + $0x118] sm:$0xff] %vm2521, %v2400
    %2558 = vst.msk [vmem:[#allocation3 + $0x120] sm:$0xff] %vm2521, %v2402
    %2559 = vst.msk [vmem:[#allocation3 + $0x128] sm:$0xff] %vm2521, %v2404
    %2560 = vst.msk [vmem:[#allocation3 + $0x130] sm:$0xff] %vm2521, %v2406
    %2561 = vst.msk [vmem:[#allocation3 + $0x138] sm:$0xff] %vm2521, %v2408
    %2562 = vst.msk [vmem:[#allocation3 + $0x140] sm:$0xff] %vm2521, %v2410
    %2563 = vst.msk [vmem:[#allocation3 + $0x148] sm:$0xff] %vm2521, %v2412
    %2564 = vst.msk [vmem:[#allocation3 + $0x150] sm:$0xff] %vm2521, %v2414
    %2565 = vst.msk [vmem:[#allocation3 + $0x158] sm:$0xff] %vm2521, %v2416
    %2566 = vst.msk [vmem:[#allocation3 + $0x160] sm:$0xff] %vm2521, %v2418
    %2567 = vst.msk [vmem:[#allocation3 + $0x168] sm:$0xff] %vm2521, %v2420
    %2568 = vst.msk [vmem:[#allocation3 + $0x170] sm:$0xff] %vm2521, %v2422
    %2569 = vst.msk [vmem:[#allocation3 + $0x178] sm:$0xff] %vm2521, %v2424
    %2570 = vst.msk [vmem:[#allocation3 + $0x180] sm:$0xff] %vm2521, %v2426
    %2571 = vst.msk [vmem:[#allocation3 + $0x188] sm:$0xff] %vm2521, %v2428
    %2572 = vst.msk [vmem:[#allocation3 + $0x190] sm:$0xff] %vm2521, %v2430
    %2573 = vst.msk [vmem:[#allocation3 + $0x198] sm:$0xff] %vm2521, %v2432
    %2574 = vst.msk [vmem:[#allocation3 + $0x1a0] sm:$0xff] %vm2521, %v2434
    %2575 = vst.msk [vmem:[#allocation3 + $0x1a8] sm:$0xff] %vm2521, %v2436
    %2576 = vst.msk [vmem:[#allocation3 + $0x1b0] sm:$0xff] %vm2521, %v2438
    %2577 = vst.msk [vmem:[#allocation3 + $0x1b8] sm:$0xff] %vm2521, %v2440
    %2578 = vst.msk [vmem:[#allocation3 + $0x1c0] sm:$0xff] %vm2521, %v2442
    %2579 = vst.msk [vmem:[#allocation3 + $0x1c8] sm:$0xff] %vm2521, %v2444
    %2580 = vst.msk [vmem:[#allocation3 + $0x1d0] sm:$0xff] %vm2521, %v2446
    %2581 = vst.msk [vmem:[#allocation3 + $0x1d8] sm:$0xff] %vm2521, %v2448
    %2582 = vst.msk [vmem:[#allocation3 + $0x1e0] sm:$0xff] %vm2521, %v2450
    %2583 = vst.msk [vmem:[#allocation3 + $0x1e8] sm:$0xff] %vm2521, %v2452
    %2584 = vst.msk [vmem:[#allocation3 + $0x1f0] sm:$0xff] %vm2521, %v2454
    %2585 = vst.msk [vmem:[#allocation3 + $0x1f8] sm:$0xff] %vm2521, %v2456
    %s2586 = scalar_lea.vmem [#allocation4], 48
    %v2587 = vld [vmem:[%s2586] sm:$0xff]
    %v2588 = vld [vmem:[%s2586 + $0x8] sm:$0xff]
    %v2589 = vld [vmem:[%s2586 + $0x18] sm:$0xff]
    %v2590 = vld [vmem:[%s2586 + $0x20] sm:$0xff]
    %v2591 = vld [vmem:[%s2586 + $0x30] sm:$0xff]
    %v2592 = vld [vmem:[%s2586 + $0x38] sm:$0xff]
    %v2593 = vld [vmem:[%s2586 + $0x48] sm:$0xff]
    %v2594 = vld [vmem:[%s2586 + $0x50] sm:$0xff]
    %v2595 = vld [vmem:[%s2586 + $0x60] sm:$0xff]
    %v2596 = vld [vmem:[%s2586 + $0x68] sm:$0xff]
    %v2597 = vld [vmem:[%s2586 + $0x78] sm:$0xff]
    %v2598 = vld [vmem:[%s2586 + $0x80] sm:$0xff]
    %v2599 = vld [vmem:[%s2586 + $0x90] sm:$0xff]
    %v2600 = vld [vmem:[%s2586 + $0x98] sm:$0xff]
    %v2601 = vld [vmem:[%s2586 + $0xa8] sm:$0xff]
    %v2602 = vld [vmem:[%s2586 + $0xb0] sm:$0xff]
    %v2603 = vld [vmem:[%s2586 + $0xc0] sm:$0xff]
    %v2604 = vld [vmem:[%s2586 + $0xc8] sm:$0xff]
    %v2605 = vld [vmem:[%s2586 + $0xd8] sm:$0xff]
    %v2606 = vld [vmem:[%s2586 + $0xe0] sm:$0xff]
    %v2607 = vld [vmem:[%s2586 + $0xf0] sm:$0xff]
    %v2608 = vld [vmem:[%s2586 + $0xf8] sm:$0xff]
    %v2609 = vld [vmem:[%s2586 + $0x108] sm:$0xff]
    %v2610 = vld [vmem:[%s2586 + $0x110] sm:$0xff]
    %v2611 = vld [vmem:[%s2586 + $0x120] sm:$0xff]
    %v2612 = vld [vmem:[%s2586 + $0x128] sm:$0xff]
    %v2613 = vld [vmem:[%s2586 + $0x138] sm:$0xff]
    %v2614 = vld [vmem:[%s2586 + $0x140] sm:$0xff]
    %v2615 = vld [vmem:[%s2586 + $0x180] sm:$0xff]
    %v2616 = vld [vmem:[%s2586 + $0x188] sm:$0xff]
    %v2617 = vld [vmem:[%s2586 + $0x198] sm:$0xff]
    %v2618 = vld [vmem:[%s2586 + $0x1a0] sm:$0xff]
    %v2619 = vld [vmem:[%s2586 + $0x1b0] sm:$0xff]
    %v2620 = vld [vmem:[%s2586 + $0x1b8] sm:$0xff]
    %v2621 = vld [vmem:[%s2586 + $0x1c8] sm:$0xff]
    %v2622 = vld [vmem:[%s2586 + $0x1d0] sm:$0xff]
    %v2623 = vld [vmem:[%s2586 + $0x1e0] sm:$0xff]
    %v2624 = vld [vmem:[%s2586 + $0x1e8] sm:$0xff]
    %v2625 = vld [vmem:[%s2586 + $0x1f8] sm:$0xff]
    %v2626 = vld [vmem:[%s2586 + $0x200] sm:$0xff]
    %v2627 = vld [vmem:[%s2586 + $0x210] sm:$0xff]
    %v2628 = vld [vmem:[%s2586 + $0x218] sm:$0xff]
    %v2629 = vld [vmem:[%s2586 + $0x228] sm:$0xff]
    %v2630 = vld [vmem:[%s2586 + $0x230] sm:$0xff]
    %v2631 = vld [vmem:[%s2586 + $0x240] sm:$0xff]
    %v2632 = vld [vmem:[%s2586 + $0x248] sm:$0xff]
    %v2633 = vld [vmem:[%s2586 + $0x258] sm:$0xff]
    %v2634 = vld [vmem:[%s2586 + $0x260] sm:$0xff]
    %v2635 = vld [vmem:[%s2586 + $0x270] sm:$0xff]
    %v2636 = vld [vmem:[%s2586 + $0x278] sm:$0xff]
    %v2637 = vld [vmem:[%s2586 + $0x288] sm:$0xff]
    %v2638 = vld [vmem:[%s2586 + $0x290] sm:$0xff]
    %v2639 = vld [vmem:[%s2586 + $0x2a0] sm:$0xff]
    %v2640 = vld [vmem:[%s2586 + $0x2a8] sm:$0xff]
    %v2641 = vld [vmem:[%s2586 + $0x2b8] sm:$0xff]
    %v2642 = vld [vmem:[%s2586 + $0x2c0] sm:$0xff]
    %v2643 = vld [vmem:[#allocation5] sm:$0xff]
    %v2644 = vld [vmem:[#allocation5 + $0x8] sm:$0xff]
    %v2645 = vld [vmem:[#allocation5 + $0x18] sm:$0xff]
    %v2646 = vld [vmem:[#allocation5 + $0x20] sm:$0xff]
    %v2647 = vld [vmem:[#allocation5 + $0x30] sm:$0xff]
    %v2648 = vld [vmem:[#allocation5 + $0x38] sm:$0xff]
    %v2649 = vld [vmem:[#allocation5 + $0x48] sm:$0xff]
    %v2650 = vld [vmem:[#allocation5 + $0x50] sm:$0xff]
    %2715 = vrot.lane.b32.xlu0 %v2587, 24
    %v2716 = vpop.permute.xlu0 %2715
    %2717 = vrot.lane.b32.xlu0 %v2588, 24
    %v2718 = vpop.permute.xlu0 %2717
    %2719 = vrot.lane.b32.xlu0 %v2589, 24
    %v2720 = vpop.permute.xlu0 %2719
    %2721 = vrot.lane.b32.xlu0 %v2590, 24
    %v2722 = vpop.permute.xlu0 %2721
    %2723 = vrot.lane.b32.xlu0 %v2591, 24
    %v2724 = vpop.permute.xlu0 %2723
    %2725 = vrot.lane.b32.xlu0 %v2592, 24
    %v2726 = vpop.permute.xlu0 %2725
    %2727 = vrot.lane.b32.xlu0 %v2593, 24
    %v2728 = vpop.permute.xlu0 %2727
    %2729 = vrot.lane.b32.xlu0 %v2594, 24
    %v2730 = vpop.permute.xlu0 %2729
    %2731 = vrot.lane.b32.xlu0 %v2595, 24
    %v2732 = vpop.permute.xlu0 %2731
    %2733 = vrot.lane.b32.xlu0 %v2596, 24
    %v2734 = vpop.permute.xlu0 %2733
    %2735 = vrot.lane.b32.xlu0 %v2597, 24
    %v2736 = vpop.permute.xlu0 %2735
    %2737 = vrot.lane.b32.xlu0 %v2598, 24
    %v2738 = vpop.permute.xlu0 %2737
    %2739 = vrot.lane.b32.xlu0 %v2599, 24
    %v2740 = vpop.permute.xlu0 %2739
    %2741 = vrot.lane.b32.xlu0 %v2600, 24
    %v2742 = vpop.permute.xlu0 %2741
    %2743 = vrot.lane.b32.xlu0 %v2601, 24
    %v2744 = vpop.permute.xlu0 %2743
    %2745 = vrot.lane.b32.xlu0 %v2602, 24
    %v2746 = vpop.permute.xlu0 %2745
    %2747 = vrot.lane.b32.xlu0 %v2603, 24
    %v2748 = vpop.permute.xlu0 %2747
    %2749 = vrot.lane.b32.xlu0 %v2604, 24
    %v2750 = vpop.permute.xlu0 %2749
    %2751 = vrot.lane.b32.xlu0 %v2605, 24
    %v2752 = vpop.permute.xlu0 %2751
    %2753 = vrot.lane.b32.xlu0 %v2606, 24
    %v2754 = vpop.permute.xlu0 %2753
    %2755 = vrot.lane.b32.xlu0 %v2607, 24
    %v2756 = vpop.permute.xlu0 %2755
    %2757 = vrot.lane.b32.xlu0 %v2608, 24
    %v2758 = vpop.permute.xlu0 %2757
    %2759 = vrot.lane.b32.xlu0 %v2609, 24
    %v2760 = vpop.permute.xlu0 %2759
    %2761 = vrot.lane.b32.xlu0 %v2610, 24
    %v2762 = vpop.permute.xlu0 %2761
    %2763 = vrot.lane.b32.xlu0 %v2611, 24
    %v2764 = vpop.permute.xlu0 %2763
    %2765 = vrot.lane.b32.xlu0 %v2612, 24
    %v2766 = vpop.permute.xlu0 %2765
    %2767 = vrot.lane.b32.xlu0 %v2613, 24
    %v2768 = vpop.permute.xlu0 %2767
    %2769 = vrot.lane.b32.xlu0 %v2614, 24
    %v2770 = vpop.permute.xlu0 %2769
    %2771 = vrot.lane.b32.xlu0 %v2643, 24
    %v2772 = vpop.permute.xlu0 %2771
    %2773 = vrot.lane.b32.xlu0 %v2644, 24
    %v2774 = vpop.permute.xlu0 %2773
    %2775 = vrot.lane.b32.xlu0 %v2645, 24
    %v2776 = vpop.permute.xlu0 %2775
    %2777 = vrot.lane.b32.xlu0 %v2646, 24
    %v2778 = vpop.permute.xlu0 %2777
    %2779 = vrot.lane.b32.xlu0 %v2615, 24
    %v2780 = vpop.permute.xlu0 %2779
    %2781 = vrot.lane.b32.xlu0 %v2616, 24
    %v2782 = vpop.permute.xlu0 %2781
    %2783 = vrot.lane.b32.xlu0 %v2617, 24
    %v2784 = vpop.permute.xlu0 %2783
    %2785 = vrot.lane.b32.xlu0 %v2618, 24
    %v2786 = vpop.permute.xlu0 %2785
    %2787 = vrot.lane.b32.xlu0 %v2619, 24
    %v2788 = vpop.permute.xlu0 %2787
    %2789 = vrot.lane.b32.xlu0 %v2620, 24
    %v2790 = vpop.permute.xlu0 %2789
    %2791 = vrot.lane.b32.xlu0 %v2621, 24
    %v2792 = vpop.permute.xlu0 %2791
    %2793 = vrot.lane.b32.xlu0 %v2622, 24
    %v2794 = vpop.permute.xlu0 %2793
    %2795 = vrot.lane.b32.xlu0 %v2623, 24
    %v2796 = vpop.permute.xlu0 %2795
    %2797 = vrot.lane.b32.xlu0 %v2624, 24
    %v2798 = vpop.permute.xlu0 %2797
    %2799 = vrot.lane.b32.xlu0 %v2625, 24
    %v2800 = vpop.permute.xlu0 %2799
    %2801 = vrot.lane.b32.xlu0 %v2626, 24
    %v2802 = vpop.permute.xlu0 %2801
    %2803 = vrot.lane.b32.xlu0 %v2627, 24
    %v2804 = vpop.permute.xlu0 %2803
    %2805 = vrot.lane.b32.xlu0 %v2628, 24
    %v2806 = vpop.permute.xlu0 %2805
    %2807 = vrot.lane.b32.xlu0 %v2629, 24
    %v2808 = vpop.permute.xlu0 %2807
    %2809 = vrot.lane.b32.xlu0 %v2630, 24
    %v2810 = vpop.permute.xlu0 %2809
    %2811 = vrot.lane.b32.xlu0 %v2631, 24
    %v2812 = vpop.permute.xlu0 %2811
    %2813 = vrot.lane.b32.xlu0 %v2632, 24
    %v2814 = vpop.permute.xlu0 %2813
    %2815 = vrot.lane.b32.xlu0 %v2633, 24
    %v2816 = vpop.permute.xlu0 %2815
    %2817 = vrot.lane.b32.xlu0 %v2634, 24
    %v2818 = vpop.permute.xlu0 %2817
    %2819 = vrot.lane.b32.xlu0 %v2635, 24
    %v2820 = vpop.permute.xlu0 %2819
    %2821 = vrot.lane.b32.xlu0 %v2636, 24
    %v2822 = vpop.permute.xlu0 %2821
    %2823 = vrot.lane.b32.xlu0 %v2637, 24
    %v2824 = vpop.permute.xlu0 %2823
    %2825 = vrot.lane.b32.xlu0 %v2638, 24
    %v2826 = vpop.permute.xlu0 %2825
    %2827 = vrot.lane.b32.xlu0 %v2639, 24
    %v2828 = vpop.permute.xlu0 %2827
    %2829 = vrot.lane.b32.xlu0 %v2640, 24
    %v2830 = vpop.permute.xlu0 %2829
    %2831 = vrot.lane.b32.xlu0 %v2641, 24
    %v2832 = vpop.permute.xlu0 %2831
    %2833 = vrot.lane.b32.xlu0 %v2642, 24
    %v2834 = vpop.permute.xlu0 %2833
    %2835 = vrot.lane.b32.xlu0 %v2647, 24
    %v2836 = vpop.permute.xlu0 %2835
    %2837 = vrot.lane.b32.xlu0 %v2648, 24
    %v2838 = vpop.permute.xlu0 %2837
    %2839 = vrot.lane.b32.xlu0 %v2649, 24
    %v2840 = vpop.permute.xlu0 %2839
    %2841 = vrot.lane.b32.xlu0 %v2650, 24
    %v2842 = vpop.permute.xlu0 %2841
    %vm2907 = vcmask 228544
    %2908 = vst.msk [vmem:[#allocation3] sm:$0xff] %vm2907, %v2716
    %2909 = vst.msk [vmem:[#allocation3 + $0x8] sm:$0xff] %vm2907, %v2718
    %2910 = vst.msk [vmem:[#allocation3 + $0x10] sm:$0xff] %vm2907, %v2720
    %2911 = vst.msk [vmem:[#allocation3 + $0x18] sm:$0xff] %vm2907, %v2722
    %2912 = vst.msk [vmem:[#allocation3 + $0x20] sm:$0xff] %vm2907, %v2724
    %2913 = vst.msk [vmem:[#allocation3 + $0x28] sm:$0xff] %vm2907, %v2726
    %2914 = vst.msk [vmem:[#allocation3 + $0x30] sm:$0xff] %vm2907, %v2728
    %2915 = vst.msk [vmem:[#allocation3 + $0x38] sm:$0xff] %vm2907, %v2730
    %2916 = vst.msk [vmem:[#allocation3 + $0x40] sm:$0xff] %vm2907, %v2732
    %2917 = vst.msk [vmem:[#allocation3 + $0x48] sm:$0xff] %vm2907, %v2734
    %2918 = vst.msk [vmem:[#allocation3 + $0x50] sm:$0xff] %vm2907, %v2736
    %2919 = vst.msk [vmem:[#allocation3 + $0x58] sm:$0xff] %vm2907, %v2738
    %2920 = vst.msk [vmem:[#allocation3 + $0x60] sm:$0xff] %vm2907, %v2740
    %2921 = vst.msk [vmem:[#allocation3 + $0x68] sm:$0xff] %vm2907, %v2742
    %2922 = vst.msk [vmem:[#allocation3 + $0x70] sm:$0xff] %vm2907, %v2744
    %2923 = vst.msk [vmem:[#allocation3 + $0x78] sm:$0xff] %vm2907, %v2746
    %2924 = vst.msk [vmem:[#allocation3 + $0x80] sm:$0xff] %vm2907, %v2748
    %2925 = vst.msk [vmem:[#allocation3 + $0x88] sm:$0xff] %vm2907, %v2750
    %2926 = vst.msk [vmem:[#allocation3 + $0x90] sm:$0xff] %vm2907, %v2752
    %2927 = vst.msk [vmem:[#allocation3 + $0x98] sm:$0xff] %vm2907, %v2754
    %2928 = vst.msk [vmem:[#allocation3 + $0xa0] sm:$0xff] %vm2907, %v2756
    %2929 = vst.msk [vmem:[#allocation3 + $0xa8] sm:$0xff] %vm2907, %v2758
    %2930 = vst.msk [vmem:[#allocation3 + $0xb0] sm:$0xff] %vm2907, %v2760
    %2931 = vst.msk [vmem:[#allocation3 + $0xb8] sm:$0xff] %vm2907, %v2762
    %2932 = vst.msk [vmem:[#allocation3 + $0xc0] sm:$0xff] %vm2907, %v2764
    %2933 = vst.msk [vmem:[#allocation3 + $0xc8] sm:$0xff] %vm2907, %v2766
    %2934 = vst.msk [vmem:[#allocation3 + $0xd0] sm:$0xff] %vm2907, %v2768
    %2935 = vst.msk [vmem:[#allocation3 + $0xd8] sm:$0xff] %vm2907, %v2770
    %2936 = vst.msk [vmem:[#allocation3 + $0xe0] sm:$0xff] %vm2907, %v2772
    %2937 = vst.msk [vmem:[#allocation3 + $0xe8] sm:$0xff] %vm2907, %v2774
    %2938 = vst.msk [vmem:[#allocation3 + $0xf0] sm:$0xff] %vm2907, %v2776
    %2939 = vst.msk [vmem:[#allocation3 + $0xf8] sm:$0xff] %vm2907, %v2778
    %2940 = vst.msk [vmem:[#allocation3 + $0x100] sm:$0xff] %vm2907, %v2780
    %2941 = vst.msk [vmem:[#allocation3 + $0x108] sm:$0xff] %vm2907, %v2782
    %2942 = vst.msk [vmem:[#allocation3 + $0x110] sm:$0xff] %vm2907, %v2784
    %2943 = vst.msk [vmem:[#allocation3 + $0x118] sm:$0xff] %vm2907, %v2786
    %2944 = vst.msk [vmem:[#allocation3 + $0x120] sm:$0xff] %vm2907, %v2788
    %2945 = vst.msk [vmem:[#allocation3 + $0x128] sm:$0xff] %vm2907, %v2790
    %2946 = vst.msk [vmem:[#allocation3 + $0x130] sm:$0xff] %vm2907, %v2792
    %2947 = vst.msk [vmem:[#allocation3 + $0x138] sm:$0xff] %vm2907, %v2794
    %2948 = vst.msk [vmem:[#allocation3 + $0x140] sm:$0xff] %vm2907, %v2796
    %2949 = vst.msk [vmem:[#allocation3 + $0x148] sm:$0xff] %vm2907, %v2798
    %2950 = vst.msk [vmem:[#allocation3 + $0x150] sm:$0xff] %vm2907, %v2800
    %2951 = vst.msk [vmem:[#allocation3 + $0x158] sm:$0xff] %vm2907, %v2802
    %2952 = vst.msk [vmem:[#allocation3 + $0x160] sm:$0xff] %vm2907, %v2804
    %2953 = vst.msk [vmem:[#allocation3 + $0x168] sm:$0xff] %vm2907, %v2806
    %2954 = vst.msk [vmem:[#allocation3 + $0x170] sm:$0xff] %vm2907, %v2808
    %2955 = vst.msk [vmem:[#allocation3 + $0x178] sm:$0xff] %vm2907, %v2810
    %2956 = vst.msk [vmem:[#allocation3 + $0x180] sm:$0xff] %vm2907, %v2812
    %2957 = vst.msk [vmem:[#allocation3 + $0x188] sm:$0xff] %vm2907, %v2814
    %2958 = vst.msk [vmem:[#allocation3 + $0x190] sm:$0xff] %vm2907, %v2816
    %2959 = vst.msk [vmem:[#allocation3 + $0x198] sm:$0xff] %vm2907, %v2818
    %2960 = vst.msk [vmem:[#allocation3 + $0x1a0] sm:$0xff] %vm2907, %v2820
    %2961 = vst.msk [vmem:[#allocation3 + $0x1a8] sm:$0xff] %vm2907, %v2822
    %2962 = vst.msk [vmem:[#allocation3 + $0x1b0] sm:$0xff] %vm2907, %v2824
    %2963 = vst.msk [vmem:[#allocation3 + $0x1b8] sm:$0xff] %vm2907, %v2826
    %2964 = vst.msk [vmem:[#allocation3 + $0x1c0] sm:$0xff] %vm2907, %v2828
    %2965 = vst.msk [vmem:[#allocation3 + $0x1c8] sm:$0xff] %vm2907, %v2830
    %2966 = vst.msk [vmem:[#allocation3 + $0x1d0] sm:$0xff] %vm2907, %v2832
    %2967 = vst.msk [vmem:[#allocation3 + $0x1d8] sm:$0xff] %vm2907, %v2834
    %2968 = vst.msk [vmem:[#allocation3 + $0x1e0] sm:$0xff] %vm2907, %v2836
    %2969 = vst.msk [vmem:[#allocation3 + $0x1e8] sm:$0xff] %vm2907, %v2838
    %2970 = vst.msk [vmem:[#allocation3 + $0x1f0] sm:$0xff] %vm2907, %v2840
    %2971 = vst.msk [vmem:[#allocation3 + $0x1f8] sm:$0xff] %vm2907, %v2842
    %v2972 = vld [vmem:[%s2586 + $0x1] sm:$0xff]
    %v2973 = vld [vmem:[%s2586 + $0x9] sm:$0xff]
    %v2974 = vld [vmem:[%s2586 + $0x19] sm:$0xff]
    %v2975 = vld [vmem:[%s2586 + $0x21] sm:$0xff]
    %v2976 = vld [vmem:[%s2586 + $0x31] sm:$0xff]
    %v2977 = vld [vmem:[%s2586 + $0x39] sm:$0xff]
    %v2978 = vld [vmem:[%s2586 + $0x49] sm:$0xff]
    %v2979 = vld [vmem:[%s2586 + $0x51] sm:$0xff]
    %v2980 = vld [vmem:[%s2586 + $0x61] sm:$0xff]
    %v2981 = vld [vmem:[%s2586 + $0x69] sm:$0xff]
    %v2982 = vld [vmem:[%s2586 + $0x79] sm:$0xff]
    %v2983 = vld [vmem:[%s2586 + $0x81] sm:$0xff]
    %v2984 = vld [vmem:[%s2586 + $0x91] sm:$0xff]
    %v2985 = vld [vmem:[%s2586 + $0x99] sm:$0xff]
    %v2986 = vld [vmem:[%s2586 + $0xa9] sm:$0xff]
    %v2987 = vld [vmem:[%s2586 + $0xb1] sm:$0xff]
    %v2988 = vld [vmem:[%s2586 + $0xc1] sm:$0xff]
    %v2989 = vld [vmem:[%s2586 + $0xc9] sm:$0xff]
    %v2990 = vld [vmem:[%s2586 + $0xd9] sm:$0xff]
    %v2991 = vld [vmem:[%s2586 + $0xe1] sm:$0xff]
    %v2992 = vld [vmem:[%s2586 + $0xf1] sm:$0xff]
    %v2993 = vld [vmem:[%s2586 + $0xf9] sm:$0xff]
    %v2994 = vld [vmem:[%s2586 + $0x109] sm:$0xff]
    %v2995 = vld [vmem:[%s2586 + $0x111] sm:$0xff]
    %v2996 = vld [vmem:[%s2586 + $0x121] sm:$0xff]
    %v2997 = vld [vmem:[%s2586 + $0x129] sm:$0xff]
    %v2998 = vld [vmem:[%s2586 + $0x139] sm:$0xff]
    %v2999 = vld [vmem:[%s2586 + $0x141] sm:$0xff]
    %v3000 = vld [vmem:[%s2586 + $0x181] sm:$0xff]
    %v3001 = vld [vmem:[%s2586 + $0x189] sm:$0xff]
    %v3002 = vld [vmem:[%s2586 + $0x199] sm:$0xff]
    %v3003 = vld [vmem:[%s2586 + $0x1a1] sm:$0xff]
    %v3004 = vld [vmem:[%s2586 + $0x1b1] sm:$0xff]
    %v3005 = vld [vmem:[%s2586 + $0x1b9] sm:$0xff]
    %v3006 = vld [vmem:[%s2586 + $0x1c9] sm:$0xff]
    %v3007 = vld [vmem:[%s2586 + $0x1d1] sm:$0xff]
    %v3008 = vld [vmem:[%s2586 + $0x1e1] sm:$0xff]
    %v3009 = vld [vmem:[%s2586 + $0x1e9] sm:$0xff]
    %v3010 = vld [vmem:[%s2586 + $0x1f9] sm:$0xff]
    %v3011 = vld [vmem:[%s2586 + $0x201] sm:$0xff]
    %v3012 = vld [vmem:[%s2586 + $0x211] sm:$0xff]
    %v3013 = vld [vmem:[%s2586 + $0x219] sm:$0xff]
    %v3014 = vld [vmem:[%s2586 + $0x229] sm:$0xff]
    %v3015 = vld [vmem:[%s2586 + $0x231] sm:$0xff]
    %v3016 = vld [vmem:[%s2586 + $0x241] sm:$0xff]
    %v3017 = vld [vmem:[%s2586 + $0x249] sm:$0xff]
    %v3018 = vld [vmem:[%s2586 + $0x259] sm:$0xff]
    %v3019 = vld [vmem:[%s2586 + $0x261] sm:$0xff]
    %v3020 = vld [vmem:[%s2586 + $0x271] sm:$0xff]
    %v3021 = vld [vmem:[%s2586 + $0x279] sm:$0xff]
    %v3022 = vld [vmem:[%s2586 + $0x289] sm:$0xff]
    %v3023 = vld [vmem:[%s2586 + $0x291] sm:$0xff]
    %v3024 = vld [vmem:[%s2586 + $0x2a1] sm:$0xff]
    %v3025 = vld [vmem:[%s2586 + $0x2a9] sm:$0xff]
    %v3026 = vld [vmem:[%s2586 + $0x2b9] sm:$0xff]
    %v3027 = vld [vmem:[%s2586 + $0x2c1] sm:$0xff]
    %v3028 = vld [vmem:[#allocation5 + $0x1] sm:$0xff]
    %v3029 = vld [vmem:[#allocation5 + $0x9] sm:$0xff]
    %v3030 = vld [vmem:[#allocation5 + $0x19] sm:$0xff]
    %v3031 = vld [vmem:[#allocation5 + $0x21] sm:$0xff]
    %v3032 = vld [vmem:[#allocation5 + $0x31] sm:$0xff]
    %v3033 = vld [vmem:[#allocation5 + $0x39] sm:$0xff]
    %v3034 = vld [vmem:[#allocation5 + $0x49] sm:$0xff]
    %v3035 = vld [vmem:[#allocation5 + $0x51] sm:$0xff]
    %3100 = vrot.lane.b32.xlu0 %v2972, 28
    %v3101 = vpop.permute.xlu0 %3100
    %3102 = vrot.lane.b32.xlu0 %v2973, 28
    %v3103 = vpop.permute.xlu0 %3102
    %3104 = vrot.lane.b32.xlu0 %v2974, 28
    %v3105 = vpop.permute.xlu0 %3104
    %3106 = vrot.lane.b32.xlu0 %v2975, 28
    %v3107 = vpop.permute.xlu0 %3106
    %3108 = vrot.lane.b32.xlu0 %v2976, 28
    %v3109 = vpop.permute.xlu0 %3108
    %3110 = vrot.lane.b32.xlu0 %v2977, 28
    %v3111 = vpop.permute.xlu0 %3110
    %3112 = vrot.lane.b32.xlu0 %v2978, 28
    %v3113 = vpop.permute.xlu0 %3112
    %3114 = vrot.lane.b32.xlu0 %v2979, 28
    %v3115 = vpop.permute.xlu0 %3114
    %3116 = vrot.lane.b32.xlu0 %v2980, 28
    %v3117 = vpop.permute.xlu0 %3116
    %3118 = vrot.lane.b32.xlu0 %v2981, 28
    %v3119 = vpop.permute.xlu0 %3118
    %3120 = vrot.lane.b32.xlu0 %v2982, 28
    %v3121 = vpop.permute.xlu0 %3120
    %3122 = vrot.lane.b32.xlu0 %v2983, 28
    %v3123 = vpop.permute.xlu0 %3122
    %3124 = vrot.lane.b32.xlu0 %v2984, 28
    %v3125 = vpop.permute.xlu0 %3124
    %3126 = vrot.lane.b32.xlu0 %v2985, 28
    %v3127 = vpop.permute.xlu0 %3126
    %3128 = vrot.lane.b32.xlu0 %v2986, 28
    %v3129 = vpop.permute.xlu0 %3128
    %3130 = vrot.lane.b32.xlu0 %v2987, 28
    %v3131 = vpop.permute.xlu0 %3130
    %3132 = vrot.lane.b32.xlu0 %v2988, 28
    %v3133 = vpop.permute.xlu0 %3132
    %3134 = vrot.lane.b32.xlu0 %v2989, 28
    %v3135 = vpop.permute.xlu0 %3134
    %3136 = vrot.lane.b32.xlu0 %v2990, 28
    %v3137 = vpop.permute.xlu0 %3136
    %3138 = vrot.lane.b32.xlu0 %v2991, 28
    %v3139 = vpop.permute.xlu0 %3138
    %3140 = vrot.lane.b32.xlu0 %v2992, 28
    %v3141 = vpop.permute.xlu0 %3140
    %3142 = vrot.lane.b32.xlu0 %v2993, 28
    %v3143 = vpop.permute.xlu0 %3142
    %3144 = vrot.lane.b32.xlu0 %v2994, 28
    %v3145 = vpop.permute.xlu0 %3144
    %3146 = vrot.lane.b32.xlu0 %v2995, 28
    %v3147 = vpop.permute.xlu0 %3146
    %3148 = vrot.lane.b32.xlu0 %v2996, 28
    %v3149 = vpop.permute.xlu0 %3148
    %3150 = vrot.lane.b32.xlu0 %v2997, 28
    %v3151 = vpop.permute.xlu0 %3150
    %3152 = vrot.lane.b32.xlu0 %v2998, 28
    %v3153 = vpop.permute.xlu0 %3152
    %3154 = vrot.lane.b32.xlu0 %v2999, 28
    %v3155 = vpop.permute.xlu0 %3154
    %3156 = vrot.lane.b32.xlu0 %v3028, 28
    %v3157 = vpop.permute.xlu0 %3156
    %3158 = vrot.lane.b32.xlu0 %v3029, 28
    %v3159 = vpop.permute.xlu0 %3158
    %3160 = vrot.lane.b32.xlu0 %v3030, 28
    %v3161 = vpop.permute.xlu0 %3160
    %3162 = vrot.lane.b32.xlu0 %v3031, 28
    %v3163 = vpop.permute.xlu0 %3162
    %3164 = vrot.lane.b32.xlu0 %v3000, 28
    %v3165 = vpop.permute.xlu0 %3164
    %3166 = vrot.lane.b32.xlu0 %v3001, 28
    %v3167 = vpop.permute.xlu0 %3166
    %3168 = vrot.lane.b32.xlu0 %v3002, 28
    %v3169 = vpop.permute.xlu0 %3168
    %3170 = vrot.lane.b32.xlu0 %v3003, 28
    %v3171 = vpop.permute.xlu0 %3170
    %3172 = vrot.lane.b32.xlu0 %v3004, 28
    %v3173 = vpop.permute.xlu0 %3172
    %3174 = vrot.lane.b32.xlu0 %v3005, 28
    %v3175 = vpop.permute.xlu0 %3174
    %3176 = vrot.lane.b32.xlu0 %v3006, 28
    %v3177 = vpop.permute.xlu0 %3176
    %3178 = vrot.lane.b32.xlu0 %v3007, 28
    %v3179 = vpop.permute.xlu0 %3178
    %3180 = vrot.lane.b32.xlu0 %v3008, 28
    %v3181 = vpop.permute.xlu0 %3180
    %3182 = vrot.lane.b32.xlu0 %v3009, 28
    %v3183 = vpop.permute.xlu0 %3182
    %3184 = vrot.lane.b32.xlu0 %v3010, 28
    %v3185 = vpop.permute.xlu0 %3184
    %3186 = vrot.lane.b32.xlu0 %v3011, 28
    %v3187 = vpop.permute.xlu0 %3186
    %3188 = vrot.lane.b32.xlu0 %v3012, 28
    %v3189 = vpop.permute.xlu0 %3188
    %3190 = vrot.lane.b32.xlu0 %v3013, 28
    %v3191 = vpop.permute.xlu0 %3190
    %3192 = vrot.lane.b32.xlu0 %v3014, 28
    %v3193 = vpop.permute.xlu0 %3192
    %3194 = vrot.lane.b32.xlu0 %v3015, 28
    %v3195 = vpop.permute.xlu0 %3194
    %3196 = vrot.lane.b32.xlu0 %v3016, 28
    %v3197 = vpop.permute.xlu0 %3196
    %3198 = vrot.lane.b32.xlu0 %v3017, 28
    %v3199 = vpop.permute.xlu0 %3198
    %3200 = vrot.lane.b32.xlu0 %v3018, 28
    %v3201 = vpop.permute.xlu0 %3200
    %3202 = vrot.lane.b32.xlu0 %v3019, 28
    %v3203 = vpop.permute.xlu0 %3202
    %3204 = vrot.lane.b32.xlu0 %v3020, 28
    %v3205 = vpop.permute.xlu0 %3204
    %3206 = vrot.lane.b32.xlu0 %v3021, 28
    %v3207 = vpop.permute.xlu0 %3206
    %3208 = vrot.lane.b32.xlu0 %v3022, 28
    %v3209 = vpop.permute.xlu0 %3208
    %3210 = vrot.lane.b32.xlu0 %v3023, 28
    %v3211 = vpop.permute.xlu0 %3210
    %3212 = vrot.lane.b32.xlu0 %v3024, 28
    %v3213 = vpop.permute.xlu0 %3212
    %3214 = vrot.lane.b32.xlu0 %v3025, 28
    %v3215 = vpop.permute.xlu0 %3214
    %3216 = vrot.lane.b32.xlu0 %v3026, 28
    %v3217 = vpop.permute.xlu0 %3216
    %3218 = vrot.lane.b32.xlu0 %v3027, 28
    %v3219 = vpop.permute.xlu0 %3218
    %3220 = vrot.lane.b32.xlu0 %v3032, 28
    %v3221 = vpop.permute.xlu0 %3220
    %3222 = vrot.lane.b32.xlu0 %v3033, 28
    %v3223 = vpop.permute.xlu0 %3222
    %3224 = vrot.lane.b32.xlu0 %v3034, 28
    %v3225 = vpop.permute.xlu0 %3224
    %3226 = vrot.lane.b32.xlu0 %v3035, 28
    %v3227 = vpop.permute.xlu0 %3226
    %vm3292 = vcmask 261344
    %3293 = vst.msk [vmem:[#allocation3] sm:$0xff] %vm3292, %v3101
    %3294 = vst.msk [vmem:[#allocation3 + $0x8] sm:$0xff] %vm3292, %v3103
    %3295 = vst.msk [vmem:[#allocation3 + $0x10] sm:$0xff] %vm3292, %v3105
    %3296 = vst.msk [vmem:[#allocation3 + $0x18] sm:$0xff] %vm3292, %v3107
    %3297 = vst.msk [vmem:[#allocation3 + $0x20] sm:$0xff] %vm3292, %v3109
    %3298 = vst.msk [vmem:[#allocation3 + $0x28] sm:$0xff] %vm3292, %v3111
    %3299 = vst.msk [vmem:[#allocation3 + $0x30] sm:$0xff] %vm3292, %v3113
    %3300 = vst.msk [vmem:[#allocation3 + $0x38] sm:$0xff] %vm3292, %v3115
    %3301 = vst.msk [vmem:[#allocation3 + $0x40] sm:$0xff] %vm3292, %v3117
    %3302 = vst.msk [vmem:[#allocation3 + $0x48] sm:$0xff] %vm3292, %v3119
    %3303 = vst.msk [vmem:[#allocation3 + $0x50] sm:$0xff] %vm3292, %v3121
    %3304 = vst.msk [vmem:[#allocation3 + $0x58] sm:$0xff] %vm3292, %v3123
    %3305 = vst.msk [vmem:[#allocation3 + $0x60] sm:$0xff] %vm3292, %v3125
    %3306 = vst.msk [vmem:[#allocation3 + $0x68] sm:$0xff] %vm3292, %v3127
    %3307 = vst.msk [vmem:[#allocation3 + $0x70] sm:$0xff] %vm3292, %v3129
    %3308 = vst.msk [vmem:[#allocation3 + $0x78] sm:$0xff] %vm3292, %v3131
    %3309 = vst.msk [vmem:[#allocation3 + $0x80] sm:$0xff] %vm3292, %v3133
    %3310 = vst.msk [vmem:[#allocation3 + $0x88] sm:$0xff] %vm3292, %v3135
    %3311 = vst.msk [vmem:[#allocation3 + $0x90] sm:$0xff] %vm3292, %v3137
    %3312 = vst.msk [vmem:[#allocation3 + $0x98] sm:$0xff] %vm3292, %v3139
    %3313 = vst.msk [vmem:[#allocation3 + $0xa0] sm:$0xff] %vm3292, %v3141
    %3314 = vst.msk [vmem:[#allocation3 + $0xa8] sm:$0xff] %vm3292, %v3143
    %3315 = vst.msk [vmem:[#allocation3 + $0xb0] sm:$0xff] %vm3292, %v3145
    %3316 = vst.msk [vmem:[#allocation3 + $0xb8] sm:$0xff] %vm3292, %v3147
    %3317 = vst.msk [vmem:[#allocation3 + $0xc0] sm:$0xff] %vm3292, %v3149
    %3318 = vst.msk [vmem:[#allocation3 + $0xc8] sm:$0xff] %vm3292, %v3151
    %3319 = vst.msk [vmem:[#allocation3 + $0xd0] sm:$0xff] %vm3292, %v3153
    %3320 = vst.msk [vmem:[#allocation3 + $0xd8] sm:$0xff] %vm3292, %v3155
    %3321 = vst.msk [vmem:[#allocation3 + $0xe0] sm:$0xff] %vm3292, %v3157
    %3322 = vst.msk [vmem:[#allocation3 + $0xe8] sm:$0xff] %vm3292, %v3159
    %3323 = vst.msk [vmem:[#allocation3 + $0xf0] sm:$0xff] %vm3292, %v3161
    %3324 = vst.msk [vmem:[#allocation3 + $0xf8] sm:$0xff] %vm3292, %v3163
    %3325 = vst.msk [vmem:[#allocation3 + $0x100] sm:$0xff] %vm3292, %v3165
    %3326 = vst.msk [vmem:[#allocation3 + $0x108] sm:$0xff] %vm3292, %v3167
    %3327 = vst.msk [vmem:[#allocation3 + $0x110] sm:$0xff] %vm3292, %v3169
    %3328 = vst.msk [vmem:[#allocation3 + $0x118] sm:$0xff] %vm3292, %v3171
    %3329 = vst.msk [vmem:[#allocation3 + $0x120] sm:$0xff] %vm3292, %v3173
    %3330 = vst.msk [vmem:[#allocation3 + $0x128] sm:$0xff] %vm3292, %v3175
    %3331 = vst.msk [vmem:[#allocation3 + $0x130] sm:$0xff] %vm3292, %v3177
    %3332 = vst.msk [vmem:[#allocation3 + $0x138] sm:$0xff] %vm3292, %v3179
    %3333 = vst.msk [vmem:[#allocation3 + $0x140] sm:$0xff] %vm3292, %v3181
    %3334 = vst.msk [vmem:[#allocation3 + $0x148] sm:$0xff] %vm3292, %v3183
    %3335 = vst.msk [vmem:[#allocation3 + $0x150] sm:$0xff] %vm3292, %v3185
    %3336 = vst.msk [vmem:[#allocation3 + $0x158] sm:$0xff] %vm3292, %v3187
    %3337 = vst.msk [vmem:[#allocation3 + $0x160] sm:$0xff] %vm3292, %v3189
    %3338 = vst.msk [vmem:[#allocation3 + $0x168] sm:$0xff] %vm3292, %v3191
    %3339 = vst.msk [vmem:[#allocation3 + $0x170] sm:$0xff] %vm3292, %v3193
    %3340 = vst.msk [vmem:[#allocation3 + $0x178] sm:$0xff] %vm3292, %v3195
    %3341 = vst.msk [vmem:[#allocation3 + $0x180] sm:$0xff] %vm3292, %v3197
    %3342 = vst.msk [vmem:[#allocation3 + $0x188] sm:$0xff] %vm3292, %v3199
    %3343 = vst.msk [vmem:[#allocation3 + $0x190] sm:$0xff] %vm3292, %v3201
    %3344 = vst.msk [vmem:[#allocation3 + $0x198] sm:$0xff] %vm3292, %v3203
    %3345 = vst.msk [vmem:[#allocation3 + $0x1a0] sm:$0xff] %vm3292, %v3205
    %3346 = vst.msk [vmem:[#allocation3 + $0x1a8] sm:$0xff] %vm3292, %v3207
    %3347 = vst.msk [vmem:[#allocation3 + $0x1b0] sm:$0xff] %vm3292, %v3209
    %3348 = vst.msk [vmem:[#allocation3 + $0x1b8] sm:$0xff] %vm3292, %v3211
    %3349 = vst.msk [vmem:[#allocation3 + $0x1c0] sm:$0xff] %vm3292, %v3213
    %3350 = vst.msk [vmem:[#allocation3 + $0x1c8] sm:$0xff] %vm3292, %v3215
    %3351 = vst.msk [vmem:[#allocation3 + $0x1d0] sm:$0xff] %vm3292, %v3217
    %3352 = vst.msk [vmem:[#allocation3 + $0x1d8] sm:$0xff] %vm3292, %v3219
    %3353 = vst.msk [vmem:[#allocation3 + $0x1e0] sm:$0xff] %vm3292, %v3221
    %3354 = vst.msk [vmem:[#allocation3 + $0x1e8] sm:$0xff] %vm3292, %v3223
    %3355 = vst.msk [vmem:[#allocation3 + $0x1f0] sm:$0xff] %vm3292, %v3225
    %3356 = vst.msk [vmem:[#allocation3 + $0x1f8] sm:$0xff] %vm3292, %v3227
    %v3357 = vld [vmem:[%s2586 + $0x2] sm:$0xff]
    %v3358 = vld [vmem:[%s2586 + $0xa] sm:$0xff]
    %v3359 = vld [vmem:[%s2586 + $0x1a] sm:$0xff]
    %v3360 = vld [vmem:[%s2586 + $0x22] sm:$0xff]
    %v3361 = vld [vmem:[%s2586 + $0x32] sm:$0xff]
    %v3362 = vld [vmem:[%s2586 + $0x3a] sm:$0xff]
    %v3363 = vld [vmem:[%s2586 + $0x4a] sm:$0xff]
    %v3364 = vld [vmem:[%s2586 + $0x52] sm:$0xff]
    %v3365 = vld [vmem:[%s2586 + $0x62] sm:$0xff]
    %v3366 = vld [vmem:[%s2586 + $0x6a] sm:$0xff]
    %v3367 = vld [vmem:[%s2586 + $0x7a] sm:$0xff]
    %v3368 = vld [vmem:[%s2586 + $0x82] sm:$0xff]
    %v3369 = vld [vmem:[%s2586 + $0x92] sm:$0xff]
    %v3370 = vld [vmem:[%s2586 + $0x9a] sm:$0xff]
    %v3371 = vld [vmem:[%s2586 + $0xaa] sm:$0xff]
    %v3372 = vld [vmem:[%s2586 + $0xb2] sm:$0xff]
    %v3373 = vld [vmem:[%s2586 + $0xc2] sm:$0xff]
    %v3374 = vld [vmem:[%s2586 + $0xca] sm:$0xff]
    %v3375 = vld [vmem:[%s2586 + $0xda] sm:$0xff]
    %v3376 = vld [vmem:[%s2586 + $0xe2] sm:$0xff]
    %v3377 = vld [vmem:[%s2586 + $0xf2] sm:$0xff]
    %v3378 = vld [vmem:[%s2586 + $0xfa] sm:$0xff]
    %v3379 = vld [vmem:[%s2586 + $0x10a] sm:$0xff]
    %v3380 = vld [vmem:[%s2586 + $0x112] sm:$0xff]
    %v3381 = vld [vmem:[%s2586 + $0x122] sm:$0xff]
    %v3382 = vld [vmem:[%s2586 + $0x12a] sm:$0xff]
    %v3383 = vld [vmem:[%s2586 + $0x13a] sm:$0xff]
    %v3384 = vld [vmem:[%s2586 + $0x142] sm:$0xff]
    %v3385 = vld [vmem:[%s2586 + $0x182] sm:$0xff]
    %v3386 = vld [vmem:[%s2586 + $0x18a] sm:$0xff]
    %v3387 = vld [vmem:[%s2586 + $0x19a] sm:$0xff]
    %v3388 = vld [vmem:[%s2586 + $0x1a2] sm:$0xff]
    %v3389 = vld [vmem:[%s2586 + $0x1b2] sm:$0xff]
    %v3390 = vld [vmem:[%s2586 + $0x1ba] sm:$0xff]
    %v3391 = vld [vmem:[%s2586 + $0x1ca] sm:$0xff]
    %v3392 = vld [vmem:[%s2586 + $0x1d2] sm:$0xff]
    %v3393 = vld [vmem:[%s2586 + $0x1e2] sm:$0xff]
    %v3394 = vld [vmem:[%s2586 + $0x1ea] sm:$0xff]
    %v3395 = vld [vmem:[%s2586 + $0x1fa] sm:$0xff]
    %v3396 = vld [vmem:[%s2586 + $0x202] sm:$0xff]
    %v3397 = vld [vmem:[%s2586 + $0x212] sm:$0xff]
    %v3398 = vld [vmem:[%s2586 + $0x21a] sm:$0xff]
    %v3399 = vld [vmem:[%s2586 + $0x22a] sm:$0xff]
    %v3400 = vld [vmem:[%s2586 + $0x232] sm:$0xff]
    %v3401 = vld [vmem:[%s2586 + $0x242] sm:$0xff]
    %v3402 = vld [vmem:[%s2586 + $0x24a] sm:$0xff]
    %v3403 = vld [vmem:[%s2586 + $0x25a] sm:$0xff]
    %v3404 = vld [vmem:[%s2586 + $0x262] sm:$0xff]
    %v3405 = vld [vmem:[%s2586 + $0x272] sm:$0xff]
    %v3406 = vld [vmem:[%s2586 + $0x27a] sm:$0xff]
    %v3407 = vld [vmem:[%s2586 + $0x28a] sm:$0xff]
    %v3408 = vld [vmem:[%s2586 + $0x292] sm:$0xff]
    %v3409 = vld [vmem:[%s2586 + $0x2a2] sm:$0xff]
    %v3410 = vld [vmem:[%s2586 + $0x2aa] sm:$0xff]
    %v3411 = vld [vmem:[%s2586 + $0x2ba] sm:$0xff]
    %v3412 = vld [vmem:[%s2586 + $0x2c2] sm:$0xff]
    %v3413 = vld [vmem:[#allocation5 + $0x2] sm:$0xff]
    %v3414 = vld [vmem:[#allocation5 + $0xa] sm:$0xff]
    %v3415 = vld [vmem:[#allocation5 + $0x1a] sm:$0xff]
    %v3416 = vld [vmem:[#allocation5 + $0x22] sm:$0xff]
    %v3417 = vld [vmem:[#allocation5 + $0x32] sm:$0xff]
    %v3418 = vld [vmem:[#allocation5 + $0x3a] sm:$0xff]
    %v3419 = vld [vmem:[#allocation5 + $0x4a] sm:$0xff]
    %v3420 = vld [vmem:[#allocation5 + $0x52] sm:$0xff]
    %3485 = vrot.lane.b32.xlu0 %v3357, 32
    %v3486 = vpop.permute.xlu0 %3485
    %3487 = vrot.lane.b32.xlu0 %v3358, 32
    %v3488 = vpop.permute.xlu0 %3487
    %3489 = vrot.lane.b32.xlu0 %v3359, 32
    %v3490 = vpop.permute.xlu0 %3489
    %3491 = vrot.lane.b32.xlu0 %v3360, 32
    %v3492 = vpop.permute.xlu0 %3491
    %3493 = vrot.lane.b32.xlu0 %v3361, 32
    %v3494 = vpop.permute.xlu0 %3493
    %3495 = vrot.lane.b32.xlu0 %v3362, 32
    %v3496 = vpop.permute.xlu0 %3495
    %3497 = vrot.lane.b32.xlu0 %v3363, 32
    %v3498 = vpop.permute.xlu0 %3497
    %3499 = vrot.lane.b32.xlu0 %v3364, 32
    %v3500 = vpop.permute.xlu0 %3499
    %3501 = vrot.lane.b32.xlu0 %v3365, 32
    %v3502 = vpop.permute.xlu0 %3501
    %3503 = vrot.lane.b32.xlu0 %v3366, 32
    %v3504 = vpop.permute.xlu0 %3503
    %3505 = vrot.lane.b32.xlu0 %v3367, 32
    %v3506 = vpop.permute.xlu0 %3505
    %3507 = vrot.lane.b32.xlu0 %v3368, 32
    %v3508 = vpop.permute.xlu0 %3507
    %3509 = vrot.lane.b32.xlu0 %v3369, 32
    %v3510 = vpop.permute.xlu0 %3509
    %3511 = vrot.lane.b32.xlu0 %v3370, 32
    %v3512 = vpop.permute.xlu0 %3511
    %3513 = vrot.lane.b32.xlu0 %v3371, 32
    %v3514 = vpop.permute.xlu0 %3513
    %3515 = vrot.lane.b32.xlu0 %v3372, 32
    %v3516 = vpop.permute.xlu0 %3515
    %3517 = vrot.lane.b32.xlu0 %v3373, 32
    %v3518 = vpop.permute.xlu0 %3517
    %3519 = vrot.lane.b32.xlu0 %v3374, 32
    %v3520 = vpop.permute.xlu0 %3519
    %3521 = vrot.lane.b32.xlu0 %v3375, 32
    %v3522 = vpop.permute.xlu0 %3521
    %3523 = vrot.lane.b32.xlu0 %v3376, 32
    %v3524 = vpop.permute.xlu0 %3523
    %3525 = vrot.lane.b32.xlu0 %v3377, 32
    %v3526 = vpop.permute.xlu0 %3525
    %3527 = vrot.lane.b32.xlu0 %v3378, 32
    %v3528 = vpop.permute.xlu0 %3527
    %3529 = vrot.lane.b32.xlu0 %v3379, 32
    %v3530 = vpop.permute.xlu0 %3529
    %3531 = vrot.lane.b32.xlu0 %v3380, 32
    %v3532 = vpop.permute.xlu0 %3531
    %3533 = vrot.lane.b32.xlu0 %v3381, 32
    %v3534 = vpop.permute.xlu0 %3533
    %3535 = vrot.lane.b32.xlu0 %v3382, 32
    %v3536 = vpop.permute.xlu0 %3535
    %3537 = vrot.lane.b32.xlu0 %v3383, 32
    %v3538 = vpop.permute.xlu0 %3537
    %3539 = vrot.lane.b32.xlu0 %v3384, 32
    %v3540 = vpop.permute.xlu0 %3539
    %3541 = vrot.lane.b32.xlu0 %v3413, 32
    %v3542 = vpop.permute.xlu0 %3541
    %3543 = vrot.lane.b32.xlu0 %v3414, 32
    %v3544 = vpop.permute.xlu0 %3543
    %3545 = vrot.lane.b32.xlu0 %v3415, 32
    %v3546 = vpop.permute.xlu0 %3545
    %3547 = vrot.lane.b32.xlu0 %v3416, 32
    %v3548 = vpop.permute.xlu0 %3547
    %3549 = vrot.lane.b32.xlu0 %v3385, 32
    %v3550 = vpop.permute.xlu0 %3549
    %3551 = vrot.lane.b32.xlu0 %v3386, 32
    %v3552 = vpop.permute.xlu0 %3551
    %3553 = vrot.lane.b32.xlu0 %v3387, 32
    %v3554 = vpop.permute.xlu0 %3553
    %3555 = vrot.lane.b32.xlu0 %v3388, 32
    %v3556 = vpop.permute.xlu0 %3555
    %3557 = vrot.lane.b32.xlu0 %v3389, 32
    %v3558 = vpop.permute.xlu0 %3557
    %3559 = vrot.lane.b32.xlu0 %v3390, 32
    %v3560 = vpop.permute.xlu0 %3559
    %3561 = vrot.lane.b32.xlu0 %v3391, 32
    %v3562 = vpop.permute.xlu0 %3561
    %3563 = vrot.lane.b32.xlu0 %v3392, 32
    %v3564 = vpop.permute.xlu0 %3563
    %3565 = vrot.lane.b32.xlu0 %v3393, 32
    %v3566 = vpop.permute.xlu0 %3565
    %3567 = vrot.lane.b32.xlu0 %v3394, 32
    %v3568 = vpop.permute.xlu0 %3567
    %3569 = vrot.lane.b32.xlu0 %v3395, 32
    %v3570 = vpop.permute.xlu0 %3569
    %3571 = vrot.lane.b32.xlu0 %v3396, 32
    %v3572 = vpop.permute.xlu0 %3571
    %3573 = vrot.lane.b32.xlu0 %v3397, 32
    %v3574 = vpop.permute.xlu0 %3573
    %3575 = vrot.lane.b32.xlu0 %v3398, 32
    %v3576 = vpop.permute.xlu0 %3575
    %3577 = vrot.lane.b32.xlu0 %v3399, 32
    %v3578 = vpop.permute.xlu0 %3577
    %3579 = vrot.lane.b32.xlu0 %v3400, 32
    %v3580 = vpop.permute.xlu0 %3579
    %3581 = vrot.lane.b32.xlu0 %v3401, 32
    %v3582 = vpop.permute.xlu0 %3581
    %3583 = vrot.lane.b32.xlu0 %v3402, 32
    %v3584 = vpop.permute.xlu0 %3583
    %3585 = vrot.lane.b32.xlu0 %v3403, 32
    %v3586 = vpop.permute.xlu0 %3585
    %3587 = vrot.lane.b32.xlu0 %v3404, 32
    %v3588 = vpop.permute.xlu0 %3587
    %3589 = vrot.lane.b32.xlu0 %v3405, 32
    %v3590 = vpop.permute.xlu0 %3589
    %3591 = vrot.lane.b32.xlu0 %v3406, 32
    %v3592 = vpop.permute.xlu0 %3591
    %3593 = vrot.lane.b32.xlu0 %v3407, 32
    %v3594 = vpop.permute.xlu0 %3593
    %3595 = vrot.lane.b32.xlu0 %v3408, 32
    %v3596 = vpop.permute.xlu0 %3595
    %3597 = vrot.lane.b32.xlu0 %v3409, 32
    %v3598 = vpop.permute.xlu0 %3597
    %3599 = vrot.lane.b32.xlu0 %v3410, 32
    %v3600 = vpop.permute.xlu0 %3599
    %3601 = vrot.lane.b32.xlu0 %v3411, 32
    %v3602 = vpop.permute.xlu0 %3601
    %3603 = vrot.lane.b32.xlu0 %v3412, 32
    %v3604 = vpop.permute.xlu0 %3603
    %3605 = vrot.lane.b32.xlu0 %v3417, 32
    %v3606 = vpop.permute.xlu0 %3605
    %3607 = vrot.lane.b32.xlu0 %v3418, 32
    %v3608 = vpop.permute.xlu0 %3607
    %3609 = vrot.lane.b32.xlu0 %v3419, 32
    %v3610 = vpop.permute.xlu0 %3609
    %3611 = vrot.lane.b32.xlu0 %v3420, 32
    %v3612 = vpop.permute.xlu0 %3611
    %vm3677 = vcmask 294144
    %3678 = vst.msk [vmem:[#allocation3] sm:$0xff] %vm3677, %v3486
    %3679 = vst.msk [vmem:[#allocation3 + $0x8] sm:$0xff] %vm3677, %v3488
    %3680 = vst.msk [vmem:[#allocation3 + $0x10] sm:$0xff] %vm3677, %v3490
    %3681 = vst.msk [vmem:[#allocation3 + $0x18] sm:$0xff] %vm3677, %v3492
    %3682 = vst.msk [vmem:[#allocation3 + $0x20] sm:$0xff] %vm3677, %v3494
    %3683 = vst.msk [vmem:[#allocation3 + $0x28] sm:$0xff] %vm3677, %v3496
    %3684 = vst.msk [vmem:[#allocation3 + $0x30] sm:$0xff] %vm3677, %v3498
    %3685 = vst.msk [vmem:[#allocation3 + $0x38] sm:$0xff] %vm3677, %v3500
    %3686 = vst.msk [vmem:[#allocation3 + $0x40] sm:$0xff] %vm3677, %v3502
    %3687 = vst.msk [vmem:[#allocation3 + $0x48] sm:$0xff] %vm3677, %v3504
    %3688 = vst.msk [vmem:[#allocation3 + $0x50] sm:$0xff] %vm3677, %v3506
    %3689 = vst.msk [vmem:[#allocation3 + $0x58] sm:$0xff] %vm3677, %v3508
    %3690 = vst.msk [vmem:[#allocation3 + $0x60] sm:$0xff] %vm3677, %v3510
    %3691 = vst.msk [vmem:[#allocation3 + $0x68] sm:$0xff] %vm3677, %v3512
    %3692 = vst.msk [vmem:[#allocation3 + $0x70] sm:$0xff] %vm3677, %v3514
    %3693 = vst.msk [vmem:[#allocation3 + $0x78] sm:$0xff] %vm3677, %v3516
    %3694 = vst.msk [vmem:[#allocation3 + $0x80] sm:$0xff] %vm3677, %v3518
    %3695 = vst.msk [vmem:[#allocation3 + $0x88] sm:$0xff] %vm3677, %v3520
    %3696 = vst.msk [vmem:[#allocation3 + $0x90] sm:$0xff] %vm3677, %v3522
    %3697 = vst.msk [vmem:[#allocation3 + $0x98] sm:$0xff] %vm3677, %v3524
    %3698 = vst.msk [vmem:[#allocation3 + $0xa0] sm:$0xff] %vm3677, %v3526
    %3699 = vst.msk [vmem:[#allocation3 + $0xa8] sm:$0xff] %vm3677, %v3528
    %3700 = vst.msk [vmem:[#allocation3 + $0xb0] sm:$0xff] %vm3677, %v3530
    %3701 = vst.msk [vmem:[#allocation3 + $0xb8] sm:$0xff] %vm3677, %v3532
    %3702 = vst.msk [vmem:[#allocation3 + $0xc0] sm:$0xff] %vm3677, %v3534
    %3703 = vst.msk [vmem:[#allocation3 + $0xc8] sm:$0xff] %vm3677, %v3536
    %3704 = vst.msk [vmem:[#allocation3 + $0xd0] sm:$0xff] %vm3677, %v3538
    %3705 = vst.msk [vmem:[#allocation3 + $0xd8] sm:$0xff] %vm3677, %v3540
    %3706 = vst.msk [vmem:[#allocation3 + $0xe0] sm:$0xff] %vm3677, %v3542
    %3707 = vst.msk [vmem:[#allocation3 + $0xe8] sm:$0xff] %vm3677, %v3544
    %3708 = vst.msk [vmem:[#allocation3 + $0xf0] sm:$0xff] %vm3677, %v3546
    %3709 = vst.msk [vmem:[#allocation3 + $0xf8] sm:$0xff] %vm3677, %v3548
    %3710 = vst.msk [vmem:[#allocation3 + $0x100] sm:$0xff] %vm3677, %v3550
    %3711 = vst.msk [vmem:[#allocation3 + $0x108] sm:$0xff] %vm3677, %v3552
    %3712 = vst.msk [vmem:[#allocation3 + $0x110] sm:$0xff] %vm3677, %v3554
    %3713 = vst.msk [vmem:[#allocation3 + $0x118] sm:$0xff] %vm3677, %v3556
    %3714 = vst.msk [vmem:[#allocation3 + $0x120] sm:$0xff] %vm3677, %v3558
    %3715 = vst.msk [vmem:[#allocation3 + $0x128] sm:$0xff] %vm3677, %v3560
    %3716 = vst.msk [vmem:[#allocation3 + $0x130] sm:$0xff] %vm3677, %v3562
    %3717 = vst.msk [vmem:[#allocation3 + $0x138] sm:$0xff] %vm3677, %v3564
    %3718 = vst.msk [vmem:[#allocation3 + $0x140] sm:$0xff] %vm3677, %v3566
    %3719 = vst.msk [vmem:[#allocation3 + $0x148] sm:$0xff] %vm3677, %v3568
    %3720 = vst.msk [vmem:[#allocation3 + $0x150] sm:$0xff] %vm3677, %v3570
    %3721 = vst.msk [vmem:[#allocation3 + $0x158] sm:$0xff] %vm3677, %v3572
    %3722 = vst.msk [vmem:[#allocation3 + $0x160] sm:$0xff] %vm3677, %v3574
    %3723 = vst.msk [vmem:[#allocation3 + $0x168] sm:$0xff] %vm3677, %v3576
    %3724 = vst.msk [vmem:[#allocation3 + $0x170] sm:$0xff] %vm3677, %v3578
    %3725 = vst.msk [vmem:[#allocation3 + $0x178] sm:$0xff] %vm3677, %v3580
    %3726 = vst.msk [vmem:[#allocation3 + $0x180] sm:$0xff] %vm3677, %v3582
    %3727 = vst.msk [vmem:[#allocation3 + $0x188] sm:$0xff] %vm3677, %v3584
    %3728 = vst.msk [vmem:[#allocation3 + $0x190] sm:$0xff] %vm3677, %v3586
    %3729 = vst.msk [vmem:[#allocation3 + $0x198] sm:$0xff] %vm3677, %v3588
    %3730 = vst.msk [vmem:[#allocation3 + $0x1a0] sm:$0xff] %vm3677, %v3590
    %3731 = vst.msk [vmem:[#allocation3 + $0x1a8] sm:$0xff] %vm3677, %v3592
    %3732 = vst.msk [vmem:[#allocation3 + $0x1b0] sm:$0xff] %vm3677, %v3594
    %3733 = vst.msk [vmem:[#allocation3 + $0x1b8] sm:$0xff] %vm3677, %v3596
    %3734 = vst.msk [vmem:[#allocation3 + $0x1c0] sm:$0xff] %vm3677, %v3598
    %3735 = vst.msk [vmem:[#allocation3 + $0x1c8] sm:$0xff] %vm3677, %v3600
    %3736 = vst.msk [vmem:[#allocation3 + $0x1d0] sm:$0xff] %vm3677, %v3602
    %3737 = vst.msk [vmem:[#allocation3 + $0x1d8] sm:$0xff] %vm3677, %v3604
    %3738 = vst.msk [vmem:[#allocation3 + $0x1e0] sm:$0xff] %vm3677, %v3606
    %3739 = vst.msk [vmem:[#allocation3 + $0x1e8] sm:$0xff] %vm3677, %v3608
    %3740 = vst.msk [vmem:[#allocation3 + $0x1f0] sm:$0xff] %vm3677, %v3610
    %3741 = vst.msk [vmem:[#allocation3 + $0x1f8] sm:$0xff] %vm3677, %v3612
    %v3742 = vld [vmem:[#allocation3] sm:$0xff]
    %v3743 = vld [vmem:[#allocation3 + $0x8] sm:$0xff]
    %v3744 = vld [vmem:[#allocation3 + $0x10] sm:$0xff]
    %v3745 = vld [vmem:[#allocation3 + $0x18] sm:$0xff]
    %v3746 = vld [vmem:[#allocation3 + $0x20] sm:$0xff]
    %v3747 = vld [vmem:[#allocation3 + $0x28] sm:$0xff]
    %v3748 = vld [vmem:[#allocation3 + $0x30] sm:$0xff]
    %v3749 = vld [vmem:[#allocation3 + $0x38] sm:$0xff]
    %v3750 = vld [vmem:[#allocation3 + $0x40] sm:$0xff]
    %v3751 = vld [vmem:[#allocation3 + $0x48] sm:$0xff]
    %v3752 = vld [vmem:[#allocation3 + $0x50] sm:$0xff]
    %v3753 = vld [vmem:[#allocation3 + $0x58] sm:$0xff]
    %v3754 = vld [vmem:[#allocation3 + $0x60] sm:$0xff]
    %v3755 = vld [vmem:[#allocation3 + $0x68] sm:$0xff]
    %v3756 = vld [vmem:[#allocation3 + $0x70] sm:$0xff]
    %v3757 = vld [vmem:[#allocation3 + $0x78] sm:$0xff]
    %v3758 = vld [vmem:[#allocation3 + $0x80] sm:$0xff]
    %v3759 = vld [vmem:[#allocation3 + $0x88] sm:$0xff]
    %v3760 = vld [vmem:[#allocation3 + $0x90] sm:$0xff]
    %v3761 = vld [vmem:[#allocation3 + $0x98] sm:$0xff]
    %v3762 = vld [vmem:[#allocation3 + $0xa0] sm:$0xff]
    %v3763 = vld [vmem:[#allocation3 + $0xa8] sm:$0xff]
    %v3764 = vld [vmem:[#allocation3 + $0xb0] sm:$0xff]
    %v3765 = vld [vmem:[#allocation3 + $0xb8] sm:$0xff]
    %v3766 = vld [vmem:[#allocation3 + $0xc0] sm:$0xff]
    %v3767 = vld [vmem:[#allocation3 + $0xc8] sm:$0xff]
    %v3768 = vld [vmem:[#allocation3 + $0xd0] sm:$0xff]
    %v3769 = vld [vmem:[#allocation3 + $0xd8] sm:$0xff]
    %v3770 = vld [vmem:[#allocation3 + $0xe0] sm:$0xff]
    %v3771 = vld [vmem:[#allocation3 + $0xe8] sm:$0xff]
    %v3772 = vld [vmem:[#allocation3 + $0xf0] sm:$0xff]
    %v3773 = vld [vmem:[#allocation3 + $0xf8] sm:$0xff]
    %v3774 = vld [vmem:[#allocation3 + $0x100] sm:$0xff]
    %v3775 = vld [vmem:[#allocation3 + $0x108] sm:$0xff]
    %v3776 = vld [vmem:[#allocation3 + $0x110] sm:$0xff]
    %v3777 = vld [vmem:[#allocation3 + $0x118] sm:$0xff]
    %v3778 = vld [vmem:[#allocation3 + $0x120] sm:$0xff]
    %v3779 = vld [vmem:[#allocation3 + $0x128] sm:$0xff]
    %v3780 = vld [vmem:[#allocation3 + $0x130] sm:$0xff]
    %v3781 = vld [vmem:[#allocation3 + $0x138] sm:$0xff]
    %v3782 = vld [vmem:[#allocation3 + $0x140] sm:$0xff]
    %v3783 = vld [vmem:[#allocation3 + $0x148] sm:$0xff]
    %v3784 = vld [vmem:[#allocation3 + $0x150] sm:$0xff]
    %v3785 = vld [vmem:[#allocation3 + $0x158] sm:$0xff]
    %v3786 = vld [vmem:[#allocation3 + $0x160] sm:$0xff]
    %v3787 = vld [vmem:[#allocation3 + $0x168] sm:$0xff]
    %v3788 = vld [vmem:[#allocation3 + $0x170] sm:$0xff]
    %v3789 = vld [vmem:[#allocation3 + $0x178] sm:$0xff]
    %v3790 = vld [vmem:[#allocation3 + $0x180] sm:$0xff]
    %v3791 = vld [vmem:[#allocation3 + $0x188] sm:$0xff]
    %v3792 = vld [vmem:[#allocation3 + $0x190] sm:$0xff]
    %v3793 = vld [vmem:[#allocation3 + $0x198] sm:$0xff]
    %v3794 = vld [vmem:[#allocation3 + $0x1a0] sm:$0xff]
    %v3795 = vld [vmem:[#allocation3 + $0x1a8] sm:$0xff]
    %v3796 = vld [vmem:[#allocation3 + $0x1b0] sm:$0xff]
    %v3797 = vld [vmem:[#allocation3 + $0x1b8] sm:$0xff]
    %v3798 = vld [vmem:[#allocation3 + $0x1c0] sm:$0xff]
    %v3799 = vld [vmem:[#allocation3 + $0x1c8] sm:$0xff]
    %v3800 = vld [vmem:[#allocation3 + $0x1d0] sm:$0xff]
    %v3801 = vld [vmem:[#allocation3 + $0x1d8] sm:$0xff]
    %v3802 = vld [vmem:[#allocation3 + $0x1e0] sm:$0xff]
    %v3803 = vld [vmem:[#allocation3 + $0x1e8] sm:$0xff]
    %v3804 = vld [vmem:[#allocation3 + $0x1f0] sm:$0xff]
    %v3805 = vld [vmem:[#allocation3 + $0x1f8] sm:$0xff]
    %v3806 = vld [vmem:[%s2] sm:$0xff]
    %v3807 = vld [vmem:[%s2 + $0x8] sm:$0xff]
    %v3808 = vld [vmem:[%s2 + $0x10] sm:$0xff]
    %v3809 = vld [vmem:[%s2 + $0x18] sm:$0xff]
    %v3810 = vld [vmem:[%s2 + $0x20] sm:$0xf]
    %v3811 = vld [vmem:[%s3] sm:$0x1]
    %v3813 = vlaneseq
    %v3814 = vshrl.u32 %v3813, 7
    %v3815 = vsub.s32 0, %v3814
    %v3816 = vrot.slane %v3811, %v3815
    %vm3818 = vcmask 293888
    %v3820 = vsel %vm3818, %v3742, 0
    %v3823 = vsel %vm3818, %v3743, 0
    %v3826 = vsel %vm3818, %v3744, 0
    %v3829 = vsel %vm3818, %v3745, 0
    %v3832 = vsel %vm3818, %v3746, 0
    %v3835 = vsel %vm3818, %v3747, 0
    %v3838 = vsel %vm3818, %v3748, 0
    %v3841 = vsel %vm3818, %v3749, 0
    %v3844 = vsel %vm3818, %v3750, 0
    %v3847 = vsel %vm3818, %v3751, 0
    %v3850 = vsel %vm3818, %v3752, 0
    %v3853 = vsel %vm3818, %v3753, 0
    %v3856 = vsel %vm3818, %v3754, 0
    %v3859 = vsel %vm3818, %v3755, 0
    %v3862 = vsel %vm3818, %v3756, 0
    %v3865 = vsel %vm3818, %v3757, 0
    %v3868 = vsel %vm3818, %v3758, 0
    %v3871 = vsel %vm3818, %v3759, 0
    %v3874 = vsel %vm3818, %v3760, 0
    %v3877 = vsel %vm3818, %v3761, 0
    %v3880 = vsel %vm3818, %v3762, 0
    %v3883 = vsel %vm3818, %v3763, 0
    %v3886 = vsel %vm3818, %v3764, 0
    %v3889 = vsel %vm3818, %v3765, 0
    %v3892 = vsel %vm3818, %v3766, 0
    %v3895 = vsel %vm3818, %v3767, 0
    %v3898 = vsel %vm3818, %v3768, 0
    %v3901 = vsel %vm3818, %v3769, 0
    %v3904 = vsel %vm3818, %v3770, 0
    %v3907 = vsel %vm3818, %v3771, 0
    %v3910 = vsel %vm3818, %v3772, 0
    %v3913 = vsel %vm3818, %v3773, 0
    %v3916 = vsel %vm3818, %v3774, 0
    %v3919 = vsel %vm3818, %v3775, 0
    %v3922 = vsel %vm3818, %v3776, 0
    %v3925 = vsel %vm3818, %v3777, 0
    %v3928 = vsel %vm3818, %v3778, 0
    %v3931 = vsel %vm3818, %v3779, 0
    %v3934 = vsel %vm3818, %v3780, 0
    %v3937 = vsel %vm3818, %v3781, 0
    %v3940 = vsel %vm3818, %v3782, 0
    %v3943 = vsel %vm3818, %v3783, 0
    %v3946 = vsel %vm3818, %v3784, 0
    %v3949 = vsel %vm3818, %v3785, 0
    %v3952 = vsel %vm3818, %v3786, 0
    %v3955 = vsel %vm3818, %v3787, 0
    %v3958 = vsel %vm3818, %v3788, 0
    %v3961 = vsel %vm3818, %v3789, 0
    %v3964 = vsel %vm3818, %v3790, 0
    %v3967 = vsel %vm3818, %v3791, 0
    %v3970 = vsel %vm3818, %v3792, 0
    %v3973 = vsel %vm3818, %v3793, 0
    %v3976 = vsel %vm3818, %v3794, 0
    %v3979 = vsel %vm3818, %v3795, 0
    %v3982 = vsel %vm3818, %v3796, 0
    %v3985 = vsel %vm3818, %v3797, 0
    %v3988 = vsel %vm3818, %v3798, 0
    %v3991 = vsel %vm3818, %v3799, 0
    %v3994 = vsel %vm3818, %v3800, 0
    %v3997 = vsel %vm3818, %v3801, 0
    %v4000 = vsel %vm3818, %v3802, 0
    %v4003 = vsel %vm3818, %v3803, 0
    %v4006 = vsel %vm3818, %v3804, 0
    %v4009 = vsel %vm3818, %v3805, 0
    %vm4011 = vcmask 1043456
    %v4013 = vsel %vm4011, %v3810, 0
    %4015 = vmatprep.subr.mxu0 0.0
    %4016 = vmatpush1.msra.mxu0 %v3806
    %4017 = vmatprep.subr.mxu0 0.0
    %4018 = vmatpush1.msra.mxu0 %v3807
    %4019 = vmatprep.subr.mxu0 0.0
    %4020 = vmatpush1.msra.mxu0 %v3808
    %4021 = vmatprep.subr.mxu0 0.0
    %4022 = vmatpush1.msra.mxu0 %v3809
    %4023 = vmatprep.subr.mxu0 0.0
    %4024 = vmatpush1.msra.mxu0 %v4013
    %4025 = vmatprep.subr.mxu0 0.0
    %4026 = vmatpush1.msra.mxu0 0.0
    %4027 = vmatprep.subr.mxu0 0.0
    %4028 = vmatpush1.msra.mxu0 0.0
    %4029 = vmatprep.subr.mxu0 0.0
    %4030 = vmatpush1.msra.mxu0 0.0
    %4031 = vmatprep.subr.mxu0 0.0
    %4032 = vmatpush1.msra.mxu0 0.0
    %4033 = vmatprep.subr.mxu0 0.0
    %4034 = vmatpush1.msra.mxu0 0.0
    %4035 = vmatprep.subr.mxu0 0.0
    %4036 = vmatpush1.msra.mxu0 0.0
    %4037 = vmatprep.subr.mxu0 0.0
    %4038 = vmatpush1.msra.mxu0 0.0
    %4039 = vmatprep.subr.mxu0 0.0
    %4040 = vmatpush1.msra.mxu0 0.0
    %4041 = vmatprep.subr.mxu0 0.0
    %4042 = vmatpush1.msra.mxu0 0.0
    %4043 = vmatprep.subr.mxu0 0.0
    %4044 = vmatpush1.msra.mxu0 0.0
    %4045 = vmatprep.subr.mxu0 0.0
    %4046 = vmatpush1.msra.mxu0 0.0
    %4047 = vmatprep.subr.mxu0 0.0
    %4048 = vmatpush1.msra.mxu0 0.0
    %4049 = vmatprep.subr.mxu0 0.0
    %4050 = vmatpush1.msra.mxu0 0.0
    %4051 = vmatprep.subr.mxu0 0.0
    %4052 = vmatpush1.msra.mxu0 0.0
    %4053 = vmatprep.subr.mxu0 0.0
    %4054 = vmatpush1.msra.mxu0 0.0
    %4055 = vmatprep.subr.mxu0 0.0
    %4056 = vmatpush1.msra.mxu0 0.0
    %4057 = vmatprep.subr.mxu0 0.0
    %4058 = vmatpush1.msra.mxu0 0.0
    %4059 = vmatprep.subr.mxu0 0.0
    %4060 = vmatpush1.msra.mxu0 0.0
    %4061 = vmatprep.subr.mxu0 0.0
    %4062 = vmatpush1.msra.mxu0 0.0
    %4063 = vmatprep.subr.mxu0 0.0
    %4064 = vmatpush1.msra.mxu0 0.0
    %4065 = vmatprep.subr.mxu0 0.0
    %4066 = vmatpush1.msra.mxu0 0.0
    %4067 = vmatprep.subr.mxu0 0.0
    %4068 = vmatpush1.msra.mxu0 0.0
    %4069 = vmatprep.subr.mxu0 0.0
    %4070 = vmatpush1.msra.mxu0 0.0
    %4071 = vmatprep.subr.mxu0 0.0
    %4072 = vmatpush1.msra.mxu0 0.0
    %4073 = vmatprep.subr.mxu0 0.0
    %4074 = vmatpush1.msra.mxu0 0.0
    %4075 = vmatprep.subr.mxu0 0.0
    %4076 = vmatpush1.msra.mxu0 0.0
    %4077 = vmatprep.subr.mxu0 0.0
    %4078 = vmatpush1.msra.mxu0 0.0
    %4079 = vmatprep.mubr.f32.mxu0 0.0
    %4080 = vmatmul.mubr.f32.gmra.mrb[0].mxu0 %v3820
    %v4081 = vpop.f32.mrb[0].mxu0
    %v4082 = vadd.f32 %v3816, %v4081
    %v4083 = vpop.f32.mrb[0].mxu0
    %4084 = vmatprep.mubr.f32.mxu0 0.0
    %4085 = vmatmul.mubr.f32.gmra.mrb[0].mxu0 %v3823
    %v4086 = vpop.f32.mrb[0].mxu0
    %v4087 = vadd.f32 %v3816, %v4086
    %v4088 = vpop.f32.mrb[0].mxu0
    %4089 = vmatprep.mubr.f32.mxu0 0.0
    %4090 = vmatmul.mubr.f32.gmra.mrb[0].mxu0 %v3826
    %v4091 = vpop.f32.mrb[0].mxu0
    %v4092 = vadd.f32 %v3816, %v4091
    %v4093 = vpop.f32.mrb[0].mxu0
    %4094 = vmatprep.mubr.f32.mxu0 0.0
    %4095 = vmatmul.mubr.f32.gmra.mrb[0].mxu0 %v3829
    %v4096 = vpop.f32.mrb[0].mxu0
    %v4097 = vadd.f32 %v3816, %v4096
    %v4098 = vpop.f32.mrb[0].mxu0
    %4099 = vmatprep.mubr.f32.mxu0 0.0
    %4100 = vmatmul.mubr.f32.gmra.mrb[0].mxu0 %v3832
    %v4101 = vpop.f32.mrb[0].mxu0
    %v4102 = vadd.f32 %v3816, %v4101
    %v4103 = vpop.f32.mrb[0].mxu0
    %4104 = vmatprep.mubr.f32.mxu0 0.0
    %4105 = vmatmul.mubr.f32.gmra.mrb[0].mxu0 %v3835
    %v4106 = vpop.f32.mrb[0].mxu0
    %v4107 = vadd.f32 %v3816, %v4106
    %v4108 = vpop.f32.mrb[0].mxu0
    %4109 = vmatprep.mubr.f32.mxu0 0.0
    %4110 = vmatmul.mubr.f32.gmra.mrb[0].mxu0 %v3838
    %v4111 = vpop.f32.mrb[0].mxu0
    %v4112 = vadd.f32 %v3816, %v4111
    %v4113 = vpop.f32.mrb[0].mxu0
    %4114 = vmatprep.mubr.f32.mxu0 0.0
    %4115 = vmatmul.mubr.f32.gmra.mrb[0].mxu0 %v3841
    %v4116 = vpop.f32.mrb[0].mxu0
    %v4117 = vadd.f32 %v3816, %v4116
    %v4118 = vpop.f32.mrb[0].mxu0
    %4119 = vmatprep.mubr.f32.mxu0 0.0
    %4120 = vmatmul.mubr.f32.gmra.mrb[0].mxu0 %v3844
    %v4121 = vpop.f32.mrb[0].mxu0
    %v4122 = vadd.f32 %v3816, %v4121
    %v4123 = vpop.f32.mrb[0].mxu0
    %4124 = vmatprep.mubr.f32.mxu0 0.0
    %4125 = vmatmul.mubr.f32.gmra.mrb[0].mxu0 %v3847
    %v4126 = vpop.f32.mrb[0].mxu0
    %v4127 = vadd.f32 %v3816, %v4126
    %v4128 = vpop.f32.mrb[0].mxu0
    %4129 = vmatprep.mubr.f32.mxu0 0.0
    %4130 = vmatmul.mubr.f32.gmra.mrb[0].mxu0 %v3850
    %v4131 = vpop.f32.mrb[0].mxu0
    %v4132 = vadd.f32 %v3816, %v4131
    %v4133 = vpop.f32.mrb[0].mxu0
    %4134 = vmatprep.mubr.f32.mxu0 0.0
    %4135 = vmatmul.mubr.f32.gmra.mrb[0].mxu0 %v3853
    %v4136 = vpop.f32.mrb[0].mxu0
    %v4137 = vadd.f32 %v3816, %v4136
    %v4138 = vpop.f32.mrb[0].mxu0
    %4139 = vmatprep.mubr.f32.mxu0 0.0
    %4140 = vmatmul.mubr.f32.gmra.mrb[0].mxu0 %v3856
    %v4141 = vpop.f32.mrb[0].mxu0
    %v4142 = vadd.f32 %v3816, %v4141
    %v4143 = vpop.f32.mrb[0].mxu0
    %4144 = vmatprep.mubr.f32.mxu0 0.0
    %4145 = vmatmul.mubr.f32.gmra.mrb[0].mxu0 %v3859
    %v4146 = vpop.f32.mrb[0].mxu0
    %v4147 = vadd.f32 %v3816, %v4146
    %v4148 = vpop.f32.mrb[0].mxu0
    %4149 = vmatprep.mubr.f32.mxu0 0.0
    %4150 = vmatmul.mubr.f32.gmra.mrb[0].mxu0 %v3862
    %v4151 = vpop.f32.mrb[0].mxu0
    %v4152 = vadd.f32 %v3816, %v4151
    %v4153 = vpop.f32.mrb[0].mxu0
    %4154 = vmatprep.mubr.f32.mxu0 0.0
    %4155 = vmatmul.mubr.f32.gmra.mrb[0].mxu0 %v3865
    %v4156 = vpop.f32.mrb[0].mxu0
    %v4157 = vadd.f32 %v3816, %v4156
    %v4158 = vpop.f32.mrb[0].mxu0
    %4159 = vmatprep.mubr.f32.mxu0 0.0
    %4160 = vmatmul.mubr.f32.gmra.mrb[0].mxu0 %v3868
    %v4161 = vpop.f32.mrb[0].mxu0
    %v4162 = vadd.f32 %v3816, %v4161
    %v4163 = vpop.f32.mrb[0].mxu0
    %4164 = vmatprep.mubr.f32.mxu0 0.0
    %4165 = vmatmul.mubr.f32.gmra.mrb[0].mxu0 %v3871
    %v4166 = vpop.f32.mrb[0].mxu0
    %v4167 = vadd.f32 %v3816, %v4166
    %v4168 = vpop.f32.mrb[0].mxu0
    %4169 = vmatprep.mubr.f32.mxu0 0.0
    %4170 = vmatmul.mubr.f32.gmra.mrb[0].mxu0 %v3874
    %v4171 = vpop.f32.mrb[0].mxu0
    %v4172 = vadd.f32 %v3816, %v4171
    %v4173 = vpop.f32.mrb[0].mxu0
    %4174 = vmatprep.mubr.f32.mxu0 0.0
    %4175 = vmatmul.mubr.f32.gmra.mrb[0].mxu0 %v3877
    %v4176 = vpop.f32.mrb[0].mxu0
    %v4177 = vadd.f32 %v3816, %v4176
    %v4178 = vpop.f32.mrb[0].mxu0
    %4179 = vmatprep.mubr.f32.mxu0 0.0
    %4180 = vmatmul.mubr.f32.gmra.mrb[0].mxu0 %v3880
    %v4181 = vpop.f32.mrb[0].mxu0
    %v4182 = vadd.f32 %v3816, %v4181
    %v4183 = vpop.f32.mrb[0].mxu0
    %4184 = vmatprep.mubr.f32.mxu0 0.0
    %4185 = vmatmul.mubr.f32.gmra.mrb[0].mxu0 %v3883
    %v4186 = vpop.f32.mrb[0].mxu0
    %v4187 = vadd.f32 %v3816, %v4186
    %v4188 = vpop.f32.mrb[0].mxu0
    %4189 = vmatprep.mubr.f32.mxu0 0.0
    %4190 = vmatmul.mubr.f32.gmra.mrb[0].mxu0 %v3886
    %v4191 = vpop.f32.mrb[0].mxu0
    %v4192 = vadd.f32 %v3816, %v4191
    %v4193 = vpop.f32.mrb[0].mxu0
    %4194 = vmatprep.mubr.f32.mxu0 0.0
    %4195 = vmatmul.mubr.f32.gmra.mrb[0].mxu0 %v3889
    %v4196 = vpop.f32.mrb[0].mxu0
    %v4197 = vadd.f32 %v3816, %v4196
    %v4198 = vpop.f32.mrb[0].mxu0
    %4199 = vmatprep.mubr.f32.mxu0 0.0
    %4200 = vmatmul.mubr.f32.gmra.mrb[0].mxu0 %v3892
    %v4201 = vpop.f32.mrb[0].mxu0
    %v4202 = vadd.f32 %v3816, %v4201
    %v4203 = vpop.f32.mrb[0].mxu0
    %4204 = vmatprep.mubr.f32.mxu0 0.0
    %4205 = vmatmul.mubr.f32.gmra.mrb[0].mxu0 %v3895
    %v4206 = vpop.f32.mrb[0].mxu0
    %v4207 = vadd.f32 %v3816, %v4206
    %v4208 = vpop.f32.mrb[0].mxu0
    %4209 = vmatprep.mubr.f32.mxu0 0.0
    %4210 = vmatmul.mubr.f32.gmra.mrb[0].mxu0 %v3898
    %v4211 = vpop.f32.mrb[0].mxu0
    %v4212 = vadd.f32 %v3816, %v4211
    %v4213 = vpop.f32.mrb[0].mxu0
    %4214 = vmatprep.mubr.f32.mxu0 0.0
    %4215 = vmatmul.mubr.f32.gmra.mrb[0].mxu0 %v3901
    %v4216 = vpop.f32.mrb[0].mxu0
    %v4217 = vadd.f32 %v3816, %v4216
    %v4218 = vpop.f32.mrb[0].mxu0
    %4219 = vmatprep.mubr.f32.mxu0 0.0
    %4220 = vmatmul.mubr.f32.gmra.mrb[0].mxu0 %v3904
    %v4221 = vpop.f32.mrb[0].mxu0
    %v4222 = vadd.f32 %v3816, %v4221
    %v4223 = vpop.f32.mrb[0].mxu0
    %4224 = vmatprep.mubr.f32.mxu0 0.0
    %4225 = vmatmul.mubr.f32.gmra.mrb[0].mxu0 %v3907
    %v4226 = vpop.f32.mrb[0].mxu0
    %v4227 = vadd.f32 %v3816, %v4226
    %v4228 = vpop.f32.mrb[0].mxu0
    %4229 = vmatprep.mubr.f32.mxu0 0.0
    %4230 = vmatmul.mubr.f32.gmra.mrb[0].mxu0 %v3910
    %v4231 = vpop.f32.mrb[0].mxu0
    %v4232 = vadd.f32 %v3816, %v4231
    %v4233 = vpop.f32.mrb[0].mxu0
    %4234 = vmatprep.mubr.f32.mxu0 0.0
    %4235 = vmatmul.mubr.f32.gmra.mrb[0].mxu0 %v3913
    %v4236 = vpop.f32.mrb[0].mxu0
    %v4237 = vadd.f32 %v3816, %v4236
    %v4238 = vpop.f32.mrb[0].mxu0
    %4239 = vmatprep.mubr.f32.mxu0 0.0
    %4240 = vmatmul.mubr.f32.gmra.mrb[0].mxu0 %v3916
    %v4241 = vpop.f32.mrb[0].mxu0
    %v4242 = vadd.f32 %v3816, %v4241
    %v4243 = vpop.f32.mrb[0].mxu0
    %4244 = vmatprep.mubr.f32.mxu0 0.0
    %4245 = vmatmul.mubr.f32.gmra.mrb[0].mxu0 %v3919
    %v4246 = vpop.f32.mrb[0].mxu0
    %v4247 = vadd.f32 %v3816, %v4246
    %v4248 = vpop.f32.mrb[0].mxu0
    %4249 = vmatprep.mubr.f32.mxu0 0.0
    %4250 = vmatmul.mubr.f32.gmra.mrb[0].mxu0 %v3922
    %v4251 = vpop.f32.mrb[0].mxu0
    %v4252 = vadd.f32 %v3816, %v4251
    %v4253 = vpop.f32.mrb[0].mxu0
    %4254 = vmatprep.mubr.f32.mxu0 0.0
    %4255 = vmatmul.mubr.f32.gmra.mrb[0].mxu0 %v3925
    %v4256 = vpop.f32.mrb[0].mxu0
    %v4257 = vadd.f32 %v3816, %v4256
    %v4258 = vpop.f32.mrb[0].mxu0
    %4259 = vmatprep.mubr.f32.mxu0 0.0
    %4260 = vmatmul.mubr.f32.gmra.mrb[0].mxu0 %v3928
    %v4261 = vpop.f32.mrb[0].mxu0
    %v4262 = vadd.f32 %v3816, %v4261
    %v4263 = vpop.f32.mrb[0].mxu0
    %4264 = vmatprep.mubr.f32.mxu0 0.0
    %4265 = vmatmul.mubr.f32.gmra.mrb[0].mxu0 %v3931
    %v4266 = vpop.f32.mrb[0].mxu0
    %v4267 = vadd.f32 %v3816, %v4266
    %v4268 = vpop.f32.mrb[0].mxu0
    %4269 = vmatprep.mubr.f32.mxu0 0.0
    %4270 = vmatmul.mubr.f32.gmra.mrb[0].mxu0 %v3934
    %v4271 = vpop.f32.mrb[0].mxu0
    %v4272 = vadd.f32 %v3816, %v4271
    %v4273 = vpop.f32.mrb[0].mxu0
    %4274 = vmatprep.mubr.f32.mxu0 0.0
    %4275 = vmatmul.mubr.f32.gmra.mrb[0].mxu0 %v3937
    %v4276 = vpop.f32.mrb[0].mxu0
    %v4277 = vadd.f32 %v3816, %v4276
    %v4278 = vpop.f32.mrb[0].mxu0
    %4279 = vmatprep.mubr.f32.mxu0 0.0
    %4280 = vmatmul.mubr.f32.gmra.mrb[0].mxu0 %v3940
    %v4281 = vpop.f32.mrb[0].mxu0
    %v4282 = vadd.f32 %v3816, %v4281
    %v4283 = vpop.f32.mrb[0].mxu0
    %4284 = vmatprep.mubr.f32.mxu0 0.0
    %4285 = vmatmul.mubr.f32.gmra.mrb[0].mxu0 %v3943
    %v4286 = vpop.f32.mrb[0].mxu0
    %v4287 = vadd.f32 %v3816, %v4286
    %v4288 = vpop.f32.mrb[0].mxu0
    %4289 = vmatprep.mubr.f32.mxu0 0.0
    %4290 = vmatmul.mubr.f32.gmra.mrb[0].mxu0 %v3946
    %v4291 = vpop.f32.mrb[0].mxu0
    %v4292 = vadd.f32 %v3816, %v4291
    %v4293 = vpop.f32.mrb[0].mxu0
    %4294 = vmatprep.mubr.f32.mxu0 0.0
    %4295 = vmatmul.mubr.f32.gmra.mrb[0].mxu0 %v3949
    %v4296 = vpop.f32.mrb[0].mxu0
    %v4297 = vadd.f32 %v3816, %v4296
    %v4298 = vpop.f32.mrb[0].mxu0
    %4299 = vmatprep.mubr.f32.mxu0 0.0
    %4300 = vmatmul.mubr.f32.gmra.mrb[0].mxu0 %v3952
    %v4301 = vpop.f32.mrb[0].mxu0
    %v4302 = vadd.f32 %v3816, %v4301
    %v4303 = vpop.f32.mrb[0].mxu0
    %4304 = vmatprep.mubr.f32.mxu0 0.0
    %4305 = vmatmul.mubr.f32.gmra.mrb[0].mxu0 %v3955
    %v4306 = vpop.f32.mrb[0].mxu0
    %v4307 = vadd.f32 %v3816, %v4306
    %v4308 = vpop.f32.mrb[0].mxu0
    %4309 = vmatprep.mubr.f32.mxu0 0.0
    %4310 = vmatmul.mubr.f32.gmra.mrb[0].mxu0 %v3958
    %v4311 = vpop.f32.mrb[0].mxu0
    %v4312 = vadd.f32 %v3816, %v4311
    %v4313 = vpop.f32.mrb[0].mxu0
    %4314 = vmatprep.mubr.f32.mxu0 0.0
    %4315 = vmatmul.mubr.f32.gmra.mrb[0].mxu0 %v3961
    %v4316 = vpop.f32.mrb[0].mxu0
    %v4317 = vadd.f32 %v3816, %v4316
    %v4318 = vpop.f32.mrb[0].mxu0
    %4319 = vmatprep.mubr.f32.mxu0 0.0
    %4320 = vmatmul.mubr.f32.gmra.mrb[0].mxu0 %v3964
    %v4321 = vpop.f32.mrb[0].mxu0
    %v4322 = vadd.f32 %v3816, %v4321
    %v4323 = vpop.f32.mrb[0].mxu0
    %4324 = vmatprep.mubr.f32.mxu0 0.0
    %4325 = vmatmul.mubr.f32.gmra.mrb[0].mxu0 %v3967
    %v4326 = vpop.f32.mrb[0].mxu0
    %v4327 = vadd.f32 %v3816, %v4326
    %v4328 = vpop.f32.mrb[0].mxu0
    %4329 = vmatprep.mubr.f32.mxu0 0.0
    %4330 = vmatmul.mubr.f32.gmra.mrb[0].mxu0 %v3970
    %v4331 = vpop.f32.mrb[0].mxu0
    %v4332 = vadd.f32 %v3816, %v4331
    %v4333 = vpop.f32.mrb[0].mxu0
    %4334 = vmatprep.mubr.f32.mxu0 0.0
    %4335 = vmatmul.mubr.f32.gmra.mrb[0].mxu0 %v3973
    %v4336 = vpop.f32.mrb[0].mxu0
    %v4337 = vadd.f32 %v3816, %v4336
    %v4338 = vpop.f32.mrb[0].mxu0
    %4339 = vmatprep.mubr.f32.mxu0 0.0
    %4340 = vmatmul.mubr.f32.gmra.mrb[0].mxu0 %v3976
    %v4341 = vpop.f32.mrb[0].mxu0
    %v4342 = vadd.f32 %v3816, %v4341
    %v4343 = vpop.f32.mrb[0].mxu0
    %4344 = vmatprep.mubr.f32.mxu0 0.0
    %4345 = vmatmul.mubr.f32.gmra.mrb[0].mxu0 %v3979
    %v4346 = vpop.f32.mrb[0].mxu0
    %v4347 = vadd.f32 %v3816, %v4346
    %v4348 = vpop.f32.mrb[0].mxu0
    %4349 = vmatprep.mubr.f32.mxu0 0.0
    %4350 = vmatmul.mubr.f32.gmra.mrb[0].mxu0 %v3982
    %v4351 = vpop.f32.mrb[0].mxu0
    %v4352 = vadd.f32 %v3816, %v4351
    %v4353 = vpop.f32.mrb[0].mxu0
    %4354 = vmatprep.mubr.f32.mxu0 0.0
    %4355 = vmatmul.mubr.f32.gmra.mrb[0].mxu0 %v3985
    %v4356 = vpop.f32.mrb[0].mxu0
    %v4357 = vadd.f32 %v3816, %v4356
    %v4358 = vpop.f32.mrb[0].mxu0
    %4359 = vmatprep.mubr.f32.mxu0 0.0
    %4360 = vmatmul.mubr.f32.gmra.mrb[0].mxu0 %v3988
    %v4361 = vpop.f32.mrb[0].mxu0
    %v4362 = vadd.f32 %v3816, %v4361
    %v4363 = vpop.f32.mrb[0].mxu0
    %4364 = vmatprep.mubr.f32.mxu0 0.0
    %4365 = vmatmul.mubr.f32.gmra.mrb[0].mxu0 %v3991
    %v4366 = vpop.f32.mrb[0].mxu0
    %v4367 = vadd.f32 %v3816, %v4366
    %v4368 = vpop.f32.mrb[0].mxu0
    %4369 = vmatprep.mubr.f32.mxu0 0.0
    %4370 = vmatmul.mubr.f32.gmra.mrb[0].mxu0 %v3994
    %v4371 = vpop.f32.mrb[0].mxu0
    %v4372 = vadd.f32 %v3816, %v4371
    %v4373 = vpop.f32.mrb[0].mxu0
    %4374 = vmatprep.mubr.f32.mxu0 0.0
    %4375 = vmatmul.mubr.f32.gmra.mrb[0].mxu0 %v3997
    %v4376 = vpop.f32.mrb[0].mxu0
    %v4377 = vadd.f32 %v3816, %v4376
    %v4378 = vpop.f32.mrb[0].mxu0
    %4379 = vmatprep.mubr.f32.mxu0 0.0
    %4380 = vmatmul.mubr.f32.gmra.mrb[0].mxu0 %v4000
    %v4381 = vpop.f32.mrb[0].mxu0
    %v4382 = vadd.f32 %v3816, %v4381
    %v4383 = vpop.f32.mrb[0].mxu0
    %4384 = vmatprep.mubr.f32.mxu0 0.0
    %4385 = vmatmul.mubr.f32.gmra.mrb[0].mxu0 %v4003
    %v4386 = vpop.f32.mrb[0].mxu0
    %v4387 = vadd.f32 %v3816, %v4386
    %v4388 = vpop.f32.mrb[0].mxu0
    %4389 = vmatprep.mubr.f32.mxu0 0.0
    %4390 = vmatmul.mubr.f32.gmra.mrb[0].mxu0 %v4006
    %v4391 = vpop.f32.mrb[0].mxu0
    %v4392 = vadd.f32 %v3816, %v4391
    %v4393 = vpop.f32.mrb[0].mxu0
    %4394 = vmatprep.mubr.f32.mxu0 0.0
    %4395 = vmatmul.mubr.f32.gmra.mrb[0].mxu0 %v4009
    %v4396 = vpop.f32.mrb[0].mxu0
    %v4397 = vadd.f32 %v3816, %v4396
    %v4398 = vpop.f32.mrb[0].mxu0
    %4399 = vdwg.mxu0
    %v4400 = vmax.f32 %v4082, 0.0
    %v4401 = vmax.f32 %v4087, 0.0
    %v4402 = vmax.f32 %v4092, 0.0
    %v4403 = vmax.f32 %v4097, 0.0
    %v4404 = vmax.f32 %v4102, 0.0
    %v4405 = vmax.f32 %v4107, 0.0
    %v4406 = vmax.f32 %v4112, 0.0
    %v4407 = vmax.f32 %v4117, 0.0
    %v4408 = vmax.f32 %v4122, 0.0
    %v4409 = vmax.f32 %v4127, 0.0
    %v4410 = vmax.f32 %v4132, 0.0
    %v4411 = vmax.f32 %v4137, 0.0
    %v4412 = vmax.f32 %v4142, 0.0
    %v4413 = vmax.f32 %v4147, 0.0
    %v4414 = vmax.f32 %v4152, 0.0
    %v4415 = vmax.f32 %v4157, 0.0
    %v4416 = vmax.f32 %v4162, 0.0
    %v4417 = vmax.f32 %v4167, 0.0
    %v4418 = vmax.f32 %v4172, 0.0
    %v4419 = vmax.f32 %v4177, 0.0
    %v4420 = vmax.f32 %v4182, 0.0
    %v4421 = vmax.f32 %v4187, 0.0
    %v4422 = vmax.f32 %v4192, 0.0
    %v4423 = vmax.f32 %v4197, 0.0
    %v4424 = vmax.f32 %v4202, 0.0
    %v4425 = vmax.f32 %v4207, 0.0
    %v4426 = vmax.f32 %v4212, 0.0
    %v4427 = vmax.f32 %v4217, 0.0
    %v4428 = vmax.f32 %v4222, 0.0
    %v4429 = vmax.f32 %v4227, 0.0
    %v4430 = vmax.f32 %v4232, 0.0
    %v4431 = vmax.f32 %v4237, 0.0
    %v4432 = vmax.f32 %v4242, 0.0
    %v4433 = vmax.f32 %v4247, 0.0
    %v4434 = vmax.f32 %v4252, 0.0
    %v4435 = vmax.f32 %v4257, 0.0
    %v4436 = vmax.f32 %v4262, 0.0
    %v4437 = vmax.f32 %v4267, 0.0
    %v4438 = vmax.f32 %v4272, 0.0
    %v4439 = vmax.f32 %v4277, 0.0
    %v4440 = vmax.f32 %v4282, 0.0
    %v4441 = vmax.f32 %v4287, 0.0
    %v4442 = vmax.f32 %v4292, 0.0
    %v4443 = vmax.f32 %v4297, 0.0
    %v4444 = vmax.f32 %v4302, 0.0
    %v4445 = vmax.f32 %v4307, 0.0
    %v4446 = vmax.f32 %v4312, 0.0
    %v4447 = vmax.f32 %v4317, 0.0
    %v4448 = vmax.f32 %v4322, 0.0
    %v4449 = vmax.f32 %v4327, 0.0
    %v4450 = vmax.f32 %v4332, 0.0
    %v4451 = vmax.f32 %v4337, 0.0
    %v4452 = vmax.f32 %v4342, 0.0
    %v4453 = vmax.f32 %v4347, 0.0
    %v4454 = vmax.f32 %v4352, 0.0
    %v4455 = vmax.f32 %v4357, 0.0
    %v4456 = vmax.f32 %v4362, 0.0
    %v4457 = vmax.f32 %v4367, 0.0
    %v4458 = vmax.f32 %v4372, 0.0
    %v4459 = vmax.f32 %v4377, 0.0
    %v4460 = vmax.f32 %v4382, 0.0
    %v4461 = vmax.f32 %v4387, 0.0
    %v4462 = vmax.f32 %v4392, 0.0
    %v4463 = vmax.f32 %v4397, 0.0
    %v4464 = vld [vmem:[#allocation2] sm:$0x3]
    %vm4465 = vcmask 261120
    %v4466 = vsel %vm4465, %v4400, 0.0
    %v4467 = vsel %vm4465, %v4401, 0.0
    %v4468 = vadd.f32 %v4466, %v4467
    %v4469 = vsel %vm4465, %v4402, 0.0
    %v4470 = vadd.f32 %v4468, %v4469
    %v4471 = vsel %vm4465, %v4403, 0.0
    %v4472 = vadd.f32 %v4470, %v4471
    %v4473 = vsel %vm4465, %v4404, 0.0
    %v4474 = vadd.f32 %v4472, %v4473
    %v4475 = vsel %vm4465, %v4405, 0.0
    %v4476 = vadd.f32 %v4474, %v4475
    %v4477 = vsel %vm4465, %v4406, 0.0
    %v4478 = vadd.f32 %v4476, %v4477
    %v4479 = vsel %vm4465, %v4407, 0.0
    %v4480 = vadd.f32 %v4478, %v4479
    %v4481 = vsel %vm4465, %v4408, 0.0
    %v4482 = vadd.f32 %v4480, %v4481
    %v4483 = vsel %vm4465, %v4409, 0.0
    %v4484 = vadd.f32 %v4482, %v4483
    %v4485 = vsel %vm4465, %v4410, 0.0
    %v4486 = vadd.f32 %v4484, %v4485
    %v4487 = vsel %vm4465, %v4411, 0.0
    %v4488 = vadd.f32 %v4486, %v4487
    %v4489 = vsel %vm4465, %v4412, 0.0
    %v4490 = vadd.f32 %v4488, %v4489
    %v4491 = vsel %vm4465, %v4413, 0.0
    %v4492 = vadd.f32 %v4490, %v4491
    %v4493 = vsel %vm4465, %v4414, 0.0
    %v4494 = vadd.f32 %v4492, %v4493
    %v4495 = vsel %vm4465, %v4415, 0.0
    %v4496 = vadd.f32 %v4494, %v4495
    %v4497 = vsel %vm4465, %v4416, 0.0
    %v4498 = vadd.f32 %v4496, %v4497
    %v4499 = vsel %vm4465, %v4417, 0.0
    %v4500 = vadd.f32 %v4498, %v4499
    %v4501 = vsel %vm4465, %v4418, 0.0
    %v4502 = vadd.f32 %v4500, %v4501
    %v4503 = vsel %vm4465, %v4419, 0.0
    %v4504 = vadd.f32 %v4502, %v4503
    %v4505 = vsel %vm4465, %v4420, 0.0
    %v4506 = vadd.f32 %v4504, %v4505
    %v4507 = vsel %vm4465, %v4421, 0.0
    %v4508 = vadd.f32 %v4506, %v4507
    %v4509 = vsel %vm4465, %v4422, 0.0
    %v4510 = vadd.f32 %v4508, %v4509
    %v4511 = vsel %vm4465, %v4423, 0.0
    %v4512 = vadd.f32 %v4510, %v4511
    %v4513 = vsel %vm4465, %v4424, 0.0
    %v4514 = vadd.f32 %v4512, %v4513
    %v4515 = vsel %vm4465, %v4425, 0.0
    %v4516 = vadd.f32 %v4514, %v4515
    %v4517 = vsel %vm4465, %v4426, 0.0
    %v4518 = vadd.f32 %v4516, %v4517
    %v4519 = vsel %vm4465, %v4427, 0.0
    %v4520 = vadd.f32 %v4518, %v4519
    %v4521 = vsel %vm4465, %v4428, 0.0
    %v4522 = vadd.f32 %v4520, %v4521
    %v4523 = vsel %vm4465, %v4429, 0.0
    %v4524 = vadd.f32 %v4522, %v4523
    %v4525 = vsel %vm4465, %v4430, 0.0
    %v4526 = vadd.f32 %v4524, %v4525
    %v4527 = vsel %vm4465, %v4431, 0.0
    %v4528 = vadd.f32 %v4526, %v4527
    %v4529 = vrot.slane %v4528, 4
    %v4530 = vadd.f32 %v4528, %v4529
    %v4531 = vrot.slane %v4530, 2
    %v4532 = vadd.f32 %v4530, %v4531
    %v4533 = vrot.slane %v4532, 1
    %v4534 = vadd.f32 %v4532, %v4533
    %v4535 = vsel %vm4465, %v4432, 0.0
    %v4536 = vsel %vm4465, %v4433, 0.0
    %v4537 = vadd.f32 %v4535, %v4536
    %v4538 = vsel %vm4465, %v4434, 0.0
    %v4539 = vadd.f32 %v4537, %v4538
    %v4540 = vsel %vm4465, %v4435, 0.0
    %v4541 = vadd.f32 %v4539, %v4540
    %v4542 = vsel %vm4465, %v4436, 0.0
    %v4543 = vadd.f32 %v4541, %v4542
    %v4544 = vsel %vm4465, %v4437, 0.0
    %v4545 = vadd.f32 %v4543, %v4544
    %v4546 = vsel %vm4465, %v4438, 0.0
    %v4547 = vadd.f32 %v4545, %v4546
    %v4548 = vsel %vm4465, %v4439, 0.0
    %v4549 = vadd.f32 %v4547, %v4548
    %v4550 = vsel %vm4465, %v4440, 0.0
    %v4551 = vadd.f32 %v4549, %v4550
    %v4552 = vsel %vm4465, %v4441, 0.0
    %v4553 = vadd.f32 %v4551, %v4552
    %v4554 = vsel %vm4465, %v4442, 0.0
    %v4555 = vadd.f32 %v4553, %v4554
    %v4556 = vsel %vm4465, %v4443, 0.0
    %v4557 = vadd.f32 %v4555, %v4556
    %v4558 = vsel %vm4465, %v4444, 0.0
    %v4559 = vadd.f32 %v4557, %v4558
    %v4560 = vsel %vm4465, %v4445, 0.0
    %v4561 = vadd.f32 %v4559, %v4560
    %v4562 = vsel %vm4465, %v4446, 0.0
    %v4563 = vadd.f32 %v4561, %v4562
    %v4564 = vsel %vm4465, %v4447, 0.0
    %v4565 = vadd.f32 %v4563, %v4564
    %v4566 = vsel %vm4465, %v4448, 0.0
    %v4567 = vadd.f32 %v4565, %v4566
    %v4568 = vsel %vm4465, %v4449, 0.0
    %v4569 = vadd.f32 %v4567, %v4568
    %v4570 = vsel %vm4465, %v4450, 0.0
    %v4571 = vadd.f32 %v4569, %v4570
    %v4572 = vsel %vm4465, %v4451, 0.0
    %v4573 = vadd.f32 %v4571, %v4572
    %v4574 = vsel %vm4465, %v4452, 0.0
    %v4575 = vadd.f32 %v4573, %v4574
    %v4576 = vsel %vm4465, %v4453, 0.0
    %v4577 = vadd.f32 %v4575, %v4576
    %v4578 = vsel %vm4465, %v4454, 0.0
    %v4579 = vadd.f32 %v4577, %v4578
    %v4580 = vsel %vm4465, %v4455, 0.0
    %v4581 = vadd.f32 %v4579, %v4580
    %v4582 = vsel %vm4465, %v4456, 0.0
    %v4583 = vadd.f32 %v4581, %v4582
    %v4584 = vsel %vm4465, %v4457, 0.0
    %v4585 = vadd.f32 %v4583, %v4584
    %v4586 = vsel %vm4465, %v4458, 0.0
    %v4587 = vadd.f32 %v4585, %v4586
    %v4588 = vsel %vm4465, %v4459, 0.0
    %v4589 = vadd.f32 %v4587, %v4588
    %v4590 = vsel %vm4465, %v4460, 0.0
    %v4591 = vadd.f32 %v4589, %v4590
    %v4592 = vsel %vm4465, %v4461, 0.0
    %v4593 = vadd.f32 %v4591, %v4592
    %v4594 = vsel %vm4465, %v4462, 0.0
    %v4595 = vadd.f32 %v4593, %v4594
    %v4596 = vsel %vm4465, %v4463, 0.0
    %v4597 = vadd.f32 %v4595, %v4596
    %v4598 = vrot.slane %v4597, 4
    %v4599 = vadd.f32 %v4597, %v4598
    %v4600 = vrot.slane %v4599, 2
    %v4601 = vadd.f32 %v4599, %v4600
    %v4602 = vrot.slane %v4601, 1
    %v4603 = vadd.f32 %v4601, %v4602
    %vm4606 = vcmask 1041409
    %v4607 = vsel %vm4606, %v4603, %v4534
    %v4609 = vadd.f32 %v4464, %v4607
    %vm4610 = vcmask 254976
    %4611 = vst.msk [vmem:[#allocation2] sm:$0x3] %vm4610, %v4609
    // Predicated region
    $region106: #{tpu_custom_call.1} parent=1 // pred_check
      %p4612 = pneg %p525
    $region107: #{tpu_custom_call.1} parent=1 // pred_check_branch
      %4614 = sbr.rel (%p4612) target = $region109
    $region108: #{tpu_custom_call.1} parent=1 // pred_region
      %v4615 = vld [vmem:[#allocation2] sm:$0x3]
      %v4616 = vmul.f32 %v4615, 0.00390625
      %v4617 = vld [vmem:[%s4] sm:$0xff]
      %v4618 = vld [vmem:[%s4 + $0x8] sm:$0xff]
      %v4619 = vld [vmem:[%s4 + $0x10] sm:$0xff]
      %v4620 = vld [vmem:[%s4 + $0x18] sm:$0xff]
      %v4621 = vld [vmem:[%s5] sm:$0x1]
      %v4623 = vlaneseq
      %v4624 = vshrl.u32 %v4623, 7
      %v4625 = vsub.s32 0, %v4624
      %v4626 = vrot.slane %v4621, %v4625
      %v4629 = vsel %vm4465, %v4616, 0
      %4631 = vmatprep.subr.mxu0 0.0
      %4632 = vmatpush1.msra.mxu0 %v4617
      %4633 = vmatprep.subr.mxu0 0.0
      %4634 = vmatpush1.msra.mxu0 %v4618
      %4635 = vmatprep.subr.mxu0 0.0
      %4636 = vmatpush1.msra.mxu0 %v4619
      %4637 = vmatprep.subr.mxu0 0.0
      %4638 = vmatpush1.msra.mxu0 %v4620
      %4639 = vmatprep.subr.mxu0 0.0
      %4640 = vmatpush1.msra.mxu0 0.0
      %4641 = vmatprep.subr.mxu0 0.0
      %4642 = vmatpush1.msra.mxu0 0.0
      %4643 = vmatprep.subr.mxu0 0.0
      %4644 = vmatpush1.msra.mxu0 0.0
      %4645 = vmatprep.subr.mxu0 0.0
      %4646 = vmatpush1.msra.mxu0 0.0
      %4647 = vmatprep.subr.mxu0 0.0
      %4648 = vmatpush1.msra.mxu0 0.0
      %4649 = vmatprep.subr.mxu0 0.0
      %4650 = vmatpush1.msra.mxu0 0.0
      %4651 = vmatprep.subr.mxu0 0.0
      %4652 = vmatpush1.msra.mxu0 0.0
      %4653 = vmatprep.subr.mxu0 0.0
      %4654 = vmatpush1.msra.mxu0 0.0
      %4655 = vmatprep.subr.mxu0 0.0
      %4656 = vmatpush1.msra.mxu0 0.0
      %4657 = vmatprep.subr.mxu0 0.0
      %4658 = vmatpush1.msra.mxu0 0.0
      %4659 = vmatprep.subr.mxu0 0.0
      %4660 = vmatpush1.msra.mxu0 0.0
      %4661 = vmatprep.subr.mxu0 0.0
      %4662 = vmatpush1.msra.mxu0 0.0
      %4663 = vmatprep.subr.mxu0 0.0
      %4664 = vmatpush1.msra.mxu0 0.0
      %4665 = vmatprep.subr.mxu0 0.0
      %4666 = vmatpush1.msra.mxu0 0.0
      %4667 = vmatprep.subr.mxu0 0.0
      %4668 = vmatpush1.msra.mxu0 0.0
      %4669 = vmatprep.subr.mxu0 0.0
      %4670 = vmatpush1.msra.mxu0 0.0
      %4671 = vmatprep.subr.mxu0 0.0
      %4672 = vmatpush1.msra.mxu0 0.0
      %4673 = vmatprep.subr.mxu0 0.0
      %4674 = vmatpush1.msra.mxu0 0.0
      %4675 = vmatprep.subr.mxu0 0.0
      %4676 = vmatpush1.msra.mxu0 0.0
      %4677 = vmatprep.subr.mxu0 0.0
      %4678 = vmatpush1.msra.mxu0 0.0
      %4679 = vmatprep.subr.mxu0 0.0
      %4680 = vmatpush1.msra.mxu0 0.0
      %4681 = vmatprep.subr.mxu0 0.0
      %4682 = vmatpush1.msra.mxu0 0.0
      %4683 = vmatprep.subr.mxu0 0.0
      %4684 = vmatpush1.msra.mxu0 0.0
      %4685 = vmatprep.subr.mxu0 0.0
      %4686 = vmatpush1.msra.mxu0 0.0
      %4687 = vmatprep.subr.mxu0 0.0
      %4688 = vmatpush1.msra.mxu0 0.0
      %4689 = vmatprep.subr.mxu0 0.0
      %4690 = vmatpush1.msra.mxu0 0.0
      %4691 = vmatprep.subr.mxu0 0.0
      %4692 = vmatpush1.msra.mxu0 0.0
      %4693 = vmatprep.subr.mxu0 0.0
      %4694 = vmatpush1.msra.mxu0 0.0
      %4695 = vmatprep.mubr.f32.mxu0 0.0
      %4696 = vmatmul.mubr.f32.gmra.mrb[0].mxu0 %v4629
      %v4697 = vpop.f32.mrb[0].mxu0
      %v4698 = vadd.f32 %v4626, %v4697
      %v4699 = vpop.f32.mrb[0].mxu0
      %4700 = vdwg.mxu0
      %4701 = vst [vmem:[#allocation6] sm:$0x3] %v4698
    $region109: #{tpu_custom_call.1} parent=1 // pred_fallthru
      _
    // Predicated region
    $region110: #{tpu_custom_call.1} parent=1 // pred_check
      _
    $region111: #{tpu_custom_call.1} parent=1 // pred_check_branch
      %4703 = sbr.rel (0) target = $region113
    $region112: #{tpu_custom_call.1} parent=1 // pred_region
      %s4705 = ssub.s32 32, 32
      %4706 = vsyncadd [#allocation7], %s4705
      %s4708 = sshll.u32 [#allocation6], 4
      %s4709 = int_to_ptr.vmem [resolvable:$true] %s4708
      %4711 = dma.vmem_to_hbm [thread:$0]  %s4709, 32, %s6, [#allocation7]
    $region113: #{tpu_custom_call.1} parent=1 // pred_fallthru
      _
    // Predicated region
    $region114: #{tpu_custom_call.1} parent=1 // pred_check
      _
    $region115: #{tpu_custom_call.1} parent=1 // pred_check_branch
      %4713 = sbr.rel (0) target = $region117
    $region116: #{tpu_custom_call.1} parent=1 // pred_region
      %4714 = dma.done [#allocation7], 32
    $region117: #{tpu_custom_call.1} parent=1 // pred_fallthru
      _
    %4715 = vsyncpa [#allocation7], 1

</llo_original>
